<compile_context>
chip_gen: v7x
topology: tpu7x:2x2x1
jax: 0.10.0
libtpu: 0.0.40
codegen_flags: <defaults>
</compile_context>

<pallas_src>
import jax
import jax.numpy as jnp
from jax.experimental import pallas as pl
from jax.experimental.pallas import tpu as pltpu


# ----------------------------- in-kernel helpers ----------------------------

def _gauss_jordan_inverse(a):
    """Partial-pivot Gauss-Jordan inverse of a small (n, n) f32 matrix.

    Streamlined per perf review: per iteration only 2 cross-sublane reductions
    (max for the pivot magnitude, masked-sum to extract the pivot row); ties are
    broken deterministically toward the smallest row index with a tiny
    multiplicative perturbation; pivot normalization uses pl.reciprocal."""
    n = a.shape[0]
    ri = jax.lax.broadcasted_iota(jnp.int32, (n, n), 0)
    ci = jax.lax.broadcasted_iota(jnp.int32, (n, n), 1)
    eye = (ri == ci).astype(jnp.float32)
    m = jnp.concatenate([a, eye], axis=1)                      # (n, 2n) augmented
    row_i = jax.lax.broadcasted_iota(jnp.int32, (n, 1), 0)     # (n, 1)
    tie_w = 1.0 + (n - 1 - row_i).astype(jnp.float32) * (2.0 ** -20)   # tie-break weights

    for k in range(n):                                         # unrolled (n static)
        col = m[:, k:k + 1]                                    # (n, 1) static lane slice
        eligible = row_i >= k
        score = jnp.where(eligible, jnp.abs(col) * tie_w, -1.0)
        maxv = jnp.max(score, axis=0, keepdims=True)           # reduction 1
        is_piv = jnp.logical_and(score >= maxv, eligible)      # one-hot pivot-row mask
        row_eq_k = row_i == k

        # reduction 2: extract pivot row with the same max mask (no argmax/min pass)
        pivot_row = jnp.sum(jnp.where(is_piv, m, 0.0), axis=0, keepdims=True)   # (1, 2n)
        krow = m[k:k + 1, :]                                   # pre-swap row k (static slice)
        m = jnp.where(row_eq_k, pivot_row, m)
        m = jnp.where(jnp.logical_and(is_piv, jnp.logical_not(row_eq_k)), krow, m)

        piv = pivot_row[:, k:k + 1]                            # (1, 1)
        norm_row = pivot_row * pl.reciprocal(piv, approx=False)
        factor = m[:, k:k + 1]                                 # (n, 1)
        m = jnp.where(row_eq_k, norm_row, m - factor * norm_row)

    return m[:, n:]


# ------------------------------- Pallas kernel --------------------------------

def _fused_kernel(map_ref, ctx_ref, mask_ref, w12_ref, w3_ref, u_ref,
                  wg1_ref, bg1_ref, wg2_ref, bg2_ref, wcl_ref, bcl_ref, out_ref):
    h_dim = u_ref.shape[0]

    # node_rep = node_mapping @ context_output                             (N, D)
    x = jnp.dot(map_ref[0], ctx_ref[0], preferred_element_type=jnp.float32)

    # merged linear1|linear2 (one MXU push) + tanh, then split lanes
    l12 = jnp.tanh(jnp.dot(x, w12_ref[...], preferred_element_type=jnp.float32))  # (N, 2H)
    l1 = l12[:, :h_dim]
    l2 = l12[:, h_dim:]

    # induction bilinear                                                    (N, N)
    t = jnp.dot(l1, u_ref[...], preferred_element_type=jnp.float32)
    bil = jax.lax.dot_general(t, l2, (((1,), (1,)), ((), ())),
                              preferred_element_type=jnp.float32)

    n = bil.shape[0]
    row = jax.lax.broadcasted_iota(jnp.int32, (n, n), 0)
    col = jax.lax.broadcasted_iota(jnp.int32, (n, n), 1)
    diag = row == col

    # matrix-tree edge scores / Laplacian, row 1 replaced by root scores (linear3)
    p_edge = jnp.where(diag, 0.0, jnp.exp(bil))
    col_sum = jnp.sum(p_edge, axis=0, keepdims=True)                 # (1, N) column sums
    lap = jnp.where(diag, jnp.broadcast_to(col_sum, (n, n)), -p_edge)
    l3_row = jax.lax.dot_general(w3_ref[...], x, (((1,), (1,)), ((), ())),
                                 preferred_element_type=jnp.float32)  # (1, N)
    lap = jnp.where(row == 1, jnp.broadcast_to(l3_row, (n, n)), lap)

    # in-kernel 8x8 inverse (no XLA linalg.inv / no HBM round-trip)
    inv = _gauss_jordan_inverse(lap)

    # temp1/temp2 kept as two small dot_generals (explicit inv.T concat needs a vreg
    # relayout for a one-MXU-push saving; not worth the lowering risk at this size).
    temp1 = jnp.dot(p_edge, inv, preferred_element_type=jnp.float32)           # P @ inv
    temp2 = jax.lax.dot_general(p_edge, inv, (((1,), (1,)), ((), ())),
                                preferred_element_type=jnp.float32)            # P @ inv^T
    edge = temp1 - temp2
    edge = jnp.where(row == 1, temp1, edge)      # edge[1, :] = temp1[1, :]   (keep this order)
    edge = jnp.where(col == 1, -temp2, edge)     # edge[:, 1] = -temp2[:, 1]

    # TODO(synk): the GCN class is not defined in the reference source; a standard
    # 2-layer dense GCN relu(A @ h @ W + b) is used as a deterministic stand-in.
    h = jnp.dot(edge, x, preferred_element_type=jnp.float32)
    h = jnp.maximum(jnp.dot(h, wg1_ref[...], preferred_element_type=jnp.float32)
                    + bg1_ref[...], 0.0)
    h = jnp.dot(edge, h, preferred_element_type=jnp.float32)
    h = jnp.maximum(jnp.dot(h, wg2_ref[...], preferred_element_type=jnp.float32)
                    + bg2_ref[...], 0.0)                                        # (N, H)

    # entity compaction in-kernel: one-hot compaction matrix from node_mask
    # sel[j, n] = 1 iff node n is the j-th selected node (mask==1, inclusive count == j+1)
    e_num = out_ref.shape[1]
    mask = mask_ref[0]                                                          # (1, N)
    tri = (jax.lax.broadcasted_iota(jnp.int32, (n, n), 0)
           <= jax.lax.broadcasted_iota(jnp.int32, (n, n), 1)).astype(jnp.float32)
    csum = jnp.dot(mask, tri, preferred_element_type=jnp.float32)               # (1, N)
    slot = jax.lax.broadcasted_iota(jnp.int32, (e_num, n), 0).astype(jnp.float32)
    sel = jnp.logical_and(jnp.broadcast_to(mask, (e_num, n)) > 0.5,
                          jnp.abs(jnp.broadcast_to(csum, (e_num, n)) - (slot + 1.0)) < 0.5)
    ent = jnp.dot(sel.astype(jnp.float32), h, preferred_element_type=jnp.float32)  # (E, H)

    # classify: full-128-lane first contraction, short unrolled per-r second contraction
    t2 = jnp.dot(ent, wcl_ref[...], preferred_element_type=jnp.float32)         # (E, R*H)
    r_num = wcl_ref.shape[1] // h_dim
    outs = []
    for r in range(r_num):
        tr = t2[:, r * h_dim:(r + 1) * h_dim]                                   # static slice
        outs.append(jax.lax.dot_general(tr, ent, (((1,), (1,)), ((), ())),
                                        preferred_element_type=jnp.float32))    # (E, E)
    logits = jnp.concatenate(outs, axis=1)             # (E, R*E): logits[e1, r*E + e2]
    out_ref[...] = (logits + bcl_ref[...])[None]       # bias added in-kernel


# ---------------------------- pallas_call wrapper -----------------------------

def fused_forward_pallas(node_mapping, context_output, node_mask_f, w12, w3, induction,
                         wg1, bg1, wg2, bg2, w_fold, bias_re, *, entity_num):
    B, N, L = node_mapping.shape
    D = context_output.shape[-1]
    H = induction.shape[0]
    RH = w_fold.shape[1]
    R = RH // H
    E = entity_num

    mm = lambda m, k, n_: 2 * m * k * n_
    per_b = (mm(N, L, D) + mm(N, D, 2 * H) + mm(N, H, H) + mm(N, H, N) + mm(1, D, N)
             + 3 * N * N * 2 * N                         # Gauss-Jordan (rough)
             + 2 * mm(N, N, N)                           # temp1 / temp2
             + mm(N, N, D) + mm(N, D, H) + mm(N, N, H) + mm(N, H, H)   # GCN
             + mm(1, N, N) + mm(E, N, H)                 # compaction
             + mm(E, H, RH) + R * mm(E, H, E))           # classify
    flops = int(B * per_b)
    trans = int(B * (N * 2 * H + N * N))                 # tanh + exp
    bytes_acc = int(4 * (node_mapping.size + context_output.size + node_mask_f.size
                         + w12.size + w3.size + induction.size + wg1.size + bg1.size
                         + wg2.size + bg2.size + w_fold.size + bias_re.size
                         + B * E * R * E))

    return pl.pallas_call(
        _fused_kernel,
        out_shape=jax.ShapeDtypeStruct((B, E, R * E), jnp.float32),
        grid=(B,),
        in_specs=[
            pl.BlockSpec((1, N, L), lambda b: (b, 0, 0)),
            pl.BlockSpec((1, L, D), lambda b: (b, 0, 0)),
            pl.BlockSpec((1, 1, N), lambda b: (b, 0, 0)),
            pl.BlockSpec((D, 2 * H), lambda b: (0, 0)),
            pl.BlockSpec((1, D), lambda b: (0, 0)),
            pl.BlockSpec((H, H), lambda b: (0, 0)),
            pl.BlockSpec((D, H), lambda b: (0, 0)),
            pl.BlockSpec((1, H), lambda b: (0, 0)),
            pl.BlockSpec((H, H), lambda b: (0, 0)),
            pl.BlockSpec((1, H), lambda b: (0, 0)),
            pl.BlockSpec((H, RH), lambda b: (0, 0)),
            pl.BlockSpec((1, R * E), lambda b: (0, 0)),
        ],
        out_specs=pl.BlockSpec((1, E, R * E), lambda b: (b, 0, 0)),
        compiler_params=pltpu.CompilerParams(dimension_semantics=("parallel",)),
        cost_estimate=pl.CostEstimate(flops=flops, transcendentals=trans,
                                      bytes_accessed=bytes_acc),
    )(node_mapping, context_output, node_mask_f, w12, w3, induction,
      wg1, bg1, wg2, bg2, w_fold, bias_re)


# --------------------------------- JAX glue ------------------------------------

def _select_start_tokens(context_output_bert, context_starts):
    # torch: [layer[starts.nonzero().squeeze(1)] ...] -> pad_sequence(pad=-1) -> F.pad(0)
    # TODO(synk): data-dependent compaction with a cross-batch max_count stays in wrapper JAX;
    # the argsort gather was replaced by a cumsum + one-hot matmul (no XLA sort).
    B, L, D = context_output_bert.shape
    sel_mask = context_starts != 0
    m = sel_mask.astype(jnp.float32)
    counts = jnp.sum(sel_mask.astype(jnp.int32), axis=1)
    max_count = jnp.max(counts)
    csum = jnp.cumsum(m, axis=1)
    i = jnp.arange(L, dtype=jnp.float32)
    gmat = jnp.logical_and(m[:, None, :] > 0.5,
                           jnp.abs(csum[:, None, :] - (i[None, :, None] + 1.0)) < 0.5)
    gathered = jnp.einsum("bil,bld->bid", gmat.astype(jnp.float32), context_output_bert)
    rows = jnp.arange(L)[None, :]
    keep = rows < counts[:, None]
    fill = jnp.where(rows < max_count, -1.0, 0.0)                  # (1, L)
    return jnp.where(keep[:, :, None], gathered,
                     jnp.broadcast_to(fill[:, :, None], gathered.shape))


def _select_entities_ref(gcn_output, node_mask, entity_num):
    # pure-JAX reference for entity_output[it, :num_sel] = t[node_mask[it] == 1]
    m = (node_mask == 1).astype(jnp.float32)
    csum = jnp.cumsum(m, axis=1)
    j = jnp.arange(entity_num, dtype=jnp.float32)
    sel = jnp.logical_and(m[:, None, :] > 0.5,
                          jnp.abs(csum[:, None, :] - (j[None, :, None] + 1.0)) < 0.5)
    return jnp.einsum("ben,bnh->beh", sel.astype(jnp.float32), gcn_output)


# ------------------------------- forward pass -----------------------------------

def bert_mtl1_forward(params, context_output_bert, context_starts, node_mapping,
                      node_mask, relation_mask):
    # TODO(synk): the pretrained BertModel forward is external to this module; its output
    # `context_output_bert` = bert(context_idxs, attention_mask)[0] is taken as an input.
    context_output = _select_start_tokens(context_output_bert, context_starts)

    B, N, _ = node_mapping.shape
    H = params["w1"].shape[1]
    R = params["classify_bias"].shape[0]
    E = relation_mask.shape[1]

    w12 = jnp.concatenate([params["w1"], params["w2"]], axis=1)        # (D, 2H)
    w_fold = params["classify_weight"].reshape(H, R * H)               # (H, R*H)
    bias_re = jnp.repeat(params["classify_bias"], E)[None, :]          # (1, R*E): [r*E+e2]=bias[r]
    node_mask_f = (node_mask == 1).astype(jnp.float32).reshape(B, 1, N)

    flat = fused_forward_pallas(node_mapping, context_output, node_mask_f,
                                w12, params["w3"], params["induction"],
                                params["wg1"], params["bg1"], params["wg2"], params["bg2"],
                                w_fold, bias_re, entity_num=E)          # (B, E, R*E)
    predict_re = flat.reshape(B, E, R, E).transpose(0, 1, 3, 2)         # (B, E, E, R)
    return predict_re


def reference_forward(params, context_output_bert, context_starts, node_mapping,
                      node_mask, relation_mask):
    context_output = _select_start_tokens(context_output_bert, context_starts)
    node_rep = jnp.matmul(node_mapping, context_output)
    l1 = jnp.tanh(node_rep @ params["w1"])
    l2 = jnp.tanh(node_rep @ params["w2"])
    l3 = jnp.einsum("bnd,od->bn", node_rep, params["w3"])
    bil = jnp.einsum("bnh,hk,bmk->bnm", l1, params["induction"], l2)
    N = bil.shape[1]
    eye = jnp.eye(N, dtype=jnp.float32)[None]
    p_edge = jnp.where(eye == 1.0, 0.0, jnp.exp(bil))
    colsum = jnp.sum(p_edge, axis=1, keepdims=True)
    lap = jnp.where(eye == 1.0, jnp.broadcast_to(colsum, p_edge.shape), -p_edge)
    lap = lap.at[:, 1, :].set(l3)
    inv = jnp.linalg.inv(lap)
    temp1 = jnp.matmul(p_edge, inv)
    temp2 = jnp.matmul(p_edge, jnp.transpose(inv, (0, 2, 1)))
    edge = temp1 - temp2
    edge = edge.at[:, 1, 1].set(0.0)
    edge = edge.at[:, 1, :].set(temp1[:, 1, :])
    edge = edge.at[:, :, 1].set(-temp2[:, :, 1])
    h = jnp.maximum(jnp.matmul(jnp.matmul(edge, node_rep), params["wg1"]) + params["bg1"], 0.0)
    h = jnp.maximum(jnp.matmul(jnp.matmul(edge, h), params["wg2"]) + params["bg2"], 0.0)
    entity_output = _select_entities_ref(h, node_mask, relation_mask.shape[1])
    pre = jnp.einsum("beh,hrk,bfk->befr", entity_output, params["classify_weight"],
                     entity_output)
    return pre + params["classify_bias"]


# ----------------------------------- main ----------------------------------------

if __name__ == "__main__":
    B, L, Dbert, H, N, E, R = 2, 16, 64, 32, 8, 8, 4
    key = jax.random.PRNGKey(0)
    k = jax.random.split(key, 16)

    params = {
        # linear weights stored pre-transposed (in, out); w3 kept in torch (out=1, in) layout.
        "w1": 0.1 * jax.random.normal(k[0], (Dbert, H), jnp.float32),
        "w2": 0.1 * jax.random.normal(k[1], (Dbert, H), jnp.float32),
        "w3": 0.5 * jax.random.normal(k[2], (1, Dbert), jnp.float32),
        "induction": 0.02 * jax.random.normal(k[3], (H, H), jnp.float32),
        "wg1": 0.02 * jax.random.normal(k[4], (Dbert, H), jnp.float32),
        "bg1": 0.01 * jax.random.normal(k[5], (1, H), jnp.float32),
        "wg2": 0.02 * jax.random.normal(k[6], (H, H), jnp.float32),
        "bg2": 0.01 * jax.random.normal(k[7], (1, H), jnp.float32),
        # torch layout classify_weight (H, R, H) and bias (R,)
        "classify_weight": 0.02 * jax.random.normal(k[8], (H, R, H), jnp.float32),
        "classify_bias": 0.01 * jax.random.normal(k[9], (R,), jnp.float32),
    }

    context_output_bert = jax.random.normal(k[10], (B, L, Dbert), jnp.float32)
    context_starts = (jax.random.uniform(k[11], (B, L)) < 0.6).astype(jnp.int32)
    context_starts = context_starts.at[:, 0].set(1)
    node_mapping = jax.random.uniform(k[12], (B, N, L), jnp.float32) / L
    node_mask = (jax.random.uniform(k[13], (B, N)) < 0.5).astype(jnp.int32)
    node_mask = node_mask.at[:, 0].set(1)
    relation_mask = jnp.ones((B, E), jnp.float32)

    out = bert_mtl1_forward(params, context_output_bert, context_starts,
                            node_mapping, node_mask, relation_mask)
    out = jax.block_until_ready(out)

    ref = reference_forward(params, context_output_bert, context_starts,
                            node_mapping, node_mask, relation_mask)
    ref = jax.block_until_ready(ref)

    assert out.shape == (B, E, E, R)
    assert bool(jnp.all(jnp.isfinite(out)))
    rel_err = float(jnp.max(jnp.abs(out - ref)) / (jnp.max(jnp.abs(ref)) + 1e-6))
    assert rel_err < 0.25, f"mismatch vs reference: rel_err={rel_err}"

    print("KERNEL_OK")
</pallas_src>

<mosaic_0001>
module attributes {stable_mosaic.version = 11 : i64} {
  func.func @_fused_kernel(%arg0: i32, %arg1: memref<1x8x16xf32, #tpu.memory_space<vmem>>, %arg2: memref<1x16x64xf32, #tpu.memory_space<vmem>>, %arg3: memref<1x1x8xf32, #tpu.memory_space<vmem>>, %arg4: memref<64x64xf32, #tpu.memory_space<vmem>>, %arg5: memref<1x64xf32, #tpu.memory_space<vmem>>, %arg6: memref<32x32xf32, #tpu.memory_space<vmem>>, %arg7: memref<64x32xf32, #tpu.memory_space<vmem>>, %arg8: memref<1x32xf32, #tpu.memory_space<vmem>>, %arg9: memref<32x32xf32, #tpu.memory_space<vmem>>, %arg10: memref<1x32xf32, #tpu.memory_space<vmem>>, %arg11: memref<32x128xf32, #tpu.memory_space<vmem>>, %arg12: memref<1x32xf32, #tpu.memory_space<vmem>>, %arg13: memref<1x8x32xf32, #tpu.memory_space<vmem>>) attributes {dimension_semantics = [#tpu.dimension_semantics<parallel>], iteration_bounds = array<i64: 2>, scalar_prefetch = 0 : i64, scratch_operands = 0 : i64, tpu.core_type = #tpu.core_type<tc>, window_params = [{transform_indices = @transform_0, window_bounds = array<i64: 1, 8, 16>}, {transform_indices = @transform_1, window_bounds = array<i64: 1, 16, 64>}, {transform_indices = @transform_2, window_bounds = array<i64: 1, 1, 8>}, {pipeline_mode = #tpu.pipeline_mode<synchronous>, transform_indices = @transform_3, window_bounds = array<i64: 64, 64>}, {pipeline_mode = #tpu.pipeline_mode<synchronous>, transform_indices = @transform_4, window_bounds = array<i64: 1, 64>}, {pipeline_mode = #tpu.pipeline_mode<synchronous>, transform_indices = @transform_5, window_bounds = array<i64: 32, 32>}, {pipeline_mode = #tpu.pipeline_mode<synchronous>, transform_indices = @transform_6, window_bounds = array<i64: 64, 32>}, {pipeline_mode = #tpu.pipeline_mode<synchronous>, transform_indices = @transform_7, window_bounds = array<i64: 1, 32>}, {pipeline_mode = #tpu.pipeline_mode<synchronous>, transform_indices = @transform_8, window_bounds = array<i64: 32, 32>}, {pipeline_mode = #tpu.pipeline_mode<synchronous>, transform_indices = @transform_9, window_bounds = array<i64: 1, 32>}, {pipeline_mode = #tpu.pipeline_mode<synchronous>, transform_indices = @transform_10, window_bounds = array<i64: 32, 128>}, {pipeline_mode = #tpu.pipeline_mode<synchronous>, transform_indices = @transform_11, window_bounds = array<i64: 1, 32>}, {transform_indices = @transform_12, window_bounds = array<i64: 1, 8, 32>}]} {
    %c0 = arith.constant 0 : index
    %c0_0 = arith.constant 0 : index
    %c0_1 = arith.constant 0 : index
    %0 = vector.load %arg1[%c0, %c0_0, %c0_1] : memref<1x8x16xf32, #tpu.memory_space<vmem>>, vector<1x8x16xf32>
    %1 = vector.shape_cast %0 : vector<1x8x16xf32> to vector<8x16xf32>
    %c0_2 = arith.constant 0 : index
    %c0_3 = arith.constant 0 : index
    %c0_4 = arith.constant 0 : index
    %2 = vector.load %arg2[%c0_2, %c0_3, %c0_4] : memref<1x16x64xf32, #tpu.memory_space<vmem>>, vector<1x16x64xf32>
    %3 = vector.shape_cast %2 : vector<1x16x64xf32> to vector<16x64xf32>
    %cst = arith.constant dense<0.000000e+00> : vector<8x64xf32>
    %4 = tpu.matmul %1, %3, %cst {dimension_numbers = #tpu.dot_dimension_numbers<[1], [0], [0], [1], [0, 0, 1, 1], [], []>} : vector<8x16xf32>, vector<16x64xf32>, vector<8x64xf32> -> vector<8x64xf32>
    %c0_5 = arith.constant 0 : index
    %c0_6 = arith.constant 0 : index
    %5 = vector.load %arg4[%c0_5, %c0_6] : memref<64x64xf32, #tpu.memory_space<vmem>>, vector<64x64xf32>
    %cst_7 = arith.constant dense<0.000000e+00> : vector<8x64xf32>
    %6 = tpu.matmul %4, %5, %cst_7 {dimension_numbers = #tpu.dot_dimension_numbers<[1], [0], [0], [1], [0, 0, 1, 1], [], []>} : vector<8x64xf32>, vector<64x64xf32>, vector<8x64xf32> -> vector<8x64xf32>
    %7 = math.tanh %6 : vector<8x64xf32>
    %8 = vector.extract_strided_slice %7 {offsets = [0, 0], sizes = [8, 32], strides = [1, 1]} : vector<8x64xf32> to vector<8x32xf32>
    %9 = vector.extract_strided_slice %7 {offsets = [0, 32], sizes = [8, 32], strides = [1, 1]} : vector<8x64xf32> to vector<8x32xf32>
    %c0_8 = arith.constant 0 : index
    %c0_9 = arith.constant 0 : index
    %10 = vector.load %arg6[%c0_8, %c0_9] : memref<32x32xf32, #tpu.memory_space<vmem>>, vector<32x32xf32>
    %cst_10 = arith.constant dense<0.000000e+00> : vector<8x32xf32>
    %11 = tpu.matmul %8, %10, %cst_10 {dimension_numbers = #tpu.dot_dimension_numbers<[1], [0], [0], [1], [0, 0, 1, 1], [], []>} : vector<8x32xf32>, vector<32x32xf32>, vector<8x32xf32> -> vector<8x32xf32>
    %cst_11 = arith.constant dense<0.000000e+00> : vector<8x8xf32>
    %12 = tpu.matmul %11, %9, %cst_11 {dimension_numbers = #tpu.dot_dimension_numbers<[1], [1], [0], [0], [0, 0, 1, 0], [], []>} : vector<8x32xf32>, vector<8x32xf32>, vector<8x8xf32> -> vector<8x8xf32>
    %13 = tpu.iota {dimensions = array<i32: 0>} : vector<8x8xi32>
    %14 = tpu.iota {dimensions = array<i32: 1>} : vector<8x8xi32>
    %15 = arith.cmpi eq, %13, %14 : vector<8x8xi32>
    %16 = math.exp %12 : vector<8x8xf32>
    %cst_12 = arith.constant 0.000000e+00 : f32
    %17 = vector.broadcast %cst_12 : f32 to vector<8x8xf32>
    %18 = arith.select %15, %17, %16 : vector<8x8xi1>, vector<8x8xf32>
    %cst_13 = arith.constant dense<0.000000e+00> : vector<8xf32>
    %19 = vector.multi_reduction <add>, %18, %cst_13 [0] : vector<8x8xf32> to vector<8xf32>
    %20 = vector.shape_cast %19 : vector<8xf32> to vector<1x8xf32>
    %21 = vector.shape_cast %20 : vector<1x8xf32> to vector<1x8xf32>
    %22 = vector.broadcast %21 : vector<1x8xf32> to vector<8x8xf32>
    %cst_14 = arith.constant 0.000000e+00 : f32
    %23 = vector.broadcast %cst_14 : f32 to vector<8x8xf32>
    %24 = arith.subf %23, %18 : vector<8x8xf32>
    %25 = arith.select %15, %22, %24 : vector<8x8xi1>, vector<8x8xf32>
    %c0_15 = arith.constant 0 : index
    %c0_16 = arith.constant 0 : index
    %26 = vector.load %arg5[%c0_15, %c0_16] : memref<1x64xf32, #tpu.memory_space<vmem>>, vector<1x64xf32>
    %cst_17 = arith.constant dense<0.000000e+00> : vector<1x8xf32>
    %27 = tpu.matmul %26, %4, %cst_17 {dimension_numbers = #tpu.dot_dimension_numbers<[1], [1], [0], [0], [0, 0, 1, 0], [], []>} : vector<1x64xf32>, vector<8x64xf32>, vector<1x8xf32> -> vector<1x8xf32>
    %c1_i32 = arith.constant 1 : i32
    %28 = vector.broadcast %c1_i32 : i32 to vector<8x8xi32>
    %29 = arith.cmpi eq, %13, %28 : vector<8x8xi32>
    %30 = vector.shape_cast %27 : vector<1x8xf32> to vector<1x8xf32>
    %31 = vector.broadcast %30 : vector<1x8xf32> to vector<8x8xf32>
    %32 = arith.select %29, %31, %25 : vector<8x8xi1>, vector<8x8xf32>
    %33 = tpu.iota {dimensions = array<i32: 0>} : vector<8x8xi32>
    %34 = tpu.iota {dimensions = array<i32: 1>} : vector<8x8xi32>
    %35 = arith.cmpi eq, %33, %34 : vector<8x8xi32>
    %36 = arith.extui %35 : vector<8x8xi1> to vector<8x8xi32>
    %37 = arith.sitofp %36 : vector<8x8xi32> to vector<8x8xf32>
    %38 = tpu.concatenate %32, %37 in 1 : vector<8x8xf32>, vector<8x8xf32> -> vector<8x16xf32>
    %39 = tpu.iota {dimensions = array<i32: 0>} : vector<8x1xi32>
    %c7_i32 = arith.constant 7 : i32
    %40 = vector.broadcast %c7_i32 : i32 to vector<8x1xi32>
    %41 = arith.subi %40, %39 : vector<8x1xi32>
    %42 = arith.sitofp %41 : vector<8x1xi32> to vector<8x1xf32>
    %cst_18 = arith.constant 9.53674316E-7 : f32
    %43 = vector.broadcast %cst_18 : f32 to vector<8x1xf32>
    %44 = arith.mulf %42, %43 : vector<8x1xf32>
    %cst_19 = arith.constant 1.000000e+00 : f32
    %45 = vector.broadcast %cst_19 : f32 to vector<8x1xf32>
    %46 = arith.addf %45, %44 : vector<8x1xf32>
    %47 = vector.extract_strided_slice %38 {offsets = [0, 0], sizes = [8, 1], strides = [1, 1]} : vector<8x16xf32> to vector<8x1xf32>
    %c0_i32 = arith.constant 0 : i32
    %48 = vector.broadcast %c0_i32 : i32 to vector<8x1xi32>
    %49 = arith.cmpi sge, %39, %48 : vector<8x1xi32>
    %50 = math.absf %47 : vector<8x1xf32>
    %51 = arith.mulf %50, %46 : vector<8x1xf32>
    %cst_20 = arith.constant -1.000000e+00 : f32
    %52 = vector.broadcast %cst_20 : f32 to vector<8x1xf32>
    %53 = arith.select %49, %51, %52 : vector<8x1xi1>, vector<8x1xf32>
    %cst_21 = arith.constant dense<0xFF800000> : vector<1xf32>
    %54 = vector.multi_reduction <maximumf>, %53, %cst_21 [0] : vector<8x1xf32> to vector<1xf32>
    %55 = vector.shape_cast %54 : vector<1xf32> to vector<1x1xf32>
    %56 = vector.broadcast %55 : vector<1x1xf32> to vector<8x1xf32>
    %57 = arith.cmpf oge, %53, %56 : vector<8x1xf32>
    %58 = arith.andi %57, %49 : vector<8x1xi1>
    %c0_i32_22 = arith.constant 0 : i32
    %59 = vector.broadcast %c0_i32_22 : i32 to vector<8x1xi32>
    %60 = arith.cmpi eq, %39, %59 : vector<8x1xi32>
    %cst_23 = arith.constant 0.000000e+00 : f32
    %61 = vector.shape_cast %58 : vector<8x1xi1> to vector<8x1xi1>
    %62 = vector.broadcast %61 : vector<8x1xi1> to vector<8x16xi1>
    %63 = vector.broadcast %cst_23 : f32 to vector<8x16xf32>
    %64 = arith.select %62, %38, %63 : vector<8x16xi1>, vector<8x16xf32>
    %cst_24 = arith.constant dense<0.000000e+00> : vector<16xf32>
    %65 = vector.multi_reduction <add>, %64, %cst_24 [0] : vector<8x16xf32> to vector<16xf32>
    %66 = vector.shape_cast %65 : vector<16xf32> to vector<1x16xf32>
    %67 = vector.extract_strided_slice %38 {offsets = [0, 0], sizes = [1, 16], strides = [1, 1]} : vector<8x16xf32> to vector<1x16xf32>
    %68 = vector.shape_cast %60 : vector<8x1xi1> to vector<8x1xi1>
    %69 = vector.broadcast %68 : vector<8x1xi1> to vector<8x16xi1>
    %70 = vector.shape_cast %66 : vector<1x16xf32> to vector<1x16xf32>
    %71 = vector.broadcast %70 : vector<1x16xf32> to vector<8x16xf32>
    %72 = arith.select %69, %71, %38 : vector<8x16xi1>, vector<8x16xf32>
    %cst_25 = arith.constant dense<true> : vector<8x1xi1>
    %73 = arith.xori %60, %cst_25 : vector<8x1xi1>
    %74 = arith.andi %58, %73 : vector<8x1xi1>
    %75 = vector.shape_cast %74 : vector<8x1xi1> to vector<8x1xi1>
    %76 = vector.broadcast %75 : vector<8x1xi1> to vector<8x16xi1>
    %77 = vector.shape_cast %67 : vector<1x16xf32> to vector<1x16xf32>
    %78 = vector.broadcast %77 : vector<1x16xf32> to vector<8x16xf32>
    %79 = arith.select %76, %78, %72 : vector<8x16xi1>, vector<8x16xf32>
    %80 = vector.extract_strided_slice %66 {offsets = [0, 0], sizes = [1, 1], strides = [1, 1]} : vector<1x16xf32> to vector<1x1xf32>
    %81 = tpu.reciprocal %80 : vector<1x1xf32> -> vector<1x1xf32>
    %82 = vector.broadcast %81 : vector<1x1xf32> to vector<1x16xf32>
    %83 = arith.mulf %66, %82 : vector<1x16xf32>
    %84 = vector.extract_strided_slice %79 {offsets = [0, 0], sizes = [8, 1], strides = [1, 1]} : vector<8x16xf32> to vector<8x1xf32>
    %85 = vector.broadcast %84 : vector<8x1xf32> to vector<8x16xf32>
    %86 = vector.broadcast %83 : vector<1x16xf32> to vector<8x16xf32>
    %87 = arith.mulf %85, %86 : vector<8x16xf32>
    %88 = arith.subf %79, %87 : vector<8x16xf32>
    %89 = vector.shape_cast %60 : vector<8x1xi1> to vector<8x1xi1>
    %90 = vector.broadcast %89 : vector<8x1xi1> to vector<8x16xi1>
    %91 = vector.shape_cast %83 : vector<1x16xf32> to vector<1x16xf32>
    %92 = vector.broadcast %91 : vector<1x16xf32> to vector<8x16xf32>
    %93 = arith.select %90, %92, %88 : vector<8x16xi1>, vector<8x16xf32>
    %94 = vector.extract_strided_slice %93 {offsets = [0, 1], sizes = [8, 1], strides = [1, 1]} : vector<8x16xf32> to vector<8x1xf32>
    %c1_i32_26 = arith.constant 1 : i32
    %95 = vector.broadcast %c1_i32_26 : i32 to vector<8x1xi32>
    %96 = arith.cmpi sge, %39, %95 : vector<8x1xi32>
    %97 = math.absf %94 : vector<8x1xf32>
    %98 = arith.mulf %97, %46 : vector<8x1xf32>
    %cst_27 = arith.constant -1.000000e+00 : f32
    %99 = vector.broadcast %cst_27 : f32 to vector<8x1xf32>
    %100 = arith.select %96, %98, %99 : vector<8x1xi1>, vector<8x1xf32>
    %cst_28 = arith.constant dense<0xFF800000> : vector<1xf32>
    %101 = vector.multi_reduction <maximumf>, %100, %cst_28 [0] : vector<8x1xf32> to vector<1xf32>
    %102 = vector.shape_cast %101 : vector<1xf32> to vector<1x1xf32>
    %103 = vector.broadcast %102 : vector<1x1xf32> to vector<8x1xf32>
    %104 = arith.cmpf oge, %100, %103 : vector<8x1xf32>
    %105 = arith.andi %104, %96 : vector<8x1xi1>
    %c1_i32_29 = arith.constant 1 : i32
    %106 = vector.broadcast %c1_i32_29 : i32 to vector<8x1xi32>
    %107 = arith.cmpi eq, %39, %106 : vector<8x1xi32>
    %cst_30 = arith.constant 0.000000e+00 : f32
    %108 = vector.shape_cast %105 : vector<8x1xi1> to vector<8x1xi1>
    %109 = vector.broadcast %108 : vector<8x1xi1> to vector<8x16xi1>
    %110 = vector.broadcast %cst_30 : f32 to vector<8x16xf32>
    %111 = arith.select %109, %93, %110 : vector<8x16xi1>, vector<8x16xf32>
    %cst_31 = arith.constant dense<0.000000e+00> : vector<16xf32>
    %112 = vector.multi_reduction <add>, %111, %cst_31 [0] : vector<8x16xf32> to vector<16xf32>
    %113 = vector.shape_cast %112 : vector<16xf32> to vector<1x16xf32>
    %114 = vector.extract_strided_slice %93 {offsets = [1, 0], sizes = [1, 16], strides = [1, 1]} : vector<8x16xf32> to vector<1x16xf32>
    %115 = vector.shape_cast %107 : vector<8x1xi1> to vector<8x1xi1>
    %116 = vector.broadcast %115 : vector<8x1xi1> to vector<8x16xi1>
    %117 = vector.shape_cast %113 : vector<1x16xf32> to vector<1x16xf32>
    %118 = vector.broadcast %117 : vector<1x16xf32> to vector<8x16xf32>
    %119 = arith.select %116, %118, %93 : vector<8x16xi1>, vector<8x16xf32>
    %cst_32 = arith.constant dense<true> : vector<8x1xi1>
    %120 = arith.xori %107, %cst_32 : vector<8x1xi1>
    %121 = arith.andi %105, %120 : vector<8x1xi1>
    %122 = vector.shape_cast %121 : vector<8x1xi1> to vector<8x1xi1>
    %123 = vector.broadcast %122 : vector<8x1xi1> to vector<8x16xi1>
    %124 = vector.shape_cast %114 : vector<1x16xf32> to vector<1x16xf32>
    %125 = vector.broadcast %124 : vector<1x16xf32> to vector<8x16xf32>
    %126 = arith.select %123, %125, %119 : vector<8x16xi1>, vector<8x16xf32>
    %127 = vector.extract_strided_slice %113 {offsets = [0, 1], sizes = [1, 1], strides = [1, 1]} : vector<1x16xf32> to vector<1x1xf32>
    %128 = tpu.reciprocal %127 : vector<1x1xf32> -> vector<1x1xf32>
    %129 = vector.broadcast %128 : vector<1x1xf32> to vector<1x16xf32>
    %130 = arith.mulf %113, %129 : vector<1x16xf32>
    %131 = vector.extract_strided_slice %126 {offsets = [0, 1], sizes = [8, 1], strides = [1, 1]} : vector<8x16xf32> to vector<8x1xf32>
    %132 = vector.broadcast %131 : vector<8x1xf32> to vector<8x16xf32>
    %133 = vector.broadcast %130 : vector<1x16xf32> to vector<8x16xf32>
    %134 = arith.mulf %132, %133 : vector<8x16xf32>
    %135 = arith.subf %126, %134 : vector<8x16xf32>
    %136 = vector.shape_cast %107 : vector<8x1xi1> to vector<8x1xi1>
    %137 = vector.broadcast %136 : vector<8x1xi1> to vector<8x16xi1>
    %138 = vector.shape_cast %130 : vector<1x16xf32> to vector<1x16xf32>
    %139 = vector.broadcast %138 : vector<1x16xf32> to vector<8x16xf32>
    %140 = arith.select %137, %139, %135 : vector<8x16xi1>, vector<8x16xf32>
    %141 = vector.extract_strided_slice %140 {offsets = [0, 2], sizes = [8, 1], strides = [1, 1]} : vector<8x16xf32> to vector<8x1xf32>
    %c2_i32 = arith.constant 2 : i32
    %142 = vector.broadcast %c2_i32 : i32 to vector<8x1xi32>
    %143 = arith.cmpi sge, %39, %142 : vector<8x1xi32>
    %144 = math.absf %141 : vector<8x1xf32>
    %145 = arith.mulf %144, %46 : vector<8x1xf32>
    %cst_33 = arith.constant -1.000000e+00 : f32
    %146 = vector.broadcast %cst_33 : f32 to vector<8x1xf32>
    %147 = arith.select %143, %145, %146 : vector<8x1xi1>, vector<8x1xf32>
    %cst_34 = arith.constant dense<0xFF800000> : vector<1xf32>
    %148 = vector.multi_reduction <maximumf>, %147, %cst_34 [0] : vector<8x1xf32> to vector<1xf32>
    %149 = vector.shape_cast %148 : vector<1xf32> to vector<1x1xf32>
    %150 = vector.broadcast %149 : vector<1x1xf32> to vector<8x1xf32>
    %151 = arith.cmpf oge, %147, %150 : vector<8x1xf32>
    %152 = arith.andi %151, %143 : vector<8x1xi1>
    %c2_i32_35 = arith.constant 2 : i32
    %153 = vector.broadcast %c2_i32_35 : i32 to vector<8x1xi32>
    %154 = arith.cmpi eq, %39, %153 : vector<8x1xi32>
    %cst_36 = arith.constant 0.000000e+00 : f32
    %155 = vector.shape_cast %152 : vector<8x1xi1> to vector<8x1xi1>
    %156 = vector.broadcast %155 : vector<8x1xi1> to vector<8x16xi1>
    %157 = vector.broadcast %cst_36 : f32 to vector<8x16xf32>
    %158 = arith.select %156, %140, %157 : vector<8x16xi1>, vector<8x16xf32>
    %cst_37 = arith.constant dense<0.000000e+00> : vector<16xf32>
    %159 = vector.multi_reduction <add>, %158, %cst_37 [0] : vector<8x16xf32> to vector<16xf32>
    %160 = vector.shape_cast %159 : vector<16xf32> to vector<1x16xf32>
    %161 = vector.extract_strided_slice %140 {offsets = [2, 0], sizes = [1, 16], strides = [1, 1]} : vector<8x16xf32> to vector<1x16xf32>
    %162 = vector.shape_cast %154 : vector<8x1xi1> to vector<8x1xi1>
    %163 = vector.broadcast %162 : vector<8x1xi1> to vector<8x16xi1>
    %164 = vector.shape_cast %160 : vector<1x16xf32> to vector<1x16xf32>
    %165 = vector.broadcast %164 : vector<1x16xf32> to vector<8x16xf32>
    %166 = arith.select %163, %165, %140 : vector<8x16xi1>, vector<8x16xf32>
    %cst_38 = arith.constant dense<true> : vector<8x1xi1>
    %167 = arith.xori %154, %cst_38 : vector<8x1xi1>
    %168 = arith.andi %152, %167 : vector<8x1xi1>
    %169 = vector.shape_cast %168 : vector<8x1xi1> to vector<8x1xi1>
    %170 = vector.broadcast %169 : vector<8x1xi1> to vector<8x16xi1>
    %171 = vector.shape_cast %161 : vector<1x16xf32> to vector<1x16xf32>
    %172 = vector.broadcast %171 : vector<1x16xf32> to vector<8x16xf32>
    %173 = arith.select %170, %172, %166 : vector<8x16xi1>, vector<8x16xf32>
    %174 = vector.extract_strided_slice %160 {offsets = [0, 2], sizes = [1, 1], strides = [1, 1]} : vector<1x16xf32> to vector<1x1xf32>
    %175 = tpu.reciprocal %174 : vector<1x1xf32> -> vector<1x1xf32>
    %176 = vector.broadcast %175 : vector<1x1xf32> to vector<1x16xf32>
    %177 = arith.mulf %160, %176 : vector<1x16xf32>
    %178 = vector.extract_strided_slice %173 {offsets = [0, 2], sizes = [8, 1], strides = [1, 1]} : vector<8x16xf32> to vector<8x1xf32>
    %179 = vector.broadcast %178 : vector<8x1xf32> to vector<8x16xf32>
    %180 = vector.broadcast %177 : vector<1x16xf32> to vector<8x16xf32>
    %181 = arith.mulf %179, %180 : vector<8x16xf32>
    %182 = arith.subf %173, %181 : vector<8x16xf32>
    %183 = vector.shape_cast %154 : vector<8x1xi1> to vector<8x1xi1>
    %184 = vector.broadcast %183 : vector<8x1xi1> to vector<8x16xi1>
    %185 = vector.shape_cast %177 : vector<1x16xf32> to vector<1x16xf32>
    %186 = vector.broadcast %185 : vector<1x16xf32> to vector<8x16xf32>
    %187 = arith.select %184, %186, %182 : vector<8x16xi1>, vector<8x16xf32>
    %188 = vector.extract_strided_slice %187 {offsets = [0, 3], sizes = [8, 1], strides = [1, 1]} : vector<8x16xf32> to vector<8x1xf32>
    %c3_i32 = arith.constant 3 : i32
    %189 = vector.broadcast %c3_i32 : i32 to vector<8x1xi32>
    %190 = arith.cmpi sge, %39, %189 : vector<8x1xi32>
    %191 = math.absf %188 : vector<8x1xf32>
    %192 = arith.mulf %191, %46 : vector<8x1xf32>
    %cst_39 = arith.constant -1.000000e+00 : f32
    %193 = vector.broadcast %cst_39 : f32 to vector<8x1xf32>
    %194 = arith.select %190, %192, %193 : vector<8x1xi1>, vector<8x1xf32>
    %cst_40 = arith.constant dense<0xFF800000> : vector<1xf32>
    %195 = vector.multi_reduction <maximumf>, %194, %cst_40 [0] : vector<8x1xf32> to vector<1xf32>
    %196 = vector.shape_cast %195 : vector<1xf32> to vector<1x1xf32>
    %197 = vector.broadcast %196 : vector<1x1xf32> to vector<8x1xf32>
    %198 = arith.cmpf oge, %194, %197 : vector<8x1xf32>
    %199 = arith.andi %198, %190 : vector<8x1xi1>
    %c3_i32_41 = arith.constant 3 : i32
    %200 = vector.broadcast %c3_i32_41 : i32 to vector<8x1xi32>
    %201 = arith.cmpi eq, %39, %200 : vector<8x1xi32>
    %cst_42 = arith.constant 0.000000e+00 : f32
    %202 = vector.shape_cast %199 : vector<8x1xi1> to vector<8x1xi1>
    %203 = vector.broadcast %202 : vector<8x1xi1> to vector<8x16xi1>
    %204 = vector.broadcast %cst_42 : f32 to vector<8x16xf32>
    %205 = arith.select %203, %187, %204 : vector<8x16xi1>, vector<8x16xf32>
    %cst_43 = arith.constant dense<0.000000e+00> : vector<16xf32>
    %206 = vector.multi_reduction <add>, %205, %cst_43 [0] : vector<8x16xf32> to vector<16xf32>
    %207 = vector.shape_cast %206 : vector<16xf32> to vector<1x16xf32>
    %208 = vector.extract_strided_slice %187 {offsets = [3, 0], sizes = [1, 16], strides = [1, 1]} : vector<8x16xf32> to vector<1x16xf32>
    %209 = vector.shape_cast %201 : vector<8x1xi1> to vector<8x1xi1>
    %210 = vector.broadcast %209 : vector<8x1xi1> to vector<8x16xi1>
    %211 = vector.shape_cast %207 : vector<1x16xf32> to vector<1x16xf32>
    %212 = vector.broadcast %211 : vector<1x16xf32> to vector<8x16xf32>
    %213 = arith.select %210, %212, %187 : vector<8x16xi1>, vector<8x16xf32>
    %cst_44 = arith.constant dense<true> : vector<8x1xi1>
    %214 = arith.xori %201, %cst_44 : vector<8x1xi1>
    %215 = arith.andi %199, %214 : vector<8x1xi1>
    %216 = vector.shape_cast %215 : vector<8x1xi1> to vector<8x1xi1>
    %217 = vector.broadcast %216 : vector<8x1xi1> to vector<8x16xi1>
    %218 = vector.shape_cast %208 : vector<1x16xf32> to vector<1x16xf32>
    %219 = vector.broadcast %218 : vector<1x16xf32> to vector<8x16xf32>
    %220 = arith.select %217, %219, %213 : vector<8x16xi1>, vector<8x16xf32>
    %221 = vector.extract_strided_slice %207 {offsets = [0, 3], sizes = [1, 1], strides = [1, 1]} : vector<1x16xf32> to vector<1x1xf32>
    %222 = tpu.reciprocal %221 : vector<1x1xf32> -> vector<1x1xf32>
    %223 = vector.broadcast %222 : vector<1x1xf32> to vector<1x16xf32>
    %224 = arith.mulf %207, %223 : vector<1x16xf32>
    %225 = vector.extract_strided_slice %220 {offsets = [0, 3], sizes = [8, 1], strides = [1, 1]} : vector<8x16xf32> to vector<8x1xf32>
    %226 = vector.broadcast %225 : vector<8x1xf32> to vector<8x16xf32>
    %227 = vector.broadcast %224 : vector<1x16xf32> to vector<8x16xf32>
    %228 = arith.mulf %226, %227 : vector<8x16xf32>
    %229 = arith.subf %220, %228 : vector<8x16xf32>
    %230 = vector.shape_cast %201 : vector<8x1xi1> to vector<8x1xi1>
    %231 = vector.broadcast %230 : vector<8x1xi1> to vector<8x16xi1>
    %232 = vector.shape_cast %224 : vector<1x16xf32> to vector<1x16xf32>
    %233 = vector.broadcast %232 : vector<1x16xf32> to vector<8x16xf32>
    %234 = arith.select %231, %233, %229 : vector<8x16xi1>, vector<8x16xf32>
    %235 = vector.extract_strided_slice %234 {offsets = [0, 4], sizes = [8, 1], strides = [1, 1]} : vector<8x16xf32> to vector<8x1xf32>
    %c4_i32 = arith.constant 4 : i32
    %236 = vector.broadcast %c4_i32 : i32 to vector<8x1xi32>
    %237 = arith.cmpi sge, %39, %236 : vector<8x1xi32>
    %238 = math.absf %235 : vector<8x1xf32>
    %239 = arith.mulf %238, %46 : vector<8x1xf32>
    %cst_45 = arith.constant -1.000000e+00 : f32
    %240 = vector.broadcast %cst_45 : f32 to vector<8x1xf32>
    %241 = arith.select %237, %239, %240 : vector<8x1xi1>, vector<8x1xf32>
    %cst_46 = arith.constant dense<0xFF800000> : vector<1xf32>
    %242 = vector.multi_reduction <maximumf>, %241, %cst_46 [0] : vector<8x1xf32> to vector<1xf32>
    %243 = vector.shape_cast %242 : vector<1xf32> to vector<1x1xf32>
    %244 = vector.broadcast %243 : vector<1x1xf32> to vector<8x1xf32>
    %245 = arith.cmpf oge, %241, %244 : vector<8x1xf32>
    %246 = arith.andi %245, %237 : vector<8x1xi1>
    %c4_i32_47 = arith.constant 4 : i32
    %247 = vector.broadcast %c4_i32_47 : i32 to vector<8x1xi32>
    %248 = arith.cmpi eq, %39, %247 : vector<8x1xi32>
    %cst_48 = arith.constant 0.000000e+00 : f32
    %249 = vector.shape_cast %246 : vector<8x1xi1> to vector<8x1xi1>
    %250 = vector.broadcast %249 : vector<8x1xi1> to vector<8x16xi1>
    %251 = vector.broadcast %cst_48 : f32 to vector<8x16xf32>
    %252 = arith.select %250, %234, %251 : vector<8x16xi1>, vector<8x16xf32>
    %cst_49 = arith.constant dense<0.000000e+00> : vector<16xf32>
    %253 = vector.multi_reduction <add>, %252, %cst_49 [0] : vector<8x16xf32> to vector<16xf32>
    %254 = vector.shape_cast %253 : vector<16xf32> to vector<1x16xf32>
    %255 = vector.extract_strided_slice %234 {offsets = [4, 0], sizes = [1, 16], strides = [1, 1]} : vector<8x16xf32> to vector<1x16xf32>
    %256 = vector.shape_cast %248 : vector<8x1xi1> to vector<8x1xi1>
    %257 = vector.broadcast %256 : vector<8x1xi1> to vector<8x16xi1>
    %258 = vector.shape_cast %254 : vector<1x16xf32> to vector<1x16xf32>
    %259 = vector.broadcast %258 : vector<1x16xf32> to vector<8x16xf32>
    %260 = arith.select %257, %259, %234 : vector<8x16xi1>, vector<8x16xf32>
    %cst_50 = arith.constant dense<true> : vector<8x1xi1>
    %261 = arith.xori %248, %cst_50 : vector<8x1xi1>
    %262 = arith.andi %246, %261 : vector<8x1xi1>
    %263 = vector.shape_cast %262 : vector<8x1xi1> to vector<8x1xi1>
    %264 = vector.broadcast %263 : vector<8x1xi1> to vector<8x16xi1>
    %265 = vector.shape_cast %255 : vector<1x16xf32> to vector<1x16xf32>
    %266 = vector.broadcast %265 : vector<1x16xf32> to vector<8x16xf32>
    %267 = arith.select %264, %266, %260 : vector<8x16xi1>, vector<8x16xf32>
    %268 = vector.extract_strided_slice %254 {offsets = [0, 4], sizes = [1, 1], strides = [1, 1]} : vector<1x16xf32> to vector<1x1xf32>
    %269 = tpu.reciprocal %268 : vector<1x1xf32> -> vector<1x1xf32>
    %270 = vector.broadcast %269 : vector<1x1xf32> to vector<1x16xf32>
    %271 = arith.mulf %254, %270 : vector<1x16xf32>
    %272 = vector.extract_strided_slice %267 {offsets = [0, 4], sizes = [8, 1], strides = [1, 1]} : vector<8x16xf32> to vector<8x1xf32>
    %273 = vector.broadcast %272 : vector<8x1xf32> to vector<8x16xf32>
    %274 = vector.broadcast %271 : vector<1x16xf32> to vector<8x16xf32>
    %275 = arith.mulf %273, %274 : vector<8x16xf32>
    %276 = arith.subf %267, %275 : vector<8x16xf32>
    %277 = vector.shape_cast %248 : vector<8x1xi1> to vector<8x1xi1>
    %278 = vector.broadcast %277 : vector<8x1xi1> to vector<8x16xi1>
    %279 = vector.shape_cast %271 : vector<1x16xf32> to vector<1x16xf32>
    %280 = vector.broadcast %279 : vector<1x16xf32> to vector<8x16xf32>
    %281 = arith.select %278, %280, %276 : vector<8x16xi1>, vector<8x16xf32>
    %282 = vector.extract_strided_slice %281 {offsets = [0, 5], sizes = [8, 1], strides = [1, 1]} : vector<8x16xf32> to vector<8x1xf32>
    %c5_i32 = arith.constant 5 : i32
    %283 = vector.broadcast %c5_i32 : i32 to vector<8x1xi32>
    %284 = arith.cmpi sge, %39, %283 : vector<8x1xi32>
    %285 = math.absf %282 : vector<8x1xf32>
    %286 = arith.mulf %285, %46 : vector<8x1xf32>
    %cst_51 = arith.constant -1.000000e+00 : f32
    %287 = vector.broadcast %cst_51 : f32 to vector<8x1xf32>
    %288 = arith.select %284, %286, %287 : vector<8x1xi1>, vector<8x1xf32>
    %cst_52 = arith.constant dense<0xFF800000> : vector<1xf32>
    %289 = vector.multi_reduction <maximumf>, %288, %cst_52 [0] : vector<8x1xf32> to vector<1xf32>
    %290 = vector.shape_cast %289 : vector<1xf32> to vector<1x1xf32>
    %291 = vector.broadcast %290 : vector<1x1xf32> to vector<8x1xf32>
    %292 = arith.cmpf oge, %288, %291 : vector<8x1xf32>
    %293 = arith.andi %292, %284 : vector<8x1xi1>
    %c5_i32_53 = arith.constant 5 : i32
    %294 = vector.broadcast %c5_i32_53 : i32 to vector<8x1xi32>
    %295 = arith.cmpi eq, %39, %294 : vector<8x1xi32>
    %cst_54 = arith.constant 0.000000e+00 : f32
    %296 = vector.shape_cast %293 : vector<8x1xi1> to vector<8x1xi1>
    %297 = vector.broadcast %296 : vector<8x1xi1> to vector<8x16xi1>
    %298 = vector.broadcast %cst_54 : f32 to vector<8x16xf32>
    %299 = arith.select %297, %281, %298 : vector<8x16xi1>, vector<8x16xf32>
    %cst_55 = arith.constant dense<0.000000e+00> : vector<16xf32>
    %300 = vector.multi_reduction <add>, %299, %cst_55 [0] : vector<8x16xf32> to vector<16xf32>
    %301 = vector.shape_cast %300 : vector<16xf32> to vector<1x16xf32>
    %302 = vector.extract_strided_slice %281 {offsets = [5, 0], sizes = [1, 16], strides = [1, 1]} : vector<8x16xf32> to vector<1x16xf32>
    %303 = vector.shape_cast %295 : vector<8x1xi1> to vector<8x1xi1>
    %304 = vector.broadcast %303 : vector<8x1xi1> to vector<8x16xi1>
    %305 = vector.shape_cast %301 : vector<1x16xf32> to vector<1x16xf32>
    %306 = vector.broadcast %305 : vector<1x16xf32> to vector<8x16xf32>
    %307 = arith.select %304, %306, %281 : vector<8x16xi1>, vector<8x16xf32>
    %cst_56 = arith.constant dense<true> : vector<8x1xi1>
    %308 = arith.xori %295, %cst_56 : vector<8x1xi1>
    %309 = arith.andi %293, %308 : vector<8x1xi1>
    %310 = vector.shape_cast %309 : vector<8x1xi1> to vector<8x1xi1>
    %311 = vector.broadcast %310 : vector<8x1xi1> to vector<8x16xi1>
    %312 = vector.shape_cast %302 : vector<1x16xf32> to vector<1x16xf32>
    %313 = vector.broadcast %312 : vector<1x16xf32> to vector<8x16xf32>
    %314 = arith.select %311, %313, %307 : vector<8x16xi1>, vector<8x16xf32>
    %315 = vector.extract_strided_slice %301 {offsets = [0, 5], sizes = [1, 1], strides = [1, 1]} : vector<1x16xf32> to vector<1x1xf32>
    %316 = tpu.reciprocal %315 : vector<1x1xf32> -> vector<1x1xf32>
    %317 = vector.broadcast %316 : vector<1x1xf32> to vector<1x16xf32>
    %318 = arith.mulf %301, %317 : vector<1x16xf32>
    %319 = vector.extract_strided_slice %314 {offsets = [0, 5], sizes = [8, 1], strides = [1, 1]} : vector<8x16xf32> to vector<8x1xf32>
    %320 = vector.broadcast %319 : vector<8x1xf32> to vector<8x16xf32>
    %321 = vector.broadcast %318 : vector<1x16xf32> to vector<8x16xf32>
    %322 = arith.mulf %320, %321 : vector<8x16xf32>
    %323 = arith.subf %314, %322 : vector<8x16xf32>
    %324 = vector.shape_cast %295 : vector<8x1xi1> to vector<8x1xi1>
    %325 = vector.broadcast %324 : vector<8x1xi1> to vector<8x16xi1>
    %326 = vector.shape_cast %318 : vector<1x16xf32> to vector<1x16xf32>
    %327 = vector.broadcast %326 : vector<1x16xf32> to vector<8x16xf32>
    %328 = arith.select %325, %327, %323 : vector<8x16xi1>, vector<8x16xf32>
    %329 = vector.extract_strided_slice %328 {offsets = [0, 6], sizes = [8, 1], strides = [1, 1]} : vector<8x16xf32> to vector<8x1xf32>
    %c6_i32 = arith.constant 6 : i32
    %330 = vector.broadcast %c6_i32 : i32 to vector<8x1xi32>
    %331 = arith.cmpi sge, %39, %330 : vector<8x1xi32>
    %332 = math.absf %329 : vector<8x1xf32>
    %333 = arith.mulf %332, %46 : vector<8x1xf32>
    %cst_57 = arith.constant -1.000000e+00 : f32
    %334 = vector.broadcast %cst_57 : f32 to vector<8x1xf32>
    %335 = arith.select %331, %333, %334 : vector<8x1xi1>, vector<8x1xf32>
    %cst_58 = arith.constant dense<0xFF800000> : vector<1xf32>
    %336 = vector.multi_reduction <maximumf>, %335, %cst_58 [0] : vector<8x1xf32> to vector<1xf32>
    %337 = vector.shape_cast %336 : vector<1xf32> to vector<1x1xf32>
    %338 = vector.broadcast %337 : vector<1x1xf32> to vector<8x1xf32>
    %339 = arith.cmpf oge, %335, %338 : vector<8x1xf32>
    %340 = arith.andi %339, %331 : vector<8x1xi1>
    %c6_i32_59 = arith.constant 6 : i32
    %341 = vector.broadcast %c6_i32_59 : i32 to vector<8x1xi32>
    %342 = arith.cmpi eq, %39, %341 : vector<8x1xi32>
    %cst_60 = arith.constant 0.000000e+00 : f32
    %343 = vector.shape_cast %340 : vector<8x1xi1> to vector<8x1xi1>
    %344 = vector.broadcast %343 : vector<8x1xi1> to vector<8x16xi1>
    %345 = vector.broadcast %cst_60 : f32 to vector<8x16xf32>
    %346 = arith.select %344, %328, %345 : vector<8x16xi1>, vector<8x16xf32>
    %cst_61 = arith.constant dense<0.000000e+00> : vector<16xf32>
    %347 = vector.multi_reduction <add>, %346, %cst_61 [0] : vector<8x16xf32> to vector<16xf32>
    %348 = vector.shape_cast %347 : vector<16xf32> to vector<1x16xf32>
    %349 = vector.extract_strided_slice %328 {offsets = [6, 0], sizes = [1, 16], strides = [1, 1]} : vector<8x16xf32> to vector<1x16xf32>
    %350 = vector.shape_cast %342 : vector<8x1xi1> to vector<8x1xi1>
    %351 = vector.broadcast %350 : vector<8x1xi1> to vector<8x16xi1>
    %352 = vector.shape_cast %348 : vector<1x16xf32> to vector<1x16xf32>
    %353 = vector.broadcast %352 : vector<1x16xf32> to vector<8x16xf32>
    %354 = arith.select %351, %353, %328 : vector<8x16xi1>, vector<8x16xf32>
    %cst_62 = arith.constant dense<true> : vector<8x1xi1>
    %355 = arith.xori %342, %cst_62 : vector<8x1xi1>
    %356 = arith.andi %340, %355 : vector<8x1xi1>
    %357 = vector.shape_cast %356 : vector<8x1xi1> to vector<8x1xi1>
    %358 = vector.broadcast %357 : vector<8x1xi1> to vector<8x16xi1>
    %359 = vector.shape_cast %349 : vector<1x16xf32> to vector<1x16xf32>
    %360 = vector.broadcast %359 : vector<1x16xf32> to vector<8x16xf32>
    %361 = arith.select %358, %360, %354 : vector<8x16xi1>, vector<8x16xf32>
    %362 = vector.extract_strided_slice %348 {offsets = [0, 6], sizes = [1, 1], strides = [1, 1]} : vector<1x16xf32> to vector<1x1xf32>
    %363 = tpu.reciprocal %362 : vector<1x1xf32> -> vector<1x1xf32>
    %364 = vector.broadcast %363 : vector<1x1xf32> to vector<1x16xf32>
    %365 = arith.mulf %348, %364 : vector<1x16xf32>
    %366 = vector.extract_strided_slice %361 {offsets = [0, 6], sizes = [8, 1], strides = [1, 1]} : vector<8x16xf32> to vector<8x1xf32>
    %367 = vector.broadcast %366 : vector<8x1xf32> to vector<8x16xf32>
    %368 = vector.broadcast %365 : vector<1x16xf32> to vector<8x16xf32>
    %369 = arith.mulf %367, %368 : vector<8x16xf32>
    %370 = arith.subf %361, %369 : vector<8x16xf32>
    %371 = vector.shape_cast %342 : vector<8x1xi1> to vector<8x1xi1>
    %372 = vector.broadcast %371 : vector<8x1xi1> to vector<8x16xi1>
    %373 = vector.shape_cast %365 : vector<1x16xf32> to vector<1x16xf32>
    %374 = vector.broadcast %373 : vector<1x16xf32> to vector<8x16xf32>
    %375 = arith.select %372, %374, %370 : vector<8x16xi1>, vector<8x16xf32>
    %376 = vector.extract_strided_slice %375 {offsets = [0, 7], sizes = [8, 1], strides = [1, 1]} : vector<8x16xf32> to vector<8x1xf32>
    %c7_i32_63 = arith.constant 7 : i32
    %377 = vector.broadcast %c7_i32_63 : i32 to vector<8x1xi32>
    %378 = arith.cmpi sge, %39, %377 : vector<8x1xi32>
    %379 = math.absf %376 : vector<8x1xf32>
    %380 = arith.mulf %379, %46 : vector<8x1xf32>
    %cst_64 = arith.constant -1.000000e+00 : f32
    %381 = vector.broadcast %cst_64 : f32 to vector<8x1xf32>
    %382 = arith.select %378, %380, %381 : vector<8x1xi1>, vector<8x1xf32>
    %cst_65 = arith.constant dense<0xFF800000> : vector<1xf32>
    %383 = vector.multi_reduction <maximumf>, %382, %cst_65 [0] : vector<8x1xf32> to vector<1xf32>
    %384 = vector.shape_cast %383 : vector<1xf32> to vector<1x1xf32>
    %385 = vector.broadcast %384 : vector<1x1xf32> to vector<8x1xf32>
    %386 = arith.cmpf oge, %382, %385 : vector<8x1xf32>
    %387 = arith.andi %386, %378 : vector<8x1xi1>
    %c7_i32_66 = arith.constant 7 : i32
    %388 = vector.broadcast %c7_i32_66 : i32 to vector<8x1xi32>
    %389 = arith.cmpi eq, %39, %388 : vector<8x1xi32>
    %cst_67 = arith.constant 0.000000e+00 : f32
    %390 = vector.shape_cast %387 : vector<8x1xi1> to vector<8x1xi1>
    %391 = vector.broadcast %390 : vector<8x1xi1> to vector<8x16xi1>
    %392 = vector.broadcast %cst_67 : f32 to vector<8x16xf32>
    %393 = arith.select %391, %375, %392 : vector<8x16xi1>, vector<8x16xf32>
    %cst_68 = arith.constant dense<0.000000e+00> : vector<16xf32>
    %394 = vector.multi_reduction <add>, %393, %cst_68 [0] : vector<8x16xf32> to vector<16xf32>
    %395 = vector.shape_cast %394 : vector<16xf32> to vector<1x16xf32>
    %396 = vector.extract_strided_slice %375 {offsets = [7, 0], sizes = [1, 16], strides = [1, 1]} : vector<8x16xf32> to vector<1x16xf32>
    %397 = vector.shape_cast %389 : vector<8x1xi1> to vector<8x1xi1>
    %398 = vector.broadcast %397 : vector<8x1xi1> to vector<8x16xi1>
    %399 = vector.shape_cast %395 : vector<1x16xf32> to vector<1x16xf32>
    %400 = vector.broadcast %399 : vector<1x16xf32> to vector<8x16xf32>
    %401 = arith.select %398, %400, %375 : vector<8x16xi1>, vector<8x16xf32>
    %cst_69 = arith.constant dense<true> : vector<8x1xi1>
    %402 = arith.xori %389, %cst_69 : vector<8x1xi1>
    %403 = arith.andi %387, %402 : vector<8x1xi1>
    %404 = vector.shape_cast %403 : vector<8x1xi1> to vector<8x1xi1>
    %405 = vector.broadcast %404 : vector<8x1xi1> to vector<8x16xi1>
    %406 = vector.shape_cast %396 : vector<1x16xf32> to vector<1x16xf32>
    %407 = vector.broadcast %406 : vector<1x16xf32> to vector<8x16xf32>
    %408 = arith.select %405, %407, %401 : vector<8x16xi1>, vector<8x16xf32>
    %409 = vector.extract_strided_slice %395 {offsets = [0, 7], sizes = [1, 1], strides = [1, 1]} : vector<1x16xf32> to vector<1x1xf32>
    %410 = tpu.reciprocal %409 : vector<1x1xf32> -> vector<1x1xf32>
    %411 = vector.broadcast %410 : vector<1x1xf32> to vector<1x16xf32>
    %412 = arith.mulf %395, %411 : vector<1x16xf32>
    %413 = vector.extract_strided_slice %408 {offsets = [0, 7], sizes = [8, 1], strides = [1, 1]} : vector<8x16xf32> to vector<8x1xf32>
    %414 = vector.broadcast %413 : vector<8x1xf32> to vector<8x16xf32>
    %415 = vector.broadcast %412 : vector<1x16xf32> to vector<8x16xf32>
    %416 = arith.mulf %414, %415 : vector<8x16xf32>
    %417 = arith.subf %408, %416 : vector<8x16xf32>
    %418 = vector.shape_cast %389 : vector<8x1xi1> to vector<8x1xi1>
    %419 = vector.broadcast %418 : vector<8x1xi1> to vector<8x16xi1>
    %420 = vector.shape_cast %412 : vector<1x16xf32> to vector<1x16xf32>
    %421 = vector.broadcast %420 : vector<1x16xf32> to vector<8x16xf32>
    %422 = arith.select %419, %421, %417 : vector<8x16xi1>, vector<8x16xf32>
    %423 = vector.extract_strided_slice %422 {offsets = [0, 8], sizes = [8, 8], strides = [1, 1]} : vector<8x16xf32> to vector<8x8xf32>
    %cst_70 = arith.constant dense<0.000000e+00> : vector<8x8xf32>
    %424 = tpu.matmul %18, %423, %cst_70 {dimension_numbers = #tpu.dot_dimension_numbers<[1], [0], [0], [1], [0, 0, 1, 1], [], []>} : vector<8x8xf32>, vector<8x8xf32>, vector<8x8xf32> -> vector<8x8xf32>
    %cst_71 = arith.constant dense<0.000000e+00> : vector<8x8xf32>
    %425 = tpu.matmul %18, %423, %cst_71 {dimension_numbers = #tpu.dot_dimension_numbers<[1], [1], [0], [0], [0, 0, 1, 0], [], []>} : vector<8x8xf32>, vector<8x8xf32>, vector<8x8xf32> -> vector<8x8xf32>
    %426 = arith.subf %424, %425 : vector<8x8xf32>
    %c1_i32_72 = arith.constant 1 : i32
    %427 = vector.broadcast %c1_i32_72 : i32 to vector<8x8xi32>
    %428 = arith.cmpi eq, %13, %427 : vector<8x8xi32>
    %429 = arith.select %428, %424, %426 : vector<8x8xi1>, vector<8x8xf32>
    %c1_i32_73 = arith.constant 1 : i32
    %430 = vector.broadcast %c1_i32_73 : i32 to vector<8x8xi32>
    %431 = arith.cmpi eq, %14, %430 : vector<8x8xi32>
    %cst_74 = arith.constant 0.000000e+00 : f32
    %432 = vector.broadcast %cst_74 : f32 to vector<8x8xf32>
    %433 = arith.subf %432, %425 : vector<8x8xf32>
    %434 = arith.select %431, %433, %429 : vector<8x8xi1>, vector<8x8xf32>
    %cst_75 = arith.constant dense<0.000000e+00> : vector<8x64xf32>
    %435 = tpu.matmul %434, %4, %cst_75 {dimension_numbers = #tpu.dot_dimension_numbers<[1], [0], [0], [1], [0, 0, 1, 1], [], []>} : vector<8x8xf32>, vector<8x64xf32>, vector<8x64xf32> -> vector<8x64xf32>
    %c0_76 = arith.constant 0 : index
    %c0_77 = arith.constant 0 : index
    %436 = vector.load %arg7[%c0_76, %c0_77] : memref<64x32xf32, #tpu.memory_space<vmem>>, vector<64x32xf32>
    %cst_78 = arith.constant dense<0.000000e+00> : vector<8x32xf32>
    %437 = tpu.matmul %435, %436, %cst_78 {dimension_numbers = #tpu.dot_dimension_numbers<[1], [0], [0], [1], [0, 0, 1, 1], [], []>} : vector<8x64xf32>, vector<64x32xf32>, vector<8x32xf32> -> vector<8x32xf32>
    %c0_79 = arith.constant 0 : index
    %c0_80 = arith.constant 0 : index
    %438 = vector.load %arg8[%c0_79, %c0_80] : memref<1x32xf32, #tpu.memory_space<vmem>>, vector<1x32xf32>
    %439 = vector.broadcast %438 : vector<1x32xf32> to vector<8x32xf32>
    %440 = arith.addf %437, %439 : vector<8x32xf32>
    %cst_81 = arith.constant 0.000000e+00 : f32
    %441 = vector.broadcast %cst_81 : f32 to vector<8x32xf32>
    %442 = arith.maximumf %440, %441 : vector<8x32xf32>
    %cst_82 = arith.constant dense<0.000000e+00> : vector<8x32xf32>
    %443 = tpu.matmul %434, %442, %cst_82 {dimension_numbers = #tpu.dot_dimension_numbers<[1], [0], [0], [1], [0, 0, 1, 1], [], []>} : vector<8x8xf32>, vector<8x32xf32>, vector<8x32xf32> -> vector<8x32xf32>
    %c0_83 = arith.constant 0 : index
    %c0_84 = arith.constant 0 : index
    %444 = vector.load %arg9[%c0_83, %c0_84] : memref<32x32xf32, #tpu.memory_space<vmem>>, vector<32x32xf32>
    %cst_85 = arith.constant dense<0.000000e+00> : vector<8x32xf32>
    %445 = tpu.matmul %443, %444, %cst_85 {dimension_numbers = #tpu.dot_dimension_numbers<[1], [0], [0], [1], [0, 0, 1, 1], [], []>} : vector<8x32xf32>, vector<32x32xf32>, vector<8x32xf32> -> vector<8x32xf32>
    %c0_86 = arith.constant 0 : index
    %c0_87 = arith.constant 0 : index
    %446 = vector.load %arg10[%c0_86, %c0_87] : memref<1x32xf32, #tpu.memory_space<vmem>>, vector<1x32xf32>
    %447 = vector.broadcast %446 : vector<1x32xf32> to vector<8x32xf32>
    %448 = arith.addf %445, %447 : vector<8x32xf32>
    %cst_88 = arith.constant 0.000000e+00 : f32
    %449 = vector.broadcast %cst_88 : f32 to vector<8x32xf32>
    %450 = arith.maximumf %448, %449 : vector<8x32xf32>
    %c0_89 = arith.constant 0 : index
    %c0_90 = arith.constant 0 : index
    %c0_91 = arith.constant 0 : index
    %451 = vector.load %arg3[%c0_89, %c0_90, %c0_91] : memref<1x1x8xf32, #tpu.memory_space<vmem>>, vector<1x1x8xf32>
    %452 = vector.shape_cast %451 : vector<1x1x8xf32> to vector<1x8xf32>
    %453 = tpu.iota {dimensions = array<i32: 0>} : vector<8x8xi32>
    %454 = tpu.iota {dimensions = array<i32: 1>} : vector<8x8xi32>
    %455 = arith.cmpi sle, %453, %454 : vector<8x8xi32>
    %456 = arith.extui %455 : vector<8x8xi1> to vector<8x8xi32>
    %457 = arith.sitofp %456 : vector<8x8xi32> to vector<8x8xf32>
    %cst_92 = arith.constant dense<0.000000e+00> : vector<1x8xf32>
    %458 = tpu.matmul %452, %457, %cst_92 {dimension_numbers = #tpu.dot_dimension_numbers<[1], [0], [0], [1], [0, 0, 1, 1], [], []>} : vector<1x8xf32>, vector<8x8xf32>, vector<1x8xf32> -> vector<1x8xf32>
    %459 = tpu.iota {dimensions = array<i32: 0>} : vector<8x8xi32>
    %460 = arith.sitofp %459 : vector<8x8xi32> to vector<8x8xf32>
    %461 = vector.shape_cast %452 : vector<1x8xf32> to vector<1x8xf32>
    %462 = vector.broadcast %461 : vector<1x8xf32> to vector<8x8xf32>
    %cst_93 = arith.constant 5.000000e-01 : f32
    %463 = vector.broadcast %cst_93 : f32 to vector<8x8xf32>
    %464 = arith.cmpf ogt, %462, %463 : vector<8x8xf32>
    %465 = vector.shape_cast %458 : vector<1x8xf32> to vector<1x8xf32>
    %466 = vector.broadcast %465 : vector<1x8xf32> to vector<8x8xf32>
    %cst_94 = arith.constant 1.000000e+00 : f32
    %467 = vector.broadcast %cst_94 : f32 to vector<8x8xf32>
    %468 = arith.addf %460, %467 : vector<8x8xf32>
    %469 = arith.subf %466, %468 : vector<8x8xf32>
    %470 = math.absf %469 : vector<8x8xf32>
    %cst_95 = arith.constant 5.000000e-01 : f32
    %471 = vector.broadcast %cst_95 : f32 to vector<8x8xf32>
    %472 = arith.cmpf olt, %470, %471 : vector<8x8xf32>
    %473 = arith.andi %464, %472 : vector<8x8xi1>
    %474 = arith.extui %473 : vector<8x8xi1> to vector<8x8xi32>
    %475 = arith.sitofp %474 : vector<8x8xi32> to vector<8x8xf32>
    %cst_96 = arith.constant dense<0.000000e+00> : vector<8x32xf32>
    %476 = tpu.matmul %475, %450, %cst_96 {dimension_numbers = #tpu.dot_dimension_numbers<[1], [0], [0], [1], [0, 0, 1, 1], [], []>} : vector<8x8xf32>, vector<8x32xf32>, vector<8x32xf32> -> vector<8x32xf32>
    %c0_97 = arith.constant 0 : index
    %c0_98 = arith.constant 0 : index
    %477 = vector.load %arg11[%c0_97, %c0_98] : memref<32x128xf32, #tpu.memory_space<vmem>>, vector<32x128xf32>
    %cst_99 = arith.constant dense<0.000000e+00> : vector<8x128xf32>
    %478 = tpu.matmul %476, %477, %cst_99 {dimension_numbers = #tpu.dot_dimension_numbers<[1], [0], [0], [1], [0, 0, 1, 1], [], []>} : vector<8x32xf32>, vector<32x128xf32>, vector<8x128xf32> -> vector<8x128xf32>
    %479 = vector.extract_strided_slice %478 {offsets = [0, 0], sizes = [8, 32], strides = [1, 1]} : vector<8x128xf32> to vector<8x32xf32>
    %cst_100 = arith.constant dense<0.000000e+00> : vector<8x8xf32>
    %480 = tpu.matmul %479, %476, %cst_100 {dimension_numbers = #tpu.dot_dimension_numbers<[1], [1], [0], [0], [0, 0, 1, 0], [], []>} : vector<8x32xf32>, vector<8x32xf32>, vector<8x8xf32> -> vector<8x8xf32>
    %481 = vector.extract_strided_slice %478 {offsets = [0, 32], sizes = [8, 32], strides = [1, 1]} : vector<8x128xf32> to vector<8x32xf32>
    %cst_101 = arith.constant dense<0.000000e+00> : vector<8x8xf32>
    %482 = tpu.matmul %481, %476, %cst_101 {dimension_numbers = #tpu.dot_dimension_numbers<[1], [1], [0], [0], [0, 0, 1, 0], [], []>} : vector<8x32xf32>, vector<8x32xf32>, vector<8x8xf32> -> vector<8x8xf32>
    %483 = vector.extract_strided_slice %478 {offsets = [0, 64], sizes = [8, 32], strides = [1, 1]} : vector<8x128xf32> to vector<8x32xf32>
    %cst_102 = arith.constant dense<0.000000e+00> : vector<8x8xf32>
    %484 = tpu.matmul %483, %476, %cst_102 {dimension_numbers = #tpu.dot_dimension_numbers<[1], [1], [0], [0], [0, 0, 1, 0], [], []>} : vector<8x32xf32>, vector<8x32xf32>, vector<8x8xf32> -> vector<8x8xf32>
    %485 = vector.extract_strided_slice %478 {offsets = [0, 96], sizes = [8, 32], strides = [1, 1]} : vector<8x128xf32> to vector<8x32xf32>
    %cst_103 = arith.constant dense<0.000000e+00> : vector<8x8xf32>
    %486 = tpu.matmul %485, %476, %cst_103 {dimension_numbers = #tpu.dot_dimension_numbers<[1], [1], [0], [0], [0, 0, 1, 0], [], []>} : vector<8x32xf32>, vector<8x32xf32>, vector<8x8xf32> -> vector<8x8xf32>
    %487 = tpu.concatenate %480, %482, %484, %486 in 1 : vector<8x8xf32>, vector<8x8xf32>, vector<8x8xf32>, vector<8x8xf32> -> vector<8x32xf32>
    %c0_104 = arith.constant 0 : index
    %c0_105 = arith.constant 0 : index
    %488 = vector.load %arg12[%c0_104, %c0_105] : memref<1x32xf32, #tpu.memory_space<vmem>>, vector<1x32xf32>
    %489 = vector.broadcast %488 : vector<1x32xf32> to vector<8x32xf32>
    %490 = arith.addf %487, %489 : vector<8x32xf32>
    %491 = vector.shape_cast %490 : vector<8x32xf32> to vector<1x8x32xf32>
    %c0_106 = arith.constant 0 : index
    %c0_107 = arith.constant 0 : index
    %c0_108 = arith.constant 0 : index
    %492 = vector.load %arg13[%c0_106, %c0_107, %c0_108] : memref<1x8x32xf32, #tpu.memory_space<vmem>>, vector<1x8x32xf32>
    tpu.vector_store %arg13[%c0_106, %c0_107, %c0_108], %491 {strides = array<i32>} : memref<1x8x32xf32, #tpu.memory_space<vmem>>, vector<1x8x32xf32>,
    return
  }
  func.func @transform_0(%arg0: i32) -> (i32, i32, i32) {
    %c0_i32 = arith.constant 0 : i32
    %c0_i32_0 = arith.constant 0 : i32
    %c0_i32_1 = arith.constant 0 : i32
    return %arg0, %c0_i32, %c0_i32_0 : i32, i32, i32
  }
  func.func @transform_1(%arg0: i32) -> (i32, i32, i32) {
    %c0_i32 = arith.constant 0 : i32
    %c0_i32_0 = arith.constant 0 : i32
    %c0_i32_1 = arith.constant 0 : i32
    return %arg0, %c0_i32, %c0_i32_0 : i32, i32, i32
  }
  func.func @transform_2(%arg0: i32) -> (i32, i32, i32) {
    %c0_i32 = arith.constant 0 : i32
    %c0_i32_0 = arith.constant 0 : i32
    %c0_i32_1 = arith.constant 0 : i32
    return %arg0, %c0_i32, %c0_i32_0 : i32, i32, i32
  }
  func.func @transform_3(%arg0: i32) -> (i32, i32) {
    %c0_i32 = arith.constant 0 : i32
    %c0_i32_0 = arith.constant 0 : i32
    %c0_i32_1 = arith.constant 0 : i32
    return %c0_i32, %c0_i32_0 : i32, i32
  }
  func.func @transform_4(%arg0: i32) -> (i32, i32) {
    %c0_i32 = arith.constant 0 : i32
    %c0_i32_0 = arith.constant 0 : i32
    %c0_i32_1 = arith.constant 0 : i32
    return %c0_i32, %c0_i32_0 : i32, i32
  }
  func.func @transform_5(%arg0: i32) -> (i32, i32) {
    %c0_i32 = arith.constant 0 : i32
    %c0_i32_0 = arith.constant 0 : i32
    %c0_i32_1 = arith.constant 0 : i32
    return %c0_i32, %c0_i32_0 : i32, i32
  }
  func.func @transform_6(%arg0: i32) -> (i32, i32) {
    %c0_i32 = arith.constant 0 : i32
    %c0_i32_0 = arith.constant 0 : i32
    %c0_i32_1 = arith.constant 0 : i32
    return %c0_i32, %c0_i32_0 : i32, i32
  }
  func.func @transform_7(%arg0: i32) -> (i32, i32) {
    %c0_i32 = arith.constant 0 : i32
    %c0_i32_0 = arith.constant 0 : i32
    %c0_i32_1 = arith.constant 0 : i32
    return %c0_i32, %c0_i32_0 : i32, i32
  }
  func.func @transform_8(%arg0: i32) -> (i32, i32) {
    %c0_i32 = arith.constant 0 : i32
    %c0_i32_0 = arith.constant 0 : i32
    %c0_i32_1 = arith.constant 0 : i32
    return %c0_i32, %c0_i32_0 : i32, i32
  }
  func.func @transform_9(%arg0: i32) -> (i32, i32) {
    %c0_i32 = arith.constant 0 : i32
    %c0_i32_0 = arith.constant 0 : i32
    %c0_i32_1 = arith.constant 0 : i32
    return %c0_i32, %c0_i32_0 : i32, i32
  }
  func.func @transform_10(%arg0: i32) -> (i32, i32) {
    %c0_i32 = arith.constant 0 : i32
    %c0_i32_0 = arith.constant 0 : i32
    %c0_i32_1 = arith.constant 0 : i32
    return %c0_i32, %c0_i32_0 : i32, i32
  }
  func.func @transform_11(%arg0: i32) -> (i32, i32) {
    %c0_i32 = arith.constant 0 : i32
    %c0_i32_0 = arith.constant 0 : i32
    %c0_i32_1 = arith.constant 0 : i32
    return %c0_i32, %c0_i32_0 : i32, i32
  }
  func.func @transform_12(%arg0: i32) -> (i32, i32, i32) {
    %c0_i32 = arith.constant 0 : i32
    %c0_i32_0 = arith.constant 0 : i32
    %c0_i32_1 = arith.constant 0 : i32
    return %arg0, %c0_i32, %c0_i32_0 : i32, i32, i32
  }
}

</mosaic_0001>

<llo_original>
// kernel: tpu_custom_call.1
$region0: #{tpu_custom_call.1}
  #allocation0 [shape = 'u32[]', space=smem, size = 0x4, offset = 0x4, fixed_abs, tag = 'smem constant byte address 0x4 - core index']
  #allocation1 [shape = 'u32[144,128]{1,0:T(1,128)}', space=vmem, size = 0x12000, scoped, tag = 'internal scratch']
  %s0 = inlined_call_operand.hbm [shape: f32[2,8,16], index: 0, kind: input, shape index: {}]
  %s1 = inlined_call_operand.vmem [shape: f32[2,16,64], index: 1, kind: input, shape index: {}]
  %s2 = inlined_call_operand.vmem [shape: f32[2,1,8], index: 2, kind: input, shape index: {}]
  %s3 = inlined_call_operand.vmem [shape: f32[64,64], index: 3, kind: input, shape index: {}]
  %s4 = inlined_call_operand.hbm [shape: f32[1,64], index: 4, kind: input, shape index: {}]
  %s5 = inlined_call_operand.hbm [shape: f32[32,32], index: 5, kind: input, shape index: {}]
  %s6 = inlined_call_operand.vmem [shape: f32[64,32], index: 6, kind: input, shape index: {}]
  %s7 = inlined_call_operand.hbm [shape: f32[1,32], index: 7, kind: input, shape index: {}]
  %s8 = inlined_call_operand.hbm [shape: f32[32,32], index: 8, kind: input, shape index: {}]
  %s9 = inlined_call_operand.hbm [shape: f32[1,32], index: 9, kind: input, shape index: {}]
  %s10 = inlined_call_operand.vmem [shape: f32[32,128], index: 10, kind: input, shape index: {}]
  %s11 = inlined_call_operand.vmem [shape: f32[1,32], index: 11, kind: input, shape index: {}]
  %s12 = inlined_call_operand.hbm [shape: f32[2,8,32], index: 12, kind: output, shape index: {}]
  %s13 = sld [smem:[#allocation0]]
  $region105: #{tpu_custom_call.1} parent=0
    _
  %s15 = ssub.s32 1, %s13
  %s16 = scalar_select 0, %s15, %s13
  $region1: #{tpu_custom_call.1} parent=0
    #allocation2 [shape = 'u8[8192]{0}', space=vmem, size = 0x2000, scoped, tag = 'input window, operand 0']
    #allocation3 [shape = 's32[2]{0}', space=sflag, size = 0x8, scoped, tag = 'scoped memory for tpu_custom_call.1']
    #allocation4 [shape = 's32[2]{0}', space=sflag, size = 0x8, scoped, tag = 'scoped memory for tpu_custom_call.1']
    #allocation5 [shape = 'u8[512]{0}', space=vmem, size = 0x400, scoped, tag = 'input window, operand 4, single buffered']
    #allocation6 [shape = 's32[1]{0}', space=sflag, size = 0x4, scoped, tag = 'scoped memory for tpu_custom_call.1']
    #allocation7 [shape = 'u8[16384]{0}', space=vmem, size = 0x4000, scoped, tag = 'input window, operand 5, single buffered']
    #allocation8 [shape = 'u8[512]{0}', space=vmem, size = 0x400, scoped, tag = 'input window, operand 7, single buffered']
    #allocation9 [shape = 's32[1]{0}', space=sflag, size = 0x4, scoped, tag = 'scoped memory for tpu_custom_call.1']
    #allocation10 [shape = 'u8[16384]{0}', space=vmem, size = 0x4000, scoped, tag = 'input window, operand 8, single buffered']
    #allocation11 [shape = 'u8[512]{0}', space=vmem, size = 0x400, scoped, tag = 'input window, operand 9, single buffered']
    #allocation12 [shape = 's32[1]{0}', space=sflag, size = 0x4, scoped, tag = 'scoped memory for tpu_custom_call.1']
    #allocation13 [shape = 'u8[8192]{0}', space=vmem, size = 0x2000, scoped, tag = 'output window, operand 0']
    %17 = vsyncpa [#allocation3], 0
    %s18 = scalar_lea.sflag [#allocation3], 1
    %19 = vsyncpa %s18, 0
    %20 = vsyncpa [#allocation6], 0
    %21 = vsyncpa [#allocation9], 0
    %22 = vsyncpa [#allocation12], 0
    %23 = vsyncpa [#allocation4], 0
    %s24 = scalar_lea.sflag [#allocation4], 1
    %25 = vsyncpa %s24, 0
    loop: start=0, step=1, limit=4
    $region2: #{tpu_custom_call.1} parent=1 // loop_pre_header
      _
    $region3: #{tpu_custom_call.1} parent=1 // loop_header
      %s27 = sphi 0, %s31
      %p28 = scmp.ge.s32.totalorder %s27, 4
      %s37 = sphi 0, %s39
      %s40 = sphi 0, %s37
      %s41 = sphi 0, %s40
      %s57 = sphi 0, %s41
      %s63 = sphi 0, %s65
      %s66 = sphi 0, %s63
      %s67 = sphi 0, %s66
      %s83 = sphi 0, %s67
      %s89 = sphi 0, %s91
      %s92 = sphi 0, %s89
      %s93 = sphi 0, %s92
      %s109 = sphi 0, %s93
      %s113 = sphi 0, %s113
      %s115 = sphi 0, %s113
      %s116 = sphi 0, %s115
      %s130 = sphi 0, %s116
      %s134 = sphi 0, %s134
      %s136 = sphi 0, %s134
      %s137 = sphi 0, %s136
      %s151 = sphi 0, %s137
      %s155 = sphi 0, %s155
      %s157 = sphi 0, %s155
      %s158 = sphi 0, %s157
      %s172 = sphi 0, %s158
      %s176 = sphi 0, %s176
      %s178 = sphi 0, %s176
      %s179 = sphi 0, %s178
      %s193 = sphi 0, %s179
      %s197 = sphi 0, %s197
      %s199 = sphi 0, %s197
      %s200 = sphi 0, %s199
      %s214 = sphi 0, %s200
      %s218 = sphi 0, %s218
      %s220 = sphi 0, %s218
      %s221 = sphi 0, %s220
      %s235 = sphi 0, %s221
      %s239 = sphi 0, %s239
      %s241 = sphi 0, %s239
      %s242 = sphi 0, %s241
      %s256 = sphi 0, %s242
      %s260 = sphi 0, %s260
      %s262 = sphi 0, %s260
      %s263 = sphi 0, %s262
      %s277 = sphi 0, %s263
      %s281 = sphi 0, %s281
      %s283 = sphi 0, %s281
      %s284 = sphi 0, %s283
      %s298 = sphi 0, %s284
      %s304 = sphi 0, %s306
      %s307 = sphi 0, %s304
      %s308 = sphi 0, %s307
      %s324 = sphi 0, %s308
    $region4: #{tpu_custom_call.1} parent=1 // loop_header_branch
      %30 = sbr.rel (%p28) target = $region8
    $region5: #{tpu_custom_call.1} parent=1 // loop_body
      %s32 = ssub.s32 %s27, 1
      %s33 = ssub.s32 %s27, 2
      %s34 = sadd.s32 %s27, 1
      %s35 = ssub.s32 %s27, %s34
      %p36 = scmp.eq.s32.totalorder %s35, 0
      %s38 = sadd.s32 %s37, 1
      %s39 = scalar_select %p36, %s37, %s38
      %p42 = pneg %p36
      %p43 = scmp.eq.s32.totalorder %s27, 1
      %p44 = por %p42, %p43
      %p45 = scmp.ne.s32.totalorder %s37, %s40
      %p46 = scmp.eq.s32.totalorder %s27, 0
      %p47 = por %p45, %p46
      %p48 = scmp.ne.s32.totalorder %s37, %s40
      %p49 = scmp.eq.s32.totalorder %s32, 1
      %p50 = por %p48, %p49
      %p51 = scmp.ne.s32.totalorder %s40, %s41
      %p52 = scmp.eq.s32.totalorder %s32, 0
      %p53 = por %p51, %p52
      %p54 = scmp.ne.s32.totalorder %s40, %s41
      %p55 = scmp.eq.s32.totalorder %s33, 1
      %p56 = por %p54, %p55
      %p58 = scmp.ne.s32.totalorder %s41, %s57
      %p59 = scmp.eq.s32.totalorder %s33, 0
      %p60 = por %p58, %p59
      %s61 = ssub.s32 %s27, %s34
      %p62 = scmp.eq.s32.totalorder %s61, 0
      %s64 = sadd.s32 %s63, 1
      %s65 = scalar_select %p62, %s63, %s64
      %p68 = pneg %p62
      %p69 = scmp.eq.s32.totalorder %s27, 1
      %p70 = por %p68, %p69
      %p71 = scmp.ne.s32.totalorder %s63, %s66
      %p72 = scmp.eq.s32.totalorder %s27, 0
      %p73 = por %p71, %p72
      %p74 = scmp.ne.s32.totalorder %s63, %s66
      %p75 = scmp.eq.s32.totalorder %s32, 1
      %p76 = por %p74, %p75
      %p77 = scmp.ne.s32.totalorder %s66, %s67
      %p78 = scmp.eq.s32.totalorder %s32, 0
      %p79 = por %p77, %p78
      %p80 = scmp.ne.s32.totalorder %s66, %s67
      %p81 = scmp.eq.s32.totalorder %s33, 1
      %p82 = por %p80, %p81
      %p84 = scmp.ne.s32.totalorder %s67, %s83
      %p85 = scmp.eq.s32.totalorder %s33, 0
      %p86 = por %p84, %p85
      %s87 = ssub.s32 %s27, %s34
      %p88 = scmp.eq.s32.totalorder %s87, 0
      %s90 = sadd.s32 %s89, 1
      %s91 = scalar_select %p88, %s89, %s90
      %p94 = pneg %p88
      %p95 = scmp.eq.s32.totalorder %s27, 1
      %p96 = por %p94, %p95
      %p97 = scmp.ne.s32.totalorder %s89, %s92
      %p98 = scmp.eq.s32.totalorder %s27, 0
      %p99 = por %p97, %p98
      %p100 = scmp.ne.s32.totalorder %s89, %s92
      %p101 = scmp.eq.s32.totalorder %s32, 1
      %p102 = por %p100, %p101
      %p103 = scmp.ne.s32.totalorder %s92, %s93
      %p104 = scmp.eq.s32.totalorder %s32, 0
      %p105 = por %p103, %p104
      %p106 = scmp.ne.s32.totalorder %s92, %s93
      %p107 = scmp.eq.s32.totalorder %s33, 1
      %p108 = por %p106, %p107
      %p110 = scmp.ne.s32.totalorder %s93, %s109
      %p111 = scmp.eq.s32.totalorder %s33, 0
      %p112 = por %p110, %p111
      %s114 = sadd.s32 %s113, 1
      %p117 = scmp.eq.s32.totalorder %s27, 1
      %p118 = scmp.ne.s32.totalorder %s113, %s115
      %p119 = scmp.eq.s32.totalorder %s27, 0
      %p120 = por %p118, %p119
      %p121 = scmp.ne.s32.totalorder %s113, %s115
      %p122 = scmp.eq.s32.totalorder %s32, 1
      %p123 = por %p121, %p122
      %p124 = scmp.ne.s32.totalorder %s115, %s116
      %p125 = scmp.eq.s32.totalorder %s32, 0
      %p126 = por %p124, %p125
      %p127 = scmp.ne.s32.totalorder %s115, %s116
      %p128 = scmp.eq.s32.totalorder %s33, 1
      %p129 = por %p127, %p128
      %p131 = scmp.ne.s32.totalorder %s116, %s130
      %p132 = scmp.eq.s32.totalorder %s33, 0
      %p133 = por %p131, %p132
      %s135 = sadd.s32 %s134, 1
      %p138 = scmp.eq.s32.totalorder %s27, 1
      %p139 = scmp.ne.s32.totalorder %s134, %s136
      %p140 = scmp.eq.s32.totalorder %s27, 0
      %p141 = por %p139, %p140
      %p142 = scmp.ne.s32.totalorder %s134, %s136
      %p143 = scmp.eq.s32.totalorder %s32, 1
      %p144 = por %p142, %p143
      %p145 = scmp.ne.s32.totalorder %s136, %s137
      %p146 = scmp.eq.s32.totalorder %s32, 0
      %p147 = por %p145, %p146
      %p148 = scmp.ne.s32.totalorder %s136, %s137
      %p149 = scmp.eq.s32.totalorder %s33, 1
      %p150 = por %p148, %p149
      %p152 = scmp.ne.s32.totalorder %s137, %s151
      %p153 = scmp.eq.s32.totalorder %s33, 0
      %p154 = por %p152, %p153
      %s156 = sadd.s32 %s155, 1
      %p159 = scmp.eq.s32.totalorder %s27, 1
      %p160 = scmp.ne.s32.totalorder %s155, %s157
      %p161 = scmp.eq.s32.totalorder %s27, 0
      %p162 = por %p160, %p161
      %p163 = scmp.ne.s32.totalorder %s155, %s157
      %p164 = scmp.eq.s32.totalorder %s32, 1
      %p165 = por %p163, %p164
      %p166 = scmp.ne.s32.totalorder %s157, %s158
      %p167 = scmp.eq.s32.totalorder %s32, 0
      %p168 = por %p166, %p167
      %p169 = scmp.ne.s32.totalorder %s157, %s158
      %p170 = scmp.eq.s32.totalorder %s33, 1
      %p171 = por %p169, %p170
      %p173 = scmp.ne.s32.totalorder %s158, %s172
      %p174 = scmp.eq.s32.totalorder %s33, 0
      %p175 = por %p173, %p174
      %s177 = sadd.s32 %s176, 1
      %p180 = scmp.eq.s32.totalorder %s27, 1
      %p181 = scmp.ne.s32.totalorder %s176, %s178
      %p182 = scmp.eq.s32.totalorder %s27, 0
      %p183 = por %p181, %p182
      %p184 = scmp.ne.s32.totalorder %s176, %s178
      %p185 = scmp.eq.s32.totalorder %s32, 1
      %p186 = por %p184, %p185
      %p187 = scmp.ne.s32.totalorder %s178, %s179
      %p188 = scmp.eq.s32.totalorder %s32, 0
      %p189 = por %p187, %p188
      %p190 = scmp.ne.s32.totalorder %s178, %s179
      %p191 = scmp.eq.s32.totalorder %s33, 1
      %p192 = por %p190, %p191
      %p194 = scmp.ne.s32.totalorder %s179, %s193
      %p195 = scmp.eq.s32.totalorder %s33, 0
      %p196 = por %p194, %p195
      %s198 = sadd.s32 %s197, 1
      %p201 = scmp.eq.s32.totalorder %s27, 1
      %p202 = scmp.ne.s32.totalorder %s197, %s199
      %p203 = scmp.eq.s32.totalorder %s27, 0
      %p204 = por %p202, %p203
      %p205 = scmp.ne.s32.totalorder %s197, %s199
      %p206 = scmp.eq.s32.totalorder %s32, 1
      %p207 = por %p205, %p206
      %p208 = scmp.ne.s32.totalorder %s199, %s200
      %p209 = scmp.eq.s32.totalorder %s32, 0
      %p210 = por %p208, %p209
      %p211 = scmp.ne.s32.totalorder %s199, %s200
      %p212 = scmp.eq.s32.totalorder %s33, 1
      %p213 = por %p211, %p212
      %p215 = scmp.ne.s32.totalorder %s200, %s214
      %p216 = scmp.eq.s32.totalorder %s33, 0
      %p217 = por %p215, %p216
      %s219 = sadd.s32 %s218, 1
      %p222 = scmp.eq.s32.totalorder %s27, 1
      %p223 = scmp.ne.s32.totalorder %s218, %s220
      %p224 = scmp.eq.s32.totalorder %s27, 0
      %p225 = por %p223, %p224
      %p226 = scmp.ne.s32.totalorder %s218, %s220
      %p227 = scmp.eq.s32.totalorder %s32, 1
      %p228 = por %p226, %p227
      %p229 = scmp.ne.s32.totalorder %s220, %s221
      %p230 = scmp.eq.s32.totalorder %s32, 0
      %p231 = por %p229, %p230
      %p232 = scmp.ne.s32.totalorder %s220, %s221
      %p233 = scmp.eq.s32.totalorder %s33, 1
      %p234 = por %p232, %p233
      %p236 = scmp.ne.s32.totalorder %s221, %s235
      %p237 = scmp.eq.s32.totalorder %s33, 0
      %p238 = por %p236, %p237
      %s240 = sadd.s32 %s239, 1
      %p243 = scmp.eq.s32.totalorder %s27, 1
      %p244 = scmp.ne.s32.totalorder %s239, %s241
      %p245 = scmp.eq.s32.totalorder %s27, 0
      %p246 = por %p244, %p245
      %p247 = scmp.ne.s32.totalorder %s239, %s241
      %p248 = scmp.eq.s32.totalorder %s32, 1
      %p249 = por %p247, %p248
      %p250 = scmp.ne.s32.totalorder %s241, %s242
      %p251 = scmp.eq.s32.totalorder %s32, 0
      %p252 = por %p250, %p251
      %p253 = scmp.ne.s32.totalorder %s241, %s242
      %p254 = scmp.eq.s32.totalorder %s33, 1
      %p255 = por %p253, %p254
      %p257 = scmp.ne.s32.totalorder %s242, %s256
      %p258 = scmp.eq.s32.totalorder %s33, 0
      %p259 = por %p257, %p258
      %s261 = sadd.s32 %s260, 1
      %p264 = scmp.eq.s32.totalorder %s27, 1
      %p265 = scmp.ne.s32.totalorder %s260, %s262
      %p266 = scmp.eq.s32.totalorder %s27, 0
      %p267 = por %p265, %p266
      %p268 = scmp.ne.s32.totalorder %s260, %s262
      %p269 = scmp.eq.s32.totalorder %s32, 1
      %p270 = por %p268, %p269
      %p271 = scmp.ne.s32.totalorder %s262, %s263
      %p272 = scmp.eq.s32.totalorder %s32, 0
      %p273 = por %p271, %p272
      %p274 = scmp.ne.s32.totalorder %s262, %s263
      %p275 = scmp.eq.s32.totalorder %s33, 1
      %p276 = por %p274, %p275
      %p278 = scmp.ne.s32.totalorder %s263, %s277
      %p279 = scmp.eq.s32.totalorder %s33, 0
      %p280 = por %p278, %p279
      %s282 = sadd.s32 %s281, 1
      %p285 = scmp.eq.s32.totalorder %s27, 1
      %p286 = scmp.ne.s32.totalorder %s281, %s283
      %p287 = scmp.eq.s32.totalorder %s27, 0
      %p288 = por %p286, %p287
      %p289 = scmp.ne.s32.totalorder %s281, %s283
      %p290 = scmp.eq.s32.totalorder %s32, 1
      %p291 = por %p289, %p290
      %p292 = scmp.ne.s32.totalorder %s283, %s284
      %p293 = scmp.eq.s32.totalorder %s32, 0
      %p294 = por %p292, %p293
      %p295 = scmp.ne.s32.totalorder %s283, %s284
      %p296 = scmp.eq.s32.totalorder %s33, 1
      %p297 = por %p295, %p296
      %p299 = scmp.ne.s32.totalorder %s284, %s298
      %p300 = scmp.eq.s32.totalorder %s33, 0
      %p301 = por %p299, %p300
      %s302 = ssub.s32 %s27, %s34
      %p303 = scmp.eq.s32.totalorder %s302, 0
      %s305 = sadd.s32 %s304, 1
      %s306 = scalar_select %p303, %s304, %s305
      %p309 = pneg %p303
      %p310 = scmp.eq.s32.totalorder %s27, 1
      %p311 = por %p309, %p310
      %p312 = scmp.ne.s32.totalorder %s304, %s307
      %p313 = scmp.eq.s32.totalorder %s27, 0
      %p314 = por %p312, %p313
      %p315 = scmp.ne.s32.totalorder %s304, %s307
      %p316 = scmp.eq.s32.totalorder %s32, 1
      %p317 = por %p315, %p316
      %p318 = scmp.ne.s32.totalorder %s307, %s308
      %p319 = scmp.eq.s32.totalorder %s32, 0
      %p320 = por %p318, %p319
      %p321 = scmp.ne.s32.totalorder %s307, %s308
      %p322 = scmp.eq.s32.totalorder %s33, 1
      %p323 = por %p321, %p322
      %p325 = scmp.ne.s32.totalorder %s308, %s324
      %p326 = scmp.eq.s32.totalorder %s33, 0
      %p327 = por %p325, %p326
      %p328 = scmp.le.s32.totalorder 1, %s27
      %p329 = scmp.lt.s32.totalorder %s27, 3
      %p330 = pnand %p328, %p329
      %p331 = pneg %p330
      // Predicated region
      $region9: #{tpu_custom_call.1} parent=5 // pred_check
        _
      $region10: #{tpu_custom_call.1} parent=5 // pred_check_branch
        %333 = sbr.rel (%p330) target = $region12
      $region11: #{tpu_custom_call.1} parent=5 // pred_region
        %s334 = ssub.s32 %s27, 1
        // Predicated region
        $region13: #{tpu_custom_call.1} parent=11 // pred_check
          %p335 = pneg %p126
        $region14: #{tpu_custom_call.1} parent=11 // pred_check_branch
          %337 = sbr.rel (%p335) target = $region16
        $region15: #{tpu_custom_call.1} parent=11 // pred_region
          _
        $region16: #{tpu_custom_call.1} parent=11 // pred_fallthru
          _
        // Predicated region
        $region17: #{tpu_custom_call.1} parent=11 // pred_check
          %p338 = pneg %p147
        $region18: #{tpu_custom_call.1} parent=11 // pred_check_branch
          %340 = sbr.rel (%p338) target = $region20
        $region19: #{tpu_custom_call.1} parent=11 // pred_region
          %s342 = ssub.s32 16, 16
          %343 = vsyncadd [#allocation6], %s342
          %s345 = sshll.u32 [#allocation5], 4
          %s346 = int_to_ptr.vmem [resolvable:$true] %s345
          %348 = dma.hbm_to_vmem [thread:$0]  %s4, 16, %s346, [#allocation6]
        $region20: #{tpu_custom_call.1} parent=11 // pred_fallthru
          _
        // Predicated region
        $region21: #{tpu_custom_call.1} parent=11 // pred_check
          %p349 = pneg %p168
        $region22: #{tpu_custom_call.1} parent=11 // pred_check_branch
          %351 = sbr.rel (%p349) target = $region24
        $region23: #{tpu_custom_call.1} parent=11 // pred_region
          %s353 = ssub.s32 512, 512
          %354 = vsyncadd [#allocation6], %s353
          %s355 = sshll.u32 [#allocation7], 4
          %s356 = int_to_ptr.vmem [resolvable:$true] %s355
          %361 = dma.hbm_to_vmem [thread:$0]  %s5, 512, %s356, [#allocation6], 128, 128, 8
        $region24: #{tpu_custom_call.1} parent=11 // pred_fallthru
          _
        // Predicated region
        $region25: #{tpu_custom_call.1} parent=11 // pred_check
          %p362 = pneg %p189
        $region26: #{tpu_custom_call.1} parent=11 // pred_check_branch
          %364 = sbr.rel (%p362) target = $region28
        $region27: #{tpu_custom_call.1} parent=11 // pred_region
          _
        $region28: #{tpu_custom_call.1} parent=11 // pred_fallthru
          _
        // Predicated region
        $region29: #{tpu_custom_call.1} parent=11 // pred_check
          %p365 = pneg %p210
        $region30: #{tpu_custom_call.1} parent=11 // pred_check_branch
          %367 = sbr.rel (%p365) target = $region32
        $region31: #{tpu_custom_call.1} parent=11 // pred_region
          %s369 = ssub.s32 16, 16
          %370 = vsyncadd [#allocation9], %s369
          %s372 = sshll.u32 [#allocation8], 4
          %s373 = int_to_ptr.vmem [resolvable:$true] %s372
          %375 = dma.hbm_to_vmem [thread:$0]  %s7, 16, %s373, [#allocation9]
        $region32: #{tpu_custom_call.1} parent=11 // pred_fallthru
          _
        // Predicated region
        $region33: #{tpu_custom_call.1} parent=11 // pred_check
          %p376 = pneg %p231
        $region34: #{tpu_custom_call.1} parent=11 // pred_check_branch
          %378 = sbr.rel (%p376) target = $region36
        $region35: #{tpu_custom_call.1} parent=11 // pred_region
          %s380 = ssub.s32 512, 512
          %381 = vsyncadd [#allocation9], %s380
          %s382 = sshll.u32 [#allocation10], 4
          %s383 = int_to_ptr.vmem [resolvable:$true] %s382
          %388 = dma.hbm_to_vmem [thread:$0]  %s8, 512, %s383, [#allocation9], 128, 128, 8
        $region36: #{tpu_custom_call.1} parent=11 // pred_fallthru
          _
        // Predicated region
        $region37: #{tpu_custom_call.1} parent=11 // pred_check
          %p389 = pneg %p252
        $region38: #{tpu_custom_call.1} parent=11 // pred_check_branch
          %391 = sbr.rel (%p389) target = $region40
        $region39: #{tpu_custom_call.1} parent=11 // pred_region
          %s393 = ssub.s32 16, 16
          %394 = vsyncadd [#allocation12], %s393
          %s396 = sshll.u32 [#allocation11], 4
          %s397 = int_to_ptr.vmem [resolvable:$true] %s396
          %399 = dma.hbm_to_vmem [thread:$0]  %s9, 16, %s397, [#allocation12]
        $region40: #{tpu_custom_call.1} parent=11 // pred_fallthru
          _
        // Predicated region
        $region41: #{tpu_custom_call.1} parent=11 // pred_check
          %p400 = pneg %p273
        $region42: #{tpu_custom_call.1} parent=11 // pred_check_branch
          %402 = sbr.rel (%p400) target = $region44
        $region43: #{tpu_custom_call.1} parent=11 // pred_region
          _
        $region44: #{tpu_custom_call.1} parent=11 // pred_fallthru
          _
        // Predicated region
        $region45: #{tpu_custom_call.1} parent=11 // pred_check
          %p403 = pneg %p294
        $region46: #{tpu_custom_call.1} parent=11 // pred_check_branch
          %405 = sbr.rel (%p403) target = $region48
        $region47: #{tpu_custom_call.1} parent=11 // pred_region
          _
        $region48: #{tpu_custom_call.1} parent=11 // pred_fallthru
          _
      $region12: #{tpu_custom_call.1} parent=5 // pred_fallthru
        _
      %p406 = scmp.lt.s32.totalorder %s27, 2
      // Predicated region
      $region49: #{tpu_custom_call.1} parent=5 // pred_check
        %p407 = pneg %p406
      $region50: #{tpu_custom_call.1} parent=5 // pred_check_branch
        %409 = sbr.rel (%p407) target = $region52
      $region51: #{tpu_custom_call.1} parent=5 // pred_region
        // Predicated region
        $region53: #{tpu_custom_call.1} parent=51 // pred_check
          %p410 = pneg %p47
        $region54: #{tpu_custom_call.1} parent=51 // pred_check_branch
          %412 = sbr.rel (%p410) target = $region56
        $region55: #{tpu_custom_call.1} parent=51 // pred_region
          %s413 = sand.u32 %s37, 1
          %s414 = scalar_lea.sflag [#allocation3], %s413
          %s415 = sand.u32 %s37, 1
          %s416 = smul.addr %s415, 8
          %s417 = scalar_lea.vmem [#allocation2], %s416
          %s419 = ssub.s32 128, 128
          %420 = vsyncadd %s414, %s419
          %s421 = smul.addr %s27, 128
          %s422 = scalar_lea.hbm %s0, %s421
          %s424 = sshll.u32 %s417, 4
          %s425 = int_to_ptr.vmem [resolvable:$true] %s424
          %427 = dma.hbm_to_vmem [thread:$0]  %s422, 128, %s425, %s414
        $region56: #{tpu_custom_call.1} parent=51 // pred_fallthru
          _
        // Predicated region
        $region57: #{tpu_custom_call.1} parent=51 // pred_check
          %p428 = pneg %p73
        $region58: #{tpu_custom_call.1} parent=51 // pred_check_branch
          %430 = sbr.rel (%p428) target = $region60
        $region59: #{tpu_custom_call.1} parent=51 // pred_region
          %p431 = scmp.lt.s32.totalorder %s27, 1
          %s432 = scalar_select %p431, %s27, 1
          %s433 = smul.addr %s432, 2
          %s434 = smul.addr %s433, 8
          %s435 = scalar_lea.vmem %s1, %s434
        $region60: #{tpu_custom_call.1} parent=51 // pred_fallthru
          _
        // Predicated region
        $region61: #{tpu_custom_call.1} parent=51 // pred_check
          %p436 = pneg %p99
        $region62: #{tpu_custom_call.1} parent=51 // pred_check_branch
          %438 = sbr.rel (%p436) target = $region64
        $region63: #{tpu_custom_call.1} parent=51 // pred_region
          %p439 = scmp.lt.s32.totalorder %s27, 1
          %s440 = scalar_select %p439, %s27, 1
          %s441 = scalar_lea.vmem %s2, %s440
        $region64: #{tpu_custom_call.1} parent=51 // pred_fallthru
          _
      $region52: #{tpu_custom_call.1} parent=5 // pred_fallthru
        _
      %p442 = scmp.le.s32.totalorder 1, %s27
      %p443 = scmp.lt.s32.totalorder %s27, 3
      %p444 = pnand %p442, %p443
      %p445 = pneg %p444
      // Predicated region
      $region65: #{tpu_custom_call.1} parent=5 // pred_check
        _
      $region66: #{tpu_custom_call.1} parent=5 // pred_check_branch
        %447 = sbr.rel (%p444) target = $region68
      $region67: #{tpu_custom_call.1} parent=5 // pred_region
        %s448 = ssub.s32 %s27, 1
        %s449 = sand.u32 %s40, 1
        %s450 = scalar_lea.sflag [#allocation3], %s449
        %s451 = sand.u32 %s40, 1
        %s452 = smul.addr %s451, 8
        %s453 = scalar_lea.vmem [#allocation2], %s452
        // Predicated region
        $region69: #{tpu_custom_call.1} parent=67 // pred_check
          %p454 = pneg %p53
        $region70: #{tpu_custom_call.1} parent=67 // pred_check_branch
          %456 = sbr.rel (%p454) target = $region72
        $region71: #{tpu_custom_call.1} parent=67 // pred_region
          %457 = dma.done %s450, 128
        $region72: #{tpu_custom_call.1} parent=67 // pred_fallthru
          _
        // Predicated region
        $region73: #{tpu_custom_call.1} parent=67 // pred_check
          %p458 = pneg %p147
        $region74: #{tpu_custom_call.1} parent=67 // pred_check_branch
          %460 = sbr.rel (%p458) target = $region76
        $region75: #{tpu_custom_call.1} parent=67 // pred_region
          %461 = dma.done [#allocation6], 16
        $region76: #{tpu_custom_call.1} parent=67 // pred_fallthru
          _
        // Predicated region
        $region77: #{tpu_custom_call.1} parent=67 // pred_check
          %p462 = pneg %p168
        $region78: #{tpu_custom_call.1} parent=67 // pred_check_branch
          %464 = sbr.rel (%p462) target = $region80
        $region79: #{tpu_custom_call.1} parent=67 // pred_region
          %465 = dma.done [#allocation6], 512
        $region80: #{tpu_custom_call.1} parent=67 // pred_fallthru
          _
        // Predicated region
        $region81: #{tpu_custom_call.1} parent=67 // pred_check
          %p466 = pneg %p210
        $region82: #{tpu_custom_call.1} parent=67 // pred_check_branch
          %468 = sbr.rel (%p466) target = $region84
        $region83: #{tpu_custom_call.1} parent=67 // pred_region
          %469 = dma.done [#allocation9], 16
        $region84: #{tpu_custom_call.1} parent=67 // pred_fallthru
          _
        // Predicated region
        $region85: #{tpu_custom_call.1} parent=67 // pred_check
          %p470 = pneg %p231
        $region86: #{tpu_custom_call.1} parent=67 // pred_check_branch
          %472 = sbr.rel (%p470) target = $region88
        $region87: #{tpu_custom_call.1} parent=67 // pred_region
          %473 = dma.done [#allocation9], 512
        $region88: #{tpu_custom_call.1} parent=67 // pred_fallthru
          _
        // Predicated region
        $region89: #{tpu_custom_call.1} parent=67 // pred_check
          %p474 = pneg %p252
        $region90: #{tpu_custom_call.1} parent=67 // pred_check_branch
          %476 = sbr.rel (%p474) target = $region92
        $region91: #{tpu_custom_call.1} parent=67 // pred_region
          %477 = dma.done [#allocation12], 16
        $region92: #{tpu_custom_call.1} parent=67 // pred_fallthru
          _
        %s478 = sand.u32 %s40, 1
        %s479 = scalar_lea.sflag [#allocation3], %s478
        %s480 = sand.u32 %s40, 1
        %s481 = smul.addr %s480, 8
        %s482 = scalar_lea.vmem [#allocation2], %s481
        %p483 = pneg %p53
        %p484 = pneg %p50
        %p485 = scmp.lt.s32.totalorder %s32, 1
        %s486 = scalar_select %p485, %s32, 1
        %s487 = smul.addr %s486, 2
        %s488 = smul.addr %s487, 8
        %s489 = scalar_lea.vmem %s1, %s488
        %p490 = pneg %p79
        %p491 = pneg %p76
        %p492 = scmp.lt.s32.totalorder %s32, 1
        %s493 = scalar_select %p492, %s32, 1
        %s494 = scalar_lea.vmem %s2, %s493
        %p495 = pneg %p105
        %p496 = pneg %p102
        %p497 = pneg %p126
        %p498 = pneg %p123
        %p499 = pneg %p147
        %p500 = pneg %p144
        %p501 = pneg %p168
        %p502 = pneg %p165
        %p503 = pneg %p189
        %p504 = pneg %p186
        %p505 = pneg %p210
        %p506 = pneg %p207
        %p507 = pneg %p231
        %p508 = pneg %p228
        %p509 = pneg %p252
        %p510 = pneg %p249
        %p511 = pneg %p273
        %p512 = pneg %p270
        %p513 = pneg %p294
        %p514 = pneg %p291
        %p515 = pneg %p320
        %p516 = pneg %p317
        %s517 = sand.u32 %s307, 1
        %s518 = scalar_lea.sflag [#allocation4], %s517
        %s519 = sand.u32 %s307, 1
        %s520 = smul.addr %s519, 8
        %s521 = scalar_lea.vmem [#allocation13], %s520
        %p522 = scmp.lt.s32.totalorder %s32, 1
        %s523 = scalar_select %p522, %s32, 1
        %s524 = smul.addr %s523, 2
        %s525 = smul.addr %s524, 8
        %s526 = scalar_lea.vmem %s1, %s525
        %p527 = scmp.lt.s32.totalorder %s32, 1
        %s528 = scalar_select %p527, %s32, 1
        %s529 = scalar_lea.vmem %s2, %s528
        %v530 = vld [vmem:[%s453] sm:$0xff]
        %v531 = vld [vmem:[%s526] sm:$0xff]
        %v532 = vld [vmem:[%s526 + $0x8] sm:$0xff]
        %vm533 = vcmask 130048
        %v535 = vsel %vm533, %v530, 0
        %537 = vmatprep.subr.mxu0 0.0
        %538 = vmatpush1.msra.mxu0 %v531
        %539 = vmatprep.subr.mxu0 0.0
        %540 = vmatpush1.msra.mxu0 %v532
        %541 = vmatprep.subr.mxu0 0.0
        %542 = vmatpush1.msra.mxu0 0.0
        %543 = vmatprep.subr.mxu0 0.0
        %544 = vmatpush1.msra.mxu0 0.0
        %545 = vmatprep.subr.mxu0 0.0
        %546 = vmatpush1.msra.mxu0 0.0
        %547 = vmatprep.subr.mxu0 0.0
        %548 = vmatpush1.msra.mxu0 0.0
        %549 = vmatprep.subr.mxu0 0.0
        %550 = vmatpush1.msra.mxu0 0.0
        %551 = vmatprep.subr.mxu0 0.0
        %552 = vmatpush1.msra.mxu0 0.0
        %553 = vmatprep.subr.mxu0 0.0
        %554 = vmatpush1.msra.mxu0 0.0
        %555 = vmatprep.subr.mxu0 0.0
        %556 = vmatpush1.msra.mxu0 0.0
        %557 = vmatprep.subr.mxu0 0.0
        %558 = vmatpush1.msra.mxu0 0.0
        %559 = vmatprep.subr.mxu0 0.0
        %560 = vmatpush1.msra.mxu0 0.0
        %561 = vmatprep.subr.mxu0 0.0
        %562 = vmatpush1.msra.mxu0 0.0
        %563 = vmatprep.subr.mxu0 0.0
        %564 = vmatpush1.msra.mxu0 0.0
        %565 = vmatprep.subr.mxu0 0.0
        %566 = vmatpush1.msra.mxu0 0.0
        %567 = vmatprep.subr.mxu0 0.0
        %568 = vmatpush1.msra.mxu0 0.0
        %569 = vmatprep.subr.mxu0 0.0
        %570 = vmatpush1.msra.mxu0 0.0
        %571 = vmatprep.subr.mxu0 0.0
        %572 = vmatpush1.msra.mxu0 0.0
        %573 = vmatprep.subr.mxu0 0.0
        %574 = vmatpush1.msra.mxu0 0.0
        %575 = vmatprep.subr.mxu0 0.0
        %576 = vmatpush1.msra.mxu0 0.0
        %577 = vmatprep.subr.mxu0 0.0
        %578 = vmatpush1.msra.mxu0 0.0
        %579 = vmatprep.subr.mxu0 0.0
        %580 = vmatpush1.msra.mxu0 0.0
        %581 = vmatprep.subr.mxu0 0.0
        %582 = vmatpush1.msra.mxu0 0.0
        %583 = vmatprep.subr.mxu0 0.0
        %584 = vmatpush1.msra.mxu0 0.0
        %585 = vmatprep.subr.mxu0 0.0
        %586 = vmatpush1.msra.mxu0 0.0
        %587 = vmatprep.subr.mxu0 0.0
        %588 = vmatpush1.msra.mxu0 0.0
        %589 = vmatprep.subr.mxu0 0.0
        %590 = vmatpush1.msra.mxu0 0.0
        %591 = vmatprep.subr.mxu0 0.0
        %592 = vmatpush1.msra.mxu0 0.0
        %593 = vmatprep.subr.mxu0 0.0
        %594 = vmatpush1.msra.mxu0 0.0
        %595 = vmatprep.subr.mxu0 0.0
        %596 = vmatpush1.msra.mxu0 0.0
        %597 = vmatprep.subr.mxu0 0.0
        %598 = vmatpush1.msra.mxu0 0.0
        %599 = vmatprep.subr.mxu0 0.0
        %600 = vmatpush1.msra.mxu0 0.0
        %601 = vmatprep.mubr.f32.mxu0 0.0
        %602 = vmatmul.mubr.f32.gmra.mrb[0].mxu0 %v535
        %v603 = vpop.f32.mrb[0].mxu0
        %v604 = vadd.f32 0.0, %v603
        %v605 = vpop.f32.mrb[0].mxu0
        %606 = vdwg.mxu0
        %v607 = vld [vmem:[%s3] sm:$0xff]
        %v608 = vld [vmem:[%s3 + $0x8] sm:$0xff]
        %v609 = vld [vmem:[%s3 + $0x10] sm:$0xff]
        %v610 = vld [vmem:[%s3 + $0x18] sm:$0xff]
        %v611 = vld [vmem:[%s3 + $0x20] sm:$0xff]
        %v612 = vld [vmem:[%s3 + $0x28] sm:$0xff]
        %v613 = vld [vmem:[%s3 + $0x30] sm:$0xff]
        %v614 = vld [vmem:[%s3 + $0x38] sm:$0xff]
        %vm615 = vcmask 523264
        %v617 = vsel %vm615, %v604, 0
        %619 = vmatprep.subr.mxu0 0.0
        %620 = vmatpush1.msra.mxu0 %v607
        %621 = vmatprep.subr.mxu0 0.0
        %622 = vmatpush1.msra.mxu0 %v608
        %623 = vmatprep.subr.mxu0 0.0
        %624 = vmatpush1.msra.mxu0 %v609
        %625 = vmatprep.subr.mxu0 0.0
        %626 = vmatpush1.msra.mxu0 %v610
        %627 = vmatprep.subr.mxu0 0.0
        %628 = vmatpush1.msra.mxu0 %v611
        %629 = vmatprep.subr.mxu0 0.0
        %630 = vmatpush1.msra.mxu0 %v612
        %631 = vmatprep.subr.mxu0 0.0
        %632 = vmatpush1.msra.mxu0 %v613
        %633 = vmatprep.subr.mxu0 0.0
        %634 = vmatpush1.msra.mxu0 %v614
        %635 = vmatprep.subr.mxu0 0.0
        %636 = vmatpush1.msra.mxu0 0.0
        %637 = vmatprep.subr.mxu0 0.0
        %638 = vmatpush1.msra.mxu0 0.0
        %639 = vmatprep.subr.mxu0 0.0
        %640 = vmatpush1.msra.mxu0 0.0
        %641 = vmatprep.subr.mxu0 0.0
        %642 = vmatpush1.msra.mxu0 0.0
        %643 = vmatprep.subr.mxu0 0.0
        %644 = vmatpush1.msra.mxu0 0.0
        %645 = vmatprep.subr.mxu0 0.0
        %646 = vmatpush1.msra.mxu0 0.0
        %647 = vmatprep.subr.mxu0 0.0
        %648 = vmatpush1.msra.mxu0 0.0
        %649 = vmatprep.subr.mxu0 0.0
        %650 = vmatpush1.msra.mxu0 0.0
        %651 = vmatprep.subr.mxu0 0.0
        %652 = vmatpush1.msra.mxu0 0.0
        %653 = vmatprep.subr.mxu0 0.0
        %654 = vmatpush1.msra.mxu0 0.0
        %655 = vmatprep.subr.mxu0 0.0
        %656 = vmatpush1.msra.mxu0 0.0
        %657 = vmatprep.subr.mxu0 0.0
        %658 = vmatpush1.msra.mxu0 0.0
        %659 = vmatprep.subr.mxu0 0.0
        %660 = vmatpush1.msra.mxu0 0.0
        %661 = vmatprep.subr.mxu0 0.0
        %662 = vmatpush1.msra.mxu0 0.0
        %663 = vmatprep.subr.mxu0 0.0
        %664 = vmatpush1.msra.mxu0 0.0
        %665 = vmatprep.subr.mxu0 0.0
        %666 = vmatpush1.msra.mxu0 0.0
        %667 = vmatprep.subr.mxu0 0.0
        %668 = vmatpush1.msra.mxu0 0.0
        %669 = vmatprep.subr.mxu0 0.0
        %670 = vmatpush1.msra.mxu0 0.0
        %671 = vmatprep.subr.mxu0 0.0
        %672 = vmatpush1.msra.mxu0 0.0
        %673 = vmatprep.subr.mxu0 0.0
        %674 = vmatpush1.msra.mxu0 0.0
        %675 = vmatprep.subr.mxu0 0.0
        %676 = vmatpush1.msra.mxu0 0.0
        %677 = vmatprep.subr.mxu0 0.0
        %678 = vmatpush1.msra.mxu0 0.0
        %679 = vmatprep.subr.mxu0 0.0
        %680 = vmatpush1.msra.mxu0 0.0
        %681 = vmatprep.subr.mxu0 0.0
        %682 = vmatpush1.msra.mxu0 0.0
        %683 = vmatprep.mubr.f32.mxu0 0.0
        %684 = vmatmul.mubr.f32.gmra.mrb[0].mxu0 %v617
        %v685 = vpop.f32.mrb[0].mxu0
        %v686 = vadd.f32 0.0, %v685
        %v687 = vpop.f32.mrb[0].mxu0
        %688 = vdwg.mxu0
        %v689 = vtanh.pop %v686
        %v690 = vld [vmem:[#allocation7] sm:$0xff]
        %v691 = vld [vmem:[#allocation7 + $0x8] sm:$0xff]
        %v692 = vld [vmem:[#allocation7 + $0x10] sm:$0xff]
        %v693 = vld [vmem:[#allocation7 + $0x18] sm:$0xff]
        %vm694 = vcmask 261120
        %v696 = vsel %vm694, %v689, 0
        %698 = vmatprep.subr.mxu0 0.0
        %699 = vmatpush1.msra.mxu0 %v690
        %700 = vmatprep.subr.mxu0 0.0
        %701 = vmatpush1.msra.mxu0 %v691
        %702 = vmatprep.subr.mxu0 0.0
        %703 = vmatpush1.msra.mxu0 %v692
        %704 = vmatprep.subr.mxu0 0.0
        %705 = vmatpush1.msra.mxu0 %v693
        %706 = vmatprep.subr.mxu0 0.0
        %707 = vmatpush1.msra.mxu0 0.0
        %708 = vmatprep.subr.mxu0 0.0
        %709 = vmatpush1.msra.mxu0 0.0
        %710 = vmatprep.subr.mxu0 0.0
        %711 = vmatpush1.msra.mxu0 0.0
        %712 = vmatprep.subr.mxu0 0.0
        %713 = vmatpush1.msra.mxu0 0.0
        %714 = vmatprep.subr.mxu0 0.0
        %715 = vmatpush1.msra.mxu0 0.0
        %716 = vmatprep.subr.mxu0 0.0
        %717 = vmatpush1.msra.mxu0 0.0
        %718 = vmatprep.subr.mxu0 0.0
        %719 = vmatpush1.msra.mxu0 0.0
        %720 = vmatprep.subr.mxu0 0.0
        %721 = vmatpush1.msra.mxu0 0.0
        %722 = vmatprep.subr.mxu0 0.0
        %723 = vmatpush1.msra.mxu0 0.0
        %724 = vmatprep.subr.mxu0 0.0
        %725 = vmatpush1.msra.mxu0 0.0
        %726 = vmatprep.subr.mxu0 0.0
        %727 = vmatpush1.msra.mxu0 0.0
        %728 = vmatprep.subr.mxu0 0.0
        %729 = vmatpush1.msra.mxu0 0.0
        %730 = vmatprep.subr.mxu0 0.0
        %731 = vmatpush1.msra.mxu0 0.0
        %732 = vmatprep.subr.mxu0 0.0
        %733 = vmatpush1.msra.mxu0 0.0
        %734 = vmatprep.subr.mxu0 0.0
        %735 = vmatpush1.msra.mxu0 0.0
        %736 = vmatprep.subr.mxu0 0.0
        %737 = vmatpush1.msra.mxu0 0.0
        %738 = vmatprep.subr.mxu0 0.0
        %739 = vmatpush1.msra.mxu0 0.0
        %740 = vmatprep.subr.mxu0 0.0
        %741 = vmatpush1.msra.mxu0 0.0
        %742 = vmatprep.subr.mxu0 0.0
        %743 = vmatpush1.msra.mxu0 0.0
        %744 = vmatprep.subr.mxu0 0.0
        %745 = vmatpush1.msra.mxu0 0.0
        %746 = vmatprep.subr.mxu0 0.0
        %747 = vmatpush1.msra.mxu0 0.0
        %748 = vmatprep.subr.mxu0 0.0
        %749 = vmatpush1.msra.mxu0 0.0
        %750 = vmatprep.subr.mxu0 0.0
        %751 = vmatpush1.msra.mxu0 0.0
        %752 = vmatprep.subr.mxu0 0.0
        %753 = vmatpush1.msra.mxu0 0.0
        %754 = vmatprep.subr.mxu0 0.0
        %755 = vmatpush1.msra.mxu0 0.0
        %756 = vmatprep.subr.mxu0 0.0
        %757 = vmatpush1.msra.mxu0 0.0
        %758 = vmatprep.subr.mxu0 0.0
        %759 = vmatpush1.msra.mxu0 0.0
        %760 = vmatprep.subr.mxu0 0.0
        %761 = vmatpush1.msra.mxu0 0.0
        %762 = vmatprep.mubr.f32.mxu0 0.0
        %763 = vmatmul.mubr.f32.gmra.mrb[0].mxu0 %v696
        %v764 = vpop.f32.mrb[0].mxu0
        %v765 = vadd.f32 0.0, %v764
        %v766 = vpop.f32.mrb[0].mxu0
        %767 = vdwg.mxu0
        %768 = vrot.lane.b32.xlu0 %v689, 96
        %v769 = vpop.permute.xlu0 %768
        %v771 = vsel %vm694, %v765, 0
        %v773 = vsel %vm694, %v769, 0
        %775 = vmatprep.subr.mxu0 0.0
        %776 = vmatpush1.xpose.msra.mxu0 %v773
        %777 = vmatprep.subr.mxu0 0.0
        %778 = vmatpush1.xpose.msra.mxu0 0.0
        %779 = vmatprep.subr.mxu0 0.0
        %780 = vmatpush1.xpose.msra.mxu0 0.0
        %781 = vmatprep.subr.mxu0 0.0
        %782 = vmatpush1.xpose.msra.mxu0 0.0
        %783 = vmatprep.subr.mxu0 0.0
        %784 = vmatpush1.xpose.msra.mxu0 0.0
        %785 = vmatprep.subr.mxu0 0.0
        %786 = vmatpush1.xpose.msra.mxu0 0.0
        %787 = vmatprep.subr.mxu0 0.0
        %788 = vmatpush1.xpose.msra.mxu0 0.0
        %789 = vmatprep.subr.mxu0 0.0
        %790 = vmatpush1.xpose.msra.mxu0 0.0
        %791 = vmatprep.subr.mxu0 0.0
        %792 = vmatpush1.xpose.msra.mxu0 0.0
        %793 = vmatprep.subr.mxu0 0.0
        %794 = vmatpush1.xpose.msra.mxu0 0.0
        %795 = vmatprep.subr.mxu0 0.0
        %796 = vmatpush1.xpose.msra.mxu0 0.0
        %797 = vmatprep.subr.mxu0 0.0
        %798 = vmatpush1.xpose.msra.mxu0 0.0
        %799 = vmatprep.subr.mxu0 0.0
        %800 = vmatpush1.xpose.msra.mxu0 0.0
        %801 = vmatprep.subr.mxu0 0.0
        %802 = vmatpush1.xpose.msra.mxu0 0.0
        %803 = vmatprep.subr.mxu0 0.0
        %804 = vmatpush1.xpose.msra.mxu0 0.0
        %805 = vmatprep.subr.mxu0 0.0
        %806 = vmatpush1.xpose.msra.mxu0 0.0
        %807 = vmatprep.subr.mxu0 0.0
        %808 = vmatpush1.xpose.msra.mxu0 0.0
        %809 = vmatprep.subr.mxu0 0.0
        %810 = vmatpush1.xpose.msra.mxu0 0.0
        %811 = vmatprep.subr.mxu0 0.0
        %812 = vmatpush1.xpose.msra.mxu0 0.0
        %813 = vmatprep.subr.mxu0 0.0
        %814 = vmatpush1.xpose.msra.mxu0 0.0
        %815 = vmatprep.subr.mxu0 0.0
        %816 = vmatpush1.xpose.msra.mxu0 0.0
        %817 = vmatprep.subr.mxu0 0.0
        %818 = vmatpush1.xpose.msra.mxu0 0.0
        %819 = vmatprep.subr.mxu0 0.0
        %820 = vmatpush1.xpose.msra.mxu0 0.0
        %821 = vmatprep.subr.mxu0 0.0
        %822 = vmatpush1.xpose.msra.mxu0 0.0
        %823 = vmatprep.subr.mxu0 0.0
        %824 = vmatpush1.xpose.msra.mxu0 0.0
        %825 = vmatprep.subr.mxu0 0.0
        %826 = vmatpush1.xpose.msra.mxu0 0.0
        %827 = vmatprep.subr.mxu0 0.0
        %828 = vmatpush1.xpose.msra.mxu0 0.0
        %829 = vmatprep.subr.mxu0 0.0
        %830 = vmatpush1.xpose.msra.mxu0 0.0
        %831 = vmatprep.subr.mxu0 0.0
        %832 = vmatpush1.xpose.msra.mxu0 0.0
        %833 = vmatprep.subr.mxu0 0.0
        %834 = vmatpush1.xpose.msra.mxu0 0.0
        %835 = vmatprep.subr.mxu0 0.0
        %836 = vmatpush1.xpose.msra.mxu0 0.0
        %837 = vmatprep.subr.mxu0 0.0
        %838 = vmatpush1.xpose.msra.mxu0 0.0
        %839 = vmatprep.mubr.f32.mxu0 0.0
        %840 = vmatmul.mubr.f32.gmra.mrb[0].mxu0 %v771
        %v841 = vpop.f32.mrb[0].mxu0
        %v842 = vadd.f32 0.0, %v841
        %v843 = vpop.f32.mrb[0].mxu0
        %844 = vdwg.mxu0
        %v845 = vlaneseq
        %v846 = vshrl.u32 %v845, 7
        %v847 = vlaneseq
        %v848 = vand.u32 %v847, 127
        %vm849 = vcmp.eq.s32.totalorder %v846, %v848
        %v850 = vmul.f32 %v842, 1.442695
        %v851 = vpow.pop %v850
        %v852 = vsel %vm849, 0.0, %v851
        %vm853 = vcmask 64512
        %v854 = vsel %vm853, %v852, 0.0
        %v855 = vrot.slane %v854, 4
        %v856 = vadd.f32 %v854, %v855
        %v857 = vrot.slane %v856, 2
        %v858 = vadd.f32 %v856, %v857
        %v859 = vrot.slane %v858, 1
        %v860 = vadd.f32 %v858, %v859
        %v861 = vsub.f32 0.0, %v852
        %v862 = vsel %vm849, %v860, %v861
        %v863 = vld [vmem:[#allocation5] sm:$0x1]
        %v865 = vsel %vm615, %v863, 0
        %867 = vmatprep.subr.mxu0 0.0
        %868 = vmatpush1.xpose.msra.mxu0 %v617
        %869 = vmatprep.subr.mxu0 0.0
        %870 = vmatpush1.xpose.msra.mxu0 0.0
        %871 = vmatprep.subr.mxu0 0.0
        %872 = vmatpush1.xpose.msra.mxu0 0.0
        %873 = vmatprep.subr.mxu0 0.0
        %874 = vmatpush1.xpose.msra.mxu0 0.0
        %875 = vmatprep.subr.mxu0 0.0
        %876 = vmatpush1.xpose.msra.mxu0 0.0
        %877 = vmatprep.subr.mxu0 0.0
        %878 = vmatpush1.xpose.msra.mxu0 0.0
        %879 = vmatprep.subr.mxu0 0.0
        %880 = vmatpush1.xpose.msra.mxu0 0.0
        %881 = vmatprep.subr.mxu0 0.0
        %882 = vmatpush1.xpose.msra.mxu0 0.0
        %883 = vmatprep.subr.mxu0 0.0
        %884 = vmatpush1.xpose.msra.mxu0 0.0
        %885 = vmatprep.subr.mxu0 0.0
        %886 = vmatpush1.xpose.msra.mxu0 0.0
        %887 = vmatprep.subr.mxu0 0.0
        %888 = vmatpush1.xpose.msra.mxu0 0.0
        %889 = vmatprep.subr.mxu0 0.0
        %890 = vmatpush1.xpose.msra.mxu0 0.0
        %891 = vmatprep.subr.mxu0 0.0
        %892 = vmatpush1.xpose.msra.mxu0 0.0
        %893 = vmatprep.subr.mxu0 0.0
        %894 = vmatpush1.xpose.msra.mxu0 0.0
        %895 = vmatprep.subr.mxu0 0.0
        %896 = vmatpush1.xpose.msra.mxu0 0.0
        %897 = vmatprep.subr.mxu0 0.0
        %898 = vmatpush1.xpose.msra.mxu0 0.0
        %899 = vmatprep.subr.mxu0 0.0
        %900 = vmatpush1.xpose.msra.mxu0 0.0
        %901 = vmatprep.subr.mxu0 0.0
        %902 = vmatpush1.xpose.msra.mxu0 0.0
        %903 = vmatprep.subr.mxu0 0.0
        %904 = vmatpush1.xpose.msra.mxu0 0.0
        %905 = vmatprep.subr.mxu0 0.0
        %906 = vmatpush1.xpose.msra.mxu0 0.0
        %907 = vmatprep.subr.mxu0 0.0
        %908 = vmatpush1.xpose.msra.mxu0 0.0
        %909 = vmatprep.subr.mxu0 0.0
        %910 = vmatpush1.xpose.msra.mxu0 0.0
        %911 = vmatprep.subr.mxu0 0.0
        %912 = vmatpush1.xpose.msra.mxu0 0.0
        %913 = vmatprep.subr.mxu0 0.0
        %914 = vmatpush1.xpose.msra.mxu0 0.0
        %915 = vmatprep.subr.mxu0 0.0
        %916 = vmatpush1.xpose.msra.mxu0 0.0
        %917 = vmatprep.subr.mxu0 0.0
        %918 = vmatpush1.xpose.msra.mxu0 0.0
        %919 = vmatprep.subr.mxu0 0.0
        %920 = vmatpush1.xpose.msra.mxu0 0.0
        %921 = vmatprep.subr.mxu0 0.0
        %922 = vmatpush1.xpose.msra.mxu0 0.0
        %923 = vmatprep.subr.mxu0 0.0
        %924 = vmatpush1.xpose.msra.mxu0 0.0
        %925 = vmatprep.subr.mxu0 0.0
        %926 = vmatpush1.xpose.msra.mxu0 0.0
        %927 = vmatprep.subr.mxu0 0.0
        %928 = vmatpush1.xpose.msra.mxu0 0.0
        %929 = vmatprep.subr.mxu0 0.0
        %930 = vmatpush1.xpose.msra.mxu0 0.0
        %931 = vmatprep.mubr.f32.mxu0 0.0
        %932 = vmatmul.mubr.f32.gmra.mrb[0].mxu0 %v865
        %v933 = vpop.f32.mrb[0].mxu0
        %v934 = vadd.f32 0.0, %v933
        %v935 = vpop.f32.mrb[0].mxu0
        %936 = vdwg.mxu0
        %vm937 = vcmp.eq.s32.totalorder %v846, 1
        %v938 = vlaneseq
        %v939 = vshrl.u32 %v938, 7
        %v940 = vsub.s32 0, %v939
        %v941 = vrot.slane %v934, %v940
        %v942 = vsel %vm937, %v941, %v862
        %v943 = vsel %vm849, 1, 0
        %v944 = vcvt.s32.f32 %v943
        %946 = vrot.lane.b32.xlu0 %v944, 8
        %v947 = vpop.permute.xlu0 %946
        %v949 = vsel %vm853, %v942, %v947
        %v950 = vsub.s32 7, %v846
        %v951 = vcvt.s32.f32 %v950
        %v952 = vmul.f32 %v951, 9.536743e-07
        %v953 = vadd.f32 %v952, 1.0
        %vm954 = vcmp.ge.s32.totalorder %v846, 0
        %v955 = vand.u32 2147483647, %v949
        %v956 = vmul.f32 %v955, %v953
        %v957 = vsel %vm954, %v956, -1.0
        %vm958 = vcmask 7168
        %v959 = vsel %vm958, %v957, -inf
        %v960 = vrot.slane %v959, 4
        %v961 = vmax.f32 %v959, %v960
        %v962 = vrot.slane %v961, 2
        %v963 = vmax.f32 %v961, %v962
        %v964 = vrot.slane %v963, 1
        %v965 = vmax.f32 %v963, %v964
        %vm966 = vcmp.ge.f32.partialorder %v957, %v965
        %vm967 = vmand %vm966, %vm954
        %vm968 = vcmp.eq.s32.totalorder %v846, 0
        %v969 = vsel %vm967, 1, 0
        %970 = vset.pattern.permute.xlu0 0
        %971 = vperm.xlu0 %970, %v969
        %v972 = vpop.permute.xlu0 %971
        %vm973 = vcmp.eq.s32.totalorder %v972, 1
        %v974 = vsel %vm973, %v949, 0.0
        %v975 = vsel %vm533, %v974, 0.0
        %v976 = vrot.slane %v975, 4
        %v977 = vadd.f32 %v975, %v976
        %v978 = vrot.slane %v977, 2
        %v979 = vadd.f32 %v977, %v978
        %v980 = vrot.slane %v979, 1
        %v981 = vadd.f32 %v979, %v980
        %v982 = vsel %vm968, 1, 0
        %vm983 = vcmp.eq.s32.totalorder %v982, 1
        %v984 = vsel %vm983, %v981, %v949
        %vm985 = vmxor %vm968, 1
        %vm986 = vmand %vm967, %vm985
        %v987 = vsel %vm986, 1, 0
        %988 = vset.pattern.permute.xlu0 0
        %989 = vperm.xlu0 %988, %v987
        %v990 = vpop.permute.xlu0 %989
        %vm991 = vcmp.eq.s32.totalorder %v990, 1
        %v992 = vlaneseq
        %v993 = vshrl.u32 %v992, 7
        %v994 = vsub.s32 0, %v993
        %v995 = vrot.slane %v949, %v994
        %v996 = vsel %vm991, %v995, %v984
        %v997 = vrcp.pop %v981
        %999 = vset.pattern.permute.xlu0 0
        %1000 = vperm.xlu0 %999, %v997
        %v1001 = vpop.permute.xlu0 %1000
        %v1003 = vmul.f32 %v981, %v1001
        %1005 = vset.pattern.permute.xlu0 0
        %1006 = vperm.xlu0 %1005, %v996
        %v1007 = vpop.permute.xlu0 %1006
        %v1009 = vmul.f32 %v1007, %v1003
        %v1010 = vsub.f32 %v996, %v1009
        %v1011 = vsel %vm983, %v1003, %v1010
        %vm1012 = vcmp.ge.s32.totalorder %v846, 1
        %v1013 = vand.u32 2147483647, %v1011
        %v1014 = vmul.f32 %v1013, %v953
        %v1015 = vsel %vm1012, %v1014, -1.0
        %vm1016 = vcmask 15368
        %v1017 = vsel %vm1016, %v1015, -inf
        %v1018 = vrot.slane %v1017, 4
        %v1019 = vmax.f32 %v1017, %v1018
        %v1020 = vrot.slane %v1019, 2
        %v1021 = vmax.f32 %v1019, %v1020
        %v1022 = vrot.slane %v1021, 1
        %v1023 = vmax.f32 %v1021, %v1022
        %vm1024 = vcmp.ge.f32.partialorder %v1015, %v1023
        %vm1025 = vmand %vm1024, %vm1012
        %v1026 = vsel %vm1025, 1, 0
        %1027 = vset.pattern.permute.xlu0 1
        %1028 = vperm.xlu0 %1027, %v1026
        %v1029 = vpop.permute.xlu0 %1028
        %vm1030 = vcmp.eq.s32.totalorder %v1029, 1
        %v1031 = vsel %vm1030, %v1011, 0.0
        %v1032 = vsel %vm533, %v1031, 0.0
        %v1033 = vrot.slane %v1032, 4
        %v1034 = vadd.f32 %v1032, %v1033
        %v1035 = vrot.slane %v1034, 2
        %v1036 = vadd.f32 %v1034, %v1035
        %v1037 = vrot.slane %v1036, 1
        %v1038 = vadd.f32 %v1036, %v1037
        %v1039 = vsel %vm937, 1, 0
        %vm1040 = vcmp.eq.s32.totalorder %v1039, 1
        %v1041 = vsel %vm1040, %v1038, %v1011
        %vm1042 = vmxor %vm937, 1
        %vm1043 = vmand %vm1025, %vm1042
        %v1044 = vsel %vm1043, 1, 0
        %1045 = vset.pattern.permute.xlu0 1
        %1046 = vperm.xlu0 %1045, %v1044
        %v1047 = vpop.permute.xlu0 %1046
        %vm1048 = vcmp.eq.s32.totalorder %v1047, 1
        %v1049 = vlaneseq
        %v1050 = vshrl.u32 %v1049, 7
        %v1051 = vsub.s32 1, %v1050
        %v1052 = vrot.slane %v1011, %v1051
        %v1053 = vsel %vm1048, %v1052, %v1041
        %v1054 = vrcp.pop %v1038
        %1056 = vset.pattern.permute.xlu0 1
        %1057 = vperm.xlu0 %1056, %v1054
        %v1058 = vpop.permute.xlu0 %1057
        %v1060 = vmul.f32 %v1038, %v1058
        %1062 = vset.pattern.permute.xlu0 1
        %1063 = vperm.xlu0 %1062, %v1053
        %v1064 = vpop.permute.xlu0 %1063
        %v1066 = vmul.f32 %v1064, %v1060
        %v1067 = vsub.f32 %v1053, %v1066
        %v1068 = vsel %vm1040, %v1060, %v1067
        %vm1069 = vcmp.ge.s32.totalorder %v846, 2
        %v1070 = vand.u32 2147483647, %v1068
        %v1071 = vmul.f32 %v1070, %v953
        %v1072 = vsel %vm1069, %v1071, -1.0
        %vm1073 = vcmask 23568
        %v1074 = vsel %vm1073, %v1072, -inf
        %v1075 = vrot.slane %v1074, 4
        %v1076 = vmax.f32 %v1074, %v1075
        %v1077 = vrot.slane %v1076, 2
        %v1078 = vmax.f32 %v1076, %v1077
        %v1079 = vrot.slane %v1078, 1
        %v1080 = vmax.f32 %v1078, %v1079
        %vm1081 = vcmp.ge.f32.partialorder %v1072, %v1080
        %vm1082 = vmand %vm1081, %vm1069
        %vm1083 = vcmp.eq.s32.totalorder %v846, 2
        %v1084 = vsel %vm1082, 1, 0
        %1085 = vset.pattern.permute.xlu0 2
        %1086 = vperm.xlu0 %1085, %v1084
        %v1087 = vpop.permute.xlu0 %1086
        %vm1088 = vcmp.eq.s32.totalorder %v1087, 1
        %v1089 = vsel %vm1088, %v1068, 0.0
        %v1090 = vsel %vm533, %v1089, 0.0
        %v1091 = vrot.slane %v1090, 4
        %v1092 = vadd.f32 %v1090, %v1091
        %v1093 = vrot.slane %v1092, 2
        %v1094 = vadd.f32 %v1092, %v1093
        %v1095 = vrot.slane %v1094, 1
        %v1096 = vadd.f32 %v1094, %v1095
        %v1097 = vsel %vm1083, 1, 0
        %vm1098 = vcmp.eq.s32.totalorder %v1097, 1
        %v1099 = vsel %vm1098, %v1096, %v1068
        %vm1100 = vmxor %vm1083, 1
        %vm1101 = vmand %vm1082, %vm1100
        %v1102 = vsel %vm1101, 1, 0
        %1103 = vset.pattern.permute.xlu0 2
        %1104 = vperm.xlu0 %1103, %v1102
        %v1105 = vpop.permute.xlu0 %1104
        %vm1106 = vcmp.eq.s32.totalorder %v1105, 1
        %v1107 = vlaneseq
        %v1108 = vshrl.u32 %v1107, 7
        %v1109 = vsub.s32 2, %v1108
        %v1110 = vrot.slane %v1068, %v1109
        %v1111 = vsel %vm1106, %v1110, %v1099
        %v1112 = vrcp.pop %v1096
        %1114 = vset.pattern.permute.xlu0 2
        %1115 = vperm.xlu0 %1114, %v1112
        %v1116 = vpop.permute.xlu0 %1115
        %v1118 = vmul.f32 %v1096, %v1116
        %1120 = vset.pattern.permute.xlu0 2
        %1121 = vperm.xlu0 %1120, %v1111
        %v1122 = vpop.permute.xlu0 %1121
        %v1124 = vmul.f32 %v1122, %v1118
        %v1125 = vsub.f32 %v1111, %v1124
        %v1126 = vsel %vm1098, %v1118, %v1125
        %vm1127 = vcmp.ge.s32.totalorder %v846, 3
        %v1128 = vand.u32 2147483647, %v1126
        %v1129 = vmul.f32 %v1128, %v953
        %v1130 = vsel %vm1127, %v1129, -1.0
        %vm1131 = vcmask 31768
        %v1132 = vsel %vm1131, %v1130, -inf
        %v1133 = vrot.slane %v1132, 4
        %v1134 = vmax.f32 %v1132, %v1133
        %v1135 = vrot.slane %v1134, 2
        %v1136 = vmax.f32 %v1134, %v1135
        %v1137 = vrot.slane %v1136, 1
        %v1138 = vmax.f32 %v1136, %v1137
        %vm1139 = vcmp.ge.f32.partialorder %v1130, %v1138
        %vm1140 = vmand %vm1139, %vm1127
        %vm1141 = vcmp.eq.s32.totalorder %v846, 3
        %v1142 = vsel %vm1140, 1, 0
        %1143 = vset.pattern.permute.xlu0 3
        %1144 = vperm.xlu0 %1143, %v1142
        %v1145 = vpop.permute.xlu0 %1144
        %vm1146 = vcmp.eq.s32.totalorder %v1145, 1
        %v1147 = vsel %vm1146, %v1126, 0.0
        %v1148 = vsel %vm533, %v1147, 0.0
        %v1149 = vrot.slane %v1148, 4
        %v1150 = vadd.f32 %v1148, %v1149
        %v1151 = vrot.slane %v1150, 2
        %v1152 = vadd.f32 %v1150, %v1151
        %v1153 = vrot.slane %v1152, 1
        %v1154 = vadd.f32 %v1152, %v1153
        %v1155 = vsel %vm1141, 1, 0
        %vm1156 = vcmp.eq.s32.totalorder %v1155, 1
        %v1157 = vsel %vm1156, %v1154, %v1126
        %vm1158 = vmxor %vm1141, 1
        %vm1159 = vmand %vm1140, %vm1158
        %v1160 = vsel %vm1159, 1, 0
        %1161 = vset.pattern.permute.xlu0 3
        %1162 = vperm.xlu0 %1161, %v1160
        %v1163 = vpop.permute.xlu0 %1162
        %vm1164 = vcmp.eq.s32.totalorder %v1163, 1
        %v1165 = vlaneseq
        %v1166 = vshrl.u32 %v1165, 7
        %v1167 = vsub.s32 3, %v1166
        %v1168 = vrot.slane %v1126, %v1167
        %v1169 = vsel %vm1164, %v1168, %v1157
        %v1170 = vrcp.pop %v1154
        %1172 = vset.pattern.permute.xlu0 3
        %1173 = vperm.xlu0 %1172, %v1170
        %v1174 = vpop.permute.xlu0 %1173
        %v1176 = vmul.f32 %v1154, %v1174
        %1178 = vset.pattern.permute.xlu0 3
        %1179 = vperm.xlu0 %1178, %v1169
        %v1180 = vpop.permute.xlu0 %1179
        %v1182 = vmul.f32 %v1180, %v1176
        %v1183 = vsub.f32 %v1169, %v1182
        %v1184 = vsel %vm1156, %v1176, %v1183
        %vm1185 = vcmp.ge.s32.totalorder %v846, 4
        %v1186 = vand.u32 2147483647, %v1184
        %v1187 = vmul.f32 %v1186, %v953
        %v1188 = vsel %vm1185, %v1187, -1.0
        %vm1189 = vcmask 39968
        %v1190 = vsel %vm1189, %v1188, -inf
        %v1191 = vrot.slane %v1190, 4
        %v1192 = vmax.f32 %v1190, %v1191
        %v1193 = vrot.slane %v1192, 2
        %v1194 = vmax.f32 %v1192, %v1193
        %v1195 = vrot.slane %v1194, 1
        %v1196 = vmax.f32 %v1194, %v1195
        %vm1197 = vcmp.ge.f32.partialorder %v1188, %v1196
        %vm1198 = vmand %vm1197, %vm1185
        %vm1199 = vcmp.eq.s32.totalorder %v846, 4
        %v1200 = vsel %vm1198, 1, 0
        %1201 = vset.pattern.permute.xlu0 4
        %1202 = vperm.xlu0 %1201, %v1200
        %v1203 = vpop.permute.xlu0 %1202
        %vm1204 = vcmp.eq.s32.totalorder %v1203, 1
        %v1205 = vsel %vm1204, %v1184, 0.0
        %v1206 = vsel %vm533, %v1205, 0.0
        %v1207 = vrot.slane %v1206, 4
        %v1208 = vadd.f32 %v1206, %v1207
        %v1209 = vrot.slane %v1208, 2
        %v1210 = vadd.f32 %v1208, %v1209
        %v1211 = vrot.slane %v1210, 1
        %v1212 = vadd.f32 %v1210, %v1211
        %v1213 = vsel %vm1199, 1, 0
        %vm1214 = vcmp.eq.s32.totalorder %v1213, 1
        %v1215 = vsel %vm1214, %v1212, %v1184
        %vm1216 = vmxor %vm1199, 1
        %vm1217 = vmand %vm1198, %vm1216
        %v1218 = vsel %vm1217, 1, 0
        %1219 = vset.pattern.permute.xlu0 4
        %1220 = vperm.xlu0 %1219, %v1218
        %v1221 = vpop.permute.xlu0 %1220
        %vm1222 = vcmp.eq.s32.totalorder %v1221, 1
        %v1223 = vlaneseq
        %v1224 = vshrl.u32 %v1223, 7
        %v1225 = vsub.s32 4, %v1224
        %v1226 = vrot.slane %v1184, %v1225
        %v1227 = vsel %vm1222, %v1226, %v1215
        %v1228 = vrcp.pop %v1212
        %1230 = vset.pattern.permute.xlu0 4
        %1231 = vperm.xlu0 %1230, %v1228
        %v1232 = vpop.permute.xlu0 %1231
        %v1234 = vmul.f32 %v1212, %v1232
        %1236 = vset.pattern.permute.xlu0 4
        %1237 = vperm.xlu0 %1236, %v1227
        %v1238 = vpop.permute.xlu0 %1237
        %v1240 = vmul.f32 %v1238, %v1234
        %v1241 = vsub.f32 %v1227, %v1240
        %v1242 = vsel %vm1214, %v1234, %v1241
        %vm1243 = vcmp.ge.s32.totalorder %v846, 5
        %v1244 = vand.u32 2147483647, %v1242
        %v1245 = vmul.f32 %v1244, %v953
        %v1246 = vsel %vm1243, %v1245, -1.0
        %vm1247 = vcmask 48168
        %v1248 = vsel %vm1247, %v1246, -inf
        %v1249 = vrot.slane %v1248, 4
        %v1250 = vmax.f32 %v1248, %v1249
        %v1251 = vrot.slane %v1250, 2
        %v1252 = vmax.f32 %v1250, %v1251
        %v1253 = vrot.slane %v1252, 1
        %v1254 = vmax.f32 %v1252, %v1253
        %vm1255 = vcmp.ge.f32.partialorder %v1246, %v1254
        %vm1256 = vmand %vm1255, %vm1243
        %vm1257 = vcmp.eq.s32.totalorder %v846, 5
        %v1258 = vsel %vm1256, 1, 0
        %1259 = vset.pattern.permute.xlu0 5
        %1260 = vperm.xlu0 %1259, %v1258
        %v1261 = vpop.permute.xlu0 %1260
        %vm1262 = vcmp.eq.s32.totalorder %v1261, 1
        %v1263 = vsel %vm1262, %v1242, 0.0
        %v1264 = vsel %vm533, %v1263, 0.0
        %v1265 = vrot.slane %v1264, 4
        %v1266 = vadd.f32 %v1264, %v1265
        %v1267 = vrot.slane %v1266, 2
        %v1268 = vadd.f32 %v1266, %v1267
        %v1269 = vrot.slane %v1268, 1
        %v1270 = vadd.f32 %v1268, %v1269
        %v1271 = vsel %vm1257, 1, 0
        %vm1272 = vcmp.eq.s32.totalorder %v1271, 1
        %v1273 = vsel %vm1272, %v1270, %v1242
        %vm1274 = vmxor %vm1257, 1
        %vm1275 = vmand %vm1256, %vm1274
        %v1276 = vsel %vm1275, 1, 0
        %1277 = vset.pattern.permute.xlu0 5
        %1278 = vperm.xlu0 %1277, %v1276
        %v1279 = vpop.permute.xlu0 %1278
        %vm1280 = vcmp.eq.s32.totalorder %v1279, 1
        %v1281 = vlaneseq
        %v1282 = vshrl.u32 %v1281, 7
        %v1283 = vsub.s32 5, %v1282
        %v1284 = vrot.slane %v1242, %v1283
        %v1285 = vsel %vm1280, %v1284, %v1273
        %v1286 = vrcp.pop %v1270
        %1288 = vset.pattern.permute.xlu0 5
        %1289 = vperm.xlu0 %1288, %v1286
        %v1290 = vpop.permute.xlu0 %1289
        %v1292 = vmul.f32 %v1270, %v1290
        %1294 = vset.pattern.permute.xlu0 5
        %1295 = vperm.xlu0 %1294, %v1285
        %v1296 = vpop.permute.xlu0 %1295
        %v1298 = vmul.f32 %v1296, %v1292
        %v1299 = vsub.f32 %v1285, %v1298
        %v1300 = vsel %vm1272, %v1292, %v1299
        %vm1301 = vcmp.ge.s32.totalorder %v846, 6
        %v1302 = vand.u32 2147483647, %v1300
        %v1303 = vmul.f32 %v1302, %v953
        %v1304 = vsel %vm1301, %v1303, -1.0
        %vm1305 = vcmask 56368
        %v1306 = vsel %vm1305, %v1304, -inf
        %v1307 = vrot.slane %v1306, 4
        %v1308 = vmax.f32 %v1306, %v1307
        %v1309 = vrot.slane %v1308, 2
        %v1310 = vmax.f32 %v1308, %v1309
        %v1311 = vrot.slane %v1310, 1
        %v1312 = vmax.f32 %v1310, %v1311
        %vm1313 = vcmp.ge.f32.partialorder %v1304, %v1312
        %vm1314 = vmand %vm1313, %vm1301
        %vm1315 = vcmp.eq.s32.totalorder %v846, 6
        %v1316 = vsel %vm1314, 1, 0
        %1317 = vset.pattern.permute.xlu0 6
        %1318 = vperm.xlu0 %1317, %v1316
        %v1319 = vpop.permute.xlu0 %1318
        %vm1320 = vcmp.eq.s32.totalorder %v1319, 1
        %v1321 = vsel %vm1320, %v1300, 0.0
        %v1322 = vsel %vm533, %v1321, 0.0
        %v1323 = vrot.slane %v1322, 4
        %v1324 = vadd.f32 %v1322, %v1323
        %v1325 = vrot.slane %v1324, 2
        %v1326 = vadd.f32 %v1324, %v1325
        %v1327 = vrot.slane %v1326, 1
        %v1328 = vadd.f32 %v1326, %v1327
        %v1329 = vsel %vm1315, 1, 0
        %vm1330 = vcmp.eq.s32.totalorder %v1329, 1
        %v1331 = vsel %vm1330, %v1328, %v1300
        %vm1332 = vmxor %vm1315, 1
        %vm1333 = vmand %vm1314, %vm1332
        %v1334 = vsel %vm1333, 1, 0
        %1335 = vset.pattern.permute.xlu0 6
        %1336 = vperm.xlu0 %1335, %v1334
        %v1337 = vpop.permute.xlu0 %1336
        %vm1338 = vcmp.eq.s32.totalorder %v1337, 1
        %v1339 = vlaneseq
        %v1340 = vshrl.u32 %v1339, 7
        %v1341 = vsub.s32 6, %v1340
        %v1342 = vrot.slane %v1300, %v1341
        %v1343 = vsel %vm1338, %v1342, %v1331
        %v1344 = vrcp.pop %v1328
        %1346 = vset.pattern.permute.xlu0 6
        %1347 = vperm.xlu0 %1346, %v1344
        %v1348 = vpop.permute.xlu0 %1347
        %v1350 = vmul.f32 %v1328, %v1348
        %1352 = vset.pattern.permute.xlu0 6
        %1353 = vperm.xlu0 %1352, %v1343
        %v1354 = vpop.permute.xlu0 %1353
        %v1356 = vmul.f32 %v1354, %v1350
        %v1357 = vsub.f32 %v1343, %v1356
        %v1358 = vsel %vm1330, %v1350, %v1357
        %vm1359 = vcmp.ge.s32.totalorder %v846, 7
        %v1360 = vand.u32 2147483647, %v1358
        %v1361 = vmul.f32 %v1360, %v953
        %v1362 = vsel %vm1359, %v1361, -1.0
        %vm1363 = vcmask 64568
        %v1364 = vsel %vm1363, %v1362, -inf
        %v1365 = vrot.slane %v1364, 4
        %v1366 = vmax.f32 %v1364, %v1365
        %v1367 = vrot.slane %v1366, 2
        %v1368 = vmax.f32 %v1366, %v1367
        %v1369 = vrot.slane %v1368, 1
        %v1370 = vmax.f32 %v1368, %v1369
        %vm1371 = vcmp.ge.f32.partialorder %v1362, %v1370
        %vm1372 = vmand %vm1371, %vm1359
        %vm1373 = vcmp.eq.s32.totalorder %v846, 7
        %v1374 = vsel %vm1372, 1, 0
        %1375 = vset.pattern.permute.xlu0 7
        %1376 = vperm.xlu0 %1375, %v1374
        %v1377 = vpop.permute.xlu0 %1376
        %vm1378 = vcmp.eq.s32.totalorder %v1377, 1
        %v1379 = vsel %vm1378, %v1358, 0.0
        %v1380 = vsel %vm533, %v1379, 0.0
        %v1381 = vrot.slane %v1380, 4
        %v1382 = vadd.f32 %v1380, %v1381
        %v1383 = vrot.slane %v1382, 2
        %v1384 = vadd.f32 %v1382, %v1383
        %v1385 = vrot.slane %v1384, 1
        %v1386 = vadd.f32 %v1384, %v1385
        %v1387 = vsel %vm1373, 1, 0
        %vm1388 = vcmp.eq.s32.totalorder %v1387, 1
        %v1389 = vsel %vm1388, %v1386, %v1358
        %vm1390 = vmxor %vm1373, 1
        %vm1391 = vmand %vm1372, %vm1390
        %v1392 = vsel %vm1391, 1, 0
        %1393 = vset.pattern.permute.xlu0 7
        %1394 = vperm.xlu0 %1393, %v1392
        %v1395 = vpop.permute.xlu0 %1394
        %vm1396 = vcmp.eq.s32.totalorder %v1395, 1
        %v1397 = vlaneseq
        %v1398 = vshrl.u32 %v1397, 7
        %v1399 = vsub.s32 7, %v1398
        %v1400 = vrot.slane %v1358, %v1399
        %v1401 = vsel %vm1396, %v1400, %v1389
        %v1402 = vrcp.pop %v1386
        %1404 = vset.pattern.permute.xlu0 7
        %1405 = vperm.xlu0 %1404, %v1402
        %v1406 = vpop.permute.xlu0 %1405
        %v1408 = vmul.f32 %v1386, %v1406
        %1410 = vset.pattern.permute.xlu0 7
        %1411 = vperm.xlu0 %1410, %v1401
        %v1412 = vpop.permute.xlu0 %1411
        %v1414 = vmul.f32 %v1412, %v1408
        %v1415 = vsub.f32 %v1401, %v1414
        %v1416 = vsel %vm1388, %v1408, %v1415
        %1418 = vrot.lane.b32.xlu0 %v1416, 120
        %v1419 = vpop.permute.xlu0 %1418
        %v1422 = vsel %vm853, %v852, 0
        %1424 = vmatprep.subr.mxu0 0.0
        %1425 = vmatpush1.msra.mxu0 %v1419
        %1426 = vmatprep.subr.mxu0 0.0
        %1427 = vmatpush1.msra.mxu0 0.0
        %1428 = vmatprep.subr.mxu0 0.0
        %1429 = vmatpush1.msra.mxu0 0.0
        %1430 = vmatprep.subr.mxu0 0.0
        %1431 = vmatpush1.msra.mxu0 0.0
        %1432 = vmatprep.subr.mxu0 0.0
        %1433 = vmatpush1.msra.mxu0 0.0
        %1434 = vmatprep.subr.mxu0 0.0
        %1435 = vmatpush1.msra.mxu0 0.0
        %1436 = vmatprep.subr.mxu0 0.0
        %1437 = vmatpush1.msra.mxu0 0.0
        %1438 = vmatprep.subr.mxu0 0.0
        %1439 = vmatpush1.msra.mxu0 0.0
        %1440 = vmatprep.subr.mxu0 0.0
        %1441 = vmatpush1.msra.mxu0 0.0
        %1442 = vmatprep.subr.mxu0 0.0
        %1443 = vmatpush1.msra.mxu0 0.0
        %1444 = vmatprep.subr.mxu0 0.0
        %1445 = vmatpush1.msra.mxu0 0.0
        %1446 = vmatprep.subr.mxu0 0.0
        %1447 = vmatpush1.msra.mxu0 0.0
        %1448 = vmatprep.subr.mxu0 0.0
        %1449 = vmatpush1.msra.mxu0 0.0
        %1450 = vmatprep.subr.mxu0 0.0
        %1451 = vmatpush1.msra.mxu0 0.0
        %1452 = vmatprep.subr.mxu0 0.0
        %1453 = vmatpush1.msra.mxu0 0.0
        %1454 = vmatprep.subr.mxu0 0.0
        %1455 = vmatpush1.msra.mxu0 0.0
        %1456 = vmatprep.subr.mxu0 0.0
        %1457 = vmatpush1.msra.mxu0 0.0
        %1458 = vmatprep.subr.mxu0 0.0
        %1459 = vmatpush1.msra.mxu0 0.0
        %1460 = vmatprep.subr.mxu0 0.0
        %1461 = vmatpush1.msra.mxu0 0.0
        %1462 = vmatprep.subr.mxu0 0.0
        %1463 = vmatpush1.msra.mxu0 0.0
        %1464 = vmatprep.subr.mxu0 0.0
        %1465 = vmatpush1.msra.mxu0 0.0
        %1466 = vmatprep.subr.mxu0 0.0
        %1467 = vmatpush1.msra.mxu0 0.0
        %1468 = vmatprep.subr.mxu0 0.0
        %1469 = vmatpush1.msra.mxu0 0.0
        %1470 = vmatprep.subr.mxu0 0.0
        %1471 = vmatpush1.msra.mxu0 0.0
        %1472 = vmatprep.subr.mxu0 0.0
        %1473 = vmatpush1.msra.mxu0 0.0
        %1474 = vmatprep.subr.mxu0 0.0
        %1475 = vmatpush1.msra.mxu0 0.0
        %1476 = vmatprep.subr.mxu0 0.0
        %1477 = vmatpush1.msra.mxu0 0.0
        %1478 = vmatprep.subr.mxu0 0.0
        %1479 = vmatpush1.msra.mxu0 0.0
        %1480 = vmatprep.subr.mxu0 0.0
        %1481 = vmatpush1.msra.mxu0 0.0
        %1482 = vmatprep.subr.mxu0 0.0
        %1483 = vmatpush1.msra.mxu0 0.0
        %1484 = vmatprep.subr.mxu0 0.0
        %1485 = vmatpush1.msra.mxu0 0.0
        %1486 = vmatprep.subr.mxu0 0.0
        %1487 = vmatpush1.msra.mxu0 0.0
        %1488 = vmatprep.mubr.f32.mxu0 0.0
        %1489 = vmatmul.mubr.f32.gmra.mrb[0].mxu0 %v1422
        %v1490 = vpop.f32.mrb[0].mxu0
        %v1491 = vadd.f32 0.0, %v1490
        %v1492 = vpop.f32.mrb[0].mxu0
        %1493 = vdwg.mxu0
        %v1494 = vsel %vm853, %v1419, 0
        %1496 = vmatprep.subr.mxu0 0.0
        %1497 = vmatpush1.xpose.msra.mxu0 %v1494
        %1498 = vmatprep.subr.mxu0 0.0
        %1499 = vmatpush1.xpose.msra.mxu0 0.0
        %1500 = vmatprep.subr.mxu0 0.0
        %1501 = vmatpush1.xpose.msra.mxu0 0.0
        %1502 = vmatprep.subr.mxu0 0.0
        %1503 = vmatpush1.xpose.msra.mxu0 0.0
        %1504 = vmatprep.subr.mxu0 0.0
        %1505 = vmatpush1.xpose.msra.mxu0 0.0
        %1506 = vmatprep.subr.mxu0 0.0
        %1507 = vmatpush1.xpose.msra.mxu0 0.0
        %1508 = vmatprep.subr.mxu0 0.0
        %1509 = vmatpush1.xpose.msra.mxu0 0.0
        %1510 = vmatprep.subr.mxu0 0.0
        %1511 = vmatpush1.xpose.msra.mxu0 0.0
        %1512 = vmatprep.subr.mxu0 0.0
        %1513 = vmatpush1.xpose.msra.mxu0 0.0
        %1514 = vmatprep.subr.mxu0 0.0
        %1515 = vmatpush1.xpose.msra.mxu0 0.0
        %1516 = vmatprep.subr.mxu0 0.0
        %1517 = vmatpush1.xpose.msra.mxu0 0.0
        %1518 = vmatprep.subr.mxu0 0.0
        %1519 = vmatpush1.xpose.msra.mxu0 0.0
        %1520 = vmatprep.subr.mxu0 0.0
        %1521 = vmatpush1.xpose.msra.mxu0 0.0
        %1522 = vmatprep.subr.mxu0 0.0
        %1523 = vmatpush1.xpose.msra.mxu0 0.0
        %1524 = vmatprep.subr.mxu0 0.0
        %1525 = vmatpush1.xpose.msra.mxu0 0.0
        %1526 = vmatprep.subr.mxu0 0.0
        %1527 = vmatpush1.xpose.msra.mxu0 0.0
        %1528 = vmatprep.subr.mxu0 0.0
        %1529 = vmatpush1.xpose.msra.mxu0 0.0
        %1530 = vmatprep.subr.mxu0 0.0
        %1531 = vmatpush1.xpose.msra.mxu0 0.0
        %1532 = vmatprep.subr.mxu0 0.0
        %1533 = vmatpush1.xpose.msra.mxu0 0.0
        %1534 = vmatprep.subr.mxu0 0.0
        %1535 = vmatpush1.xpose.msra.mxu0 0.0
        %1536 = vmatprep.subr.mxu0 0.0
        %1537 = vmatpush1.xpose.msra.mxu0 0.0
        %1538 = vmatprep.subr.mxu0 0.0
        %1539 = vmatpush1.xpose.msra.mxu0 0.0
        %1540 = vmatprep.subr.mxu0 0.0
        %1541 = vmatpush1.xpose.msra.mxu0 0.0
        %1542 = vmatprep.subr.mxu0 0.0
        %1543 = vmatpush1.xpose.msra.mxu0 0.0
        %1544 = vmatprep.subr.mxu0 0.0
        %1545 = vmatpush1.xpose.msra.mxu0 0.0
        %1546 = vmatprep.subr.mxu0 0.0
        %1547 = vmatpush1.xpose.msra.mxu0 0.0
        %1548 = vmatprep.subr.mxu0 0.0
        %1549 = vmatpush1.xpose.msra.mxu0 0.0
        %1550 = vmatprep.subr.mxu0 0.0
        %1551 = vmatpush1.xpose.msra.mxu0 0.0
        %1552 = vmatprep.subr.mxu0 0.0
        %1553 = vmatpush1.xpose.msra.mxu0 0.0
        %1554 = vmatprep.subr.mxu0 0.0
        %1555 = vmatpush1.xpose.msra.mxu0 0.0
        %1556 = vmatprep.subr.mxu0 0.0
        %1557 = vmatpush1.xpose.msra.mxu0 0.0
        %1558 = vmatprep.subr.mxu0 0.0
        %1559 = vmatpush1.xpose.msra.mxu0 0.0
        %1560 = vmatprep.mubr.f32.mxu0 0.0
        %1561 = vmatmul.mubr.f32.gmra.mrb[0].mxu0 %v1422
        %v1562 = vpop.f32.mrb[0].mxu0
        %v1563 = vadd.f32 0.0, %v1562
        %v1564 = vpop.f32.mrb[0].mxu0
        %1565 = vdwg.mxu0
        %v1566 = vsub.f32 %v1491, %v1563
        %v1567 = vsel %vm937, %v1491, %v1566
        %vm1568 = vcmp.eq.s32.totalorder %v848, 1
        %v1569 = vsub.f32 0.0, %v1563
        %v1570 = vsel %vm1568, %v1569, %v1567
        %v1572 = vsel %vm853, %v1570, 0
        %1574 = vmatprep.subr.mxu0 0.0
        %1575 = vmatpush1.msra.mxu0 %v604
        %1576 = vmatprep.subr.mxu0 0.0
        %1577 = vmatpush1.msra.mxu0 0.0
        %1578 = vmatprep.subr.mxu0 0.0
        %1579 = vmatpush1.msra.mxu0 0.0
        %1580 = vmatprep.subr.mxu0 0.0
        %1581 = vmatpush1.msra.mxu0 0.0
        %1582 = vmatprep.subr.mxu0 0.0
        %1583 = vmatpush1.msra.mxu0 0.0
        %1584 = vmatprep.subr.mxu0 0.0
        %1585 = vmatpush1.msra.mxu0 0.0
        %1586 = vmatprep.subr.mxu0 0.0
        %1587 = vmatpush1.msra.mxu0 0.0
        %1588 = vmatprep.subr.mxu0 0.0
        %1589 = vmatpush1.msra.mxu0 0.0
        %1590 = vmatprep.subr.mxu0 0.0
        %1591 = vmatpush1.msra.mxu0 0.0
        %1592 = vmatprep.subr.mxu0 0.0
        %1593 = vmatpush1.msra.mxu0 0.0
        %1594 = vmatprep.subr.mxu0 0.0
        %1595 = vmatpush1.msra.mxu0 0.0
        %1596 = vmatprep.subr.mxu0 0.0
        %1597 = vmatpush1.msra.mxu0 0.0
        %1598 = vmatprep.subr.mxu0 0.0
        %1599 = vmatpush1.msra.mxu0 0.0
        %1600 = vmatprep.subr.mxu0 0.0
        %1601 = vmatpush1.msra.mxu0 0.0
        %1602 = vmatprep.subr.mxu0 0.0
        %1603 = vmatpush1.msra.mxu0 0.0
        %1604 = vmatprep.subr.mxu0 0.0
        %1605 = vmatpush1.msra.mxu0 0.0
        %1606 = vmatprep.subr.mxu0 0.0
        %1607 = vmatpush1.msra.mxu0 0.0
        %1608 = vmatprep.subr.mxu0 0.0
        %1609 = vmatpush1.msra.mxu0 0.0
        %1610 = vmatprep.subr.mxu0 0.0
        %1611 = vmatpush1.msra.mxu0 0.0
        %1612 = vmatprep.subr.mxu0 0.0
        %1613 = vmatpush1.msra.mxu0 0.0
        %1614 = vmatprep.subr.mxu0 0.0
        %1615 = vmatpush1.msra.mxu0 0.0
        %1616 = vmatprep.subr.mxu0 0.0
        %1617 = vmatpush1.msra.mxu0 0.0
        %1618 = vmatprep.subr.mxu0 0.0
        %1619 = vmatpush1.msra.mxu0 0.0
        %1620 = vmatprep.subr.mxu0 0.0
        %1621 = vmatpush1.msra.mxu0 0.0
        %1622 = vmatprep.subr.mxu0 0.0
        %1623 = vmatpush1.msra.mxu0 0.0
        %1624 = vmatprep.subr.mxu0 0.0
        %1625 = vmatpush1.msra.mxu0 0.0
        %1626 = vmatprep.subr.mxu0 0.0
        %1627 = vmatpush1.msra.mxu0 0.0
        %1628 = vmatprep.subr.mxu0 0.0
        %1629 = vmatpush1.msra.mxu0 0.0
        %1630 = vmatprep.subr.mxu0 0.0
        %1631 = vmatpush1.msra.mxu0 0.0
        %1632 = vmatprep.subr.mxu0 0.0
        %1633 = vmatpush1.msra.mxu0 0.0
        %1634 = vmatprep.subr.mxu0 0.0
        %1635 = vmatpush1.msra.mxu0 0.0
        %1636 = vmatprep.subr.mxu0 0.0
        %1637 = vmatpush1.msra.mxu0 0.0
        %1638 = vmatprep.mubr.f32.mxu0 0.0
        %1639 = vmatmul.mubr.f32.gmra.mrb[0].mxu0 %v1572
        %v1640 = vpop.f32.mrb[0].mxu0
        %v1641 = vadd.f32 0.0, %v1640
        %v1642 = vpop.f32.mrb[0].mxu0
        %1643 = vdwg.mxu0
        %v1644 = vld [vmem:[%s6] sm:$0xff]
        %v1645 = vld [vmem:[%s6 + $0x8] sm:$0xff]
        %v1646 = vld [vmem:[%s6 + $0x10] sm:$0xff]
        %v1647 = vld [vmem:[%s6 + $0x18] sm:$0xff]
        %v1648 = vld [vmem:[%s6 + $0x20] sm:$0xff]
        %v1649 = vld [vmem:[%s6 + $0x28] sm:$0xff]
        %v1650 = vld [vmem:[%s6 + $0x30] sm:$0xff]
        %v1651 = vld [vmem:[%s6 + $0x38] sm:$0xff]
        %v1652 = vld [vmem:[#allocation8] sm:$0x1]
        %v1654 = vlaneseq
        %v1655 = vshrl.u32 %v1654, 7
        %v1656 = vsub.s32 0, %v1655
        %v1657 = vrot.slane %v1652, %v1656
        %v1660 = vsel %vm615, %v1641, 0
        %1662 = vmatprep.subr.mxu0 0.0
        %1663 = vmatpush1.msra.mxu0 %v1644
        %1664 = vmatprep.subr.mxu0 0.0
        %1665 = vmatpush1.msra.mxu0 %v1645
        %1666 = vmatprep.subr.mxu0 0.0
        %1667 = vmatpush1.msra.mxu0 %v1646
        %1668 = vmatprep.subr.mxu0 0.0
        %1669 = vmatpush1.msra.mxu0 %v1647
        %1670 = vmatprep.subr.mxu0 0.0
        %1671 = vmatpush1.msra.mxu0 %v1648
        %1672 = vmatprep.subr.mxu0 0.0
        %1673 = vmatpush1.msra.mxu0 %v1649
        %1674 = vmatprep.subr.mxu0 0.0
        %1675 = vmatpush1.msra.mxu0 %v1650
        %1676 = vmatprep.subr.mxu0 0.0
        %1677 = vmatpush1.msra.mxu0 %v1651
        %1678 = vmatprep.subr.mxu0 0.0
        %1679 = vmatpush1.msra.mxu0 0.0
        %1680 = vmatprep.subr.mxu0 0.0
        %1681 = vmatpush1.msra.mxu0 0.0
        %1682 = vmatprep.subr.mxu0 0.0
        %1683 = vmatpush1.msra.mxu0 0.0
        %1684 = vmatprep.subr.mxu0 0.0
        %1685 = vmatpush1.msra.mxu0 0.0
        %1686 = vmatprep.subr.mxu0 0.0
        %1687 = vmatpush1.msra.mxu0 0.0
        %1688 = vmatprep.subr.mxu0 0.0
        %1689 = vmatpush1.msra.mxu0 0.0
        %1690 = vmatprep.subr.mxu0 0.0
        %1691 = vmatpush1.msra.mxu0 0.0
        %1692 = vmatprep.subr.mxu0 0.0
        %1693 = vmatpush1.msra.mxu0 0.0
        %1694 = vmatprep.subr.mxu0 0.0
        %1695 = vmatpush1.msra.mxu0 0.0
        %1696 = vmatprep.subr.mxu0 0.0
        %1697 = vmatpush1.msra.mxu0 0.0
        %1698 = vmatprep.subr.mxu0 0.0
        %1699 = vmatpush1.msra.mxu0 0.0
        %1700 = vmatprep.subr.mxu0 0.0
        %1701 = vmatpush1.msra.mxu0 0.0
        %1702 = vmatprep.subr.mxu0 0.0
        %1703 = vmatpush1.msra.mxu0 0.0
        %1704 = vmatprep.subr.mxu0 0.0
        %1705 = vmatpush1.msra.mxu0 0.0
        %1706 = vmatprep.subr.mxu0 0.0
        %1707 = vmatpush1.msra.mxu0 0.0
        %1708 = vmatprep.subr.mxu0 0.0
        %1709 = vmatpush1.msra.mxu0 0.0
        %1710 = vmatprep.subr.mxu0 0.0
        %1711 = vmatpush1.msra.mxu0 0.0
        %1712 = vmatprep.subr.mxu0 0.0
        %1713 = vmatpush1.msra.mxu0 0.0
        %1714 = vmatprep.subr.mxu0 0.0
        %1715 = vmatpush1.msra.mxu0 0.0
        %1716 = vmatprep.subr.mxu0 0.0
        %1717 = vmatpush1.msra.mxu0 0.0
        %1718 = vmatprep.subr.mxu0 0.0
        %1719 = vmatpush1.msra.mxu0 0.0
        %1720 = vmatprep.subr.mxu0 0.0
        %1721 = vmatpush1.msra.mxu0 0.0
        %1722 = vmatprep.subr.mxu0 0.0
        %1723 = vmatpush1.msra.mxu0 0.0
        %1724 = vmatprep.subr.mxu0 0.0
        %1725 = vmatpush1.msra.mxu0 0.0
        %1726 = vmatprep.mubr.f32.mxu0 0.0
        %1727 = vmatmul.mubr.f32.gmra.mrb[0].mxu0 %v1660
        %v1728 = vpop.f32.mrb[0].mxu0
        %v1729 = vadd.f32 %v1657, %v1728
        %v1730 = vpop.f32.mrb[0].mxu0
        %1731 = vdwg.mxu0
        %v1732 = vmax.f32 %v1729, 0.0
        %1733 = vmatprep.subr.mxu0 0.0
        %1734 = vmatpush1.msra.mxu0 %v1732
        %1735 = vmatprep.subr.mxu0 0.0
        %1736 = vmatpush1.msra.mxu0 0.0
        %1737 = vmatprep.subr.mxu0 0.0
        %1738 = vmatpush1.msra.mxu0 0.0
        %1739 = vmatprep.subr.mxu0 0.0
        %1740 = vmatpush1.msra.mxu0 0.0
        %1741 = vmatprep.subr.mxu0 0.0
        %1742 = vmatpush1.msra.mxu0 0.0
        %1743 = vmatprep.subr.mxu0 0.0
        %1744 = vmatpush1.msra.mxu0 0.0
        %1745 = vmatprep.subr.mxu0 0.0
        %1746 = vmatpush1.msra.mxu0 0.0
        %1747 = vmatprep.subr.mxu0 0.0
        %1748 = vmatpush1.msra.mxu0 0.0
        %1749 = vmatprep.subr.mxu0 0.0
        %1750 = vmatpush1.msra.mxu0 0.0
        %1751 = vmatprep.subr.mxu0 0.0
        %1752 = vmatpush1.msra.mxu0 0.0
        %1753 = vmatprep.subr.mxu0 0.0
        %1754 = vmatpush1.msra.mxu0 0.0
        %1755 = vmatprep.subr.mxu0 0.0
        %1756 = vmatpush1.msra.mxu0 0.0
        %1757 = vmatprep.subr.mxu0 0.0
        %1758 = vmatpush1.msra.mxu0 0.0
        %1759 = vmatprep.subr.mxu0 0.0
        %1760 = vmatpush1.msra.mxu0 0.0
        %1761 = vmatprep.subr.mxu0 0.0
        %1762 = vmatpush1.msra.mxu0 0.0
        %1763 = vmatprep.subr.mxu0 0.0
        %1764 = vmatpush1.msra.mxu0 0.0
        %1765 = vmatprep.subr.mxu0 0.0
        %1766 = vmatpush1.msra.mxu0 0.0
        %1767 = vmatprep.subr.mxu0 0.0
        %1768 = vmatpush1.msra.mxu0 0.0
        %1769 = vmatprep.subr.mxu0 0.0
        %1770 = vmatpush1.msra.mxu0 0.0
        %1771 = vmatprep.subr.mxu0 0.0
        %1772 = vmatpush1.msra.mxu0 0.0
        %1773 = vmatprep.subr.mxu0 0.0
        %1774 = vmatpush1.msra.mxu0 0.0
        %1775 = vmatprep.subr.mxu0 0.0
        %1776 = vmatpush1.msra.mxu0 0.0
        %1777 = vmatprep.subr.mxu0 0.0
        %1778 = vmatpush1.msra.mxu0 0.0
        %1779 = vmatprep.subr.mxu0 0.0
        %1780 = vmatpush1.msra.mxu0 0.0
        %1781 = vmatprep.subr.mxu0 0.0
        %1782 = vmatpush1.msra.mxu0 0.0
        %1783 = vmatprep.subr.mxu0 0.0
        %1784 = vmatpush1.msra.mxu0 0.0
        %1785 = vmatprep.subr.mxu0 0.0
        %1786 = vmatpush1.msra.mxu0 0.0
        %1787 = vmatprep.subr.mxu0 0.0
        %1788 = vmatpush1.msra.mxu0 0.0
        %1789 = vmatprep.subr.mxu0 0.0
        %1790 = vmatpush1.msra.mxu0 0.0
        %1791 = vmatprep.subr.mxu0 0.0
        %1792 = vmatpush1.msra.mxu0 0.0
        %1793 = vmatprep.subr.mxu0 0.0
        %1794 = vmatpush1.msra.mxu0 0.0
        %1795 = vmatprep.subr.mxu0 0.0
        %1796 = vmatpush1.msra.mxu0 0.0
        %1797 = vmatprep.mubr.f32.mxu0 0.0
        %1798 = vmatmul.mubr.f32.gmra.mrb[0].mxu0 %v1572
        %v1799 = vpop.f32.mrb[0].mxu0
        %v1800 = vadd.f32 0.0, %v1799
        %v1801 = vpop.f32.mrb[0].mxu0
        %1802 = vdwg.mxu0
        %v1803 = vld [vmem:[#allocation10] sm:$0xff]
        %v1804 = vld [vmem:[#allocation10 + $0x8] sm:$0xff]
        %v1805 = vld [vmem:[#allocation10 + $0x10] sm:$0xff]
        %v1806 = vld [vmem:[#allocation10 + $0x18] sm:$0xff]
        %v1807 = vld [vmem:[#allocation11] sm:$0x1]
        %v1809 = vlaneseq
        %v1810 = vshrl.u32 %v1809, 7
        %v1811 = vsub.s32 0, %v1810
        %v1812 = vrot.slane %v1807, %v1811
        %v1815 = vsel %vm694, %v1800, 0
        %1817 = vmatprep.subr.mxu0 0.0
        %1818 = vmatpush1.msra.mxu0 %v1803
        %1819 = vmatprep.subr.mxu0 0.0
        %1820 = vmatpush1.msra.mxu0 %v1804
        %1821 = vmatprep.subr.mxu0 0.0
        %1822 = vmatpush1.msra.mxu0 %v1805
        %1823 = vmatprep.subr.mxu0 0.0
        %1824 = vmatpush1.msra.mxu0 %v1806
        %1825 = vmatprep.subr.mxu0 0.0
        %1826 = vmatpush1.msra.mxu0 0.0
        %1827 = vmatprep.subr.mxu0 0.0
        %1828 = vmatpush1.msra.mxu0 0.0
        %1829 = vmatprep.subr.mxu0 0.0
        %1830 = vmatpush1.msra.mxu0 0.0
        %1831 = vmatprep.subr.mxu0 0.0
        %1832 = vmatpush1.msra.mxu0 0.0
        %1833 = vmatprep.subr.mxu0 0.0
        %1834 = vmatpush1.msra.mxu0 0.0
        %1835 = vmatprep.subr.mxu0 0.0
        %1836 = vmatpush1.msra.mxu0 0.0
        %1837 = vmatprep.subr.mxu0 0.0
        %1838 = vmatpush1.msra.mxu0 0.0
        %1839 = vmatprep.subr.mxu0 0.0
        %1840 = vmatpush1.msra.mxu0 0.0
        %1841 = vmatprep.subr.mxu0 0.0
        %1842 = vmatpush1.msra.mxu0 0.0
        %1843 = vmatprep.subr.mxu0 0.0
        %1844 = vmatpush1.msra.mxu0 0.0
        %1845 = vmatprep.subr.mxu0 0.0
        %1846 = vmatpush1.msra.mxu0 0.0
        %1847 = vmatprep.subr.mxu0 0.0
        %1848 = vmatpush1.msra.mxu0 0.0
        %1849 = vmatprep.subr.mxu0 0.0
        %1850 = vmatpush1.msra.mxu0 0.0
        %1851 = vmatprep.subr.mxu0 0.0
        %1852 = vmatpush1.msra.mxu0 0.0
        %1853 = vmatprep.subr.mxu0 0.0
        %1854 = vmatpush1.msra.mxu0 0.0
        %1855 = vmatprep.subr.mxu0 0.0
        %1856 = vmatpush1.msra.mxu0 0.0
        %1857 = vmatprep.subr.mxu0 0.0
        %1858 = vmatpush1.msra.mxu0 0.0
        %1859 = vmatprep.subr.mxu0 0.0
        %1860 = vmatpush1.msra.mxu0 0.0
        %1861 = vmatprep.subr.mxu0 0.0
        %1862 = vmatpush1.msra.mxu0 0.0
        %1863 = vmatprep.subr.mxu0 0.0
        %1864 = vmatpush1.msra.mxu0 0.0
        %1865 = vmatprep.subr.mxu0 0.0
        %1866 = vmatpush1.msra.mxu0 0.0
        %1867 = vmatprep.subr.mxu0 0.0
        %1868 = vmatpush1.msra.mxu0 0.0
        %1869 = vmatprep.subr.mxu0 0.0
        %1870 = vmatpush1.msra.mxu0 0.0
        %1871 = vmatprep.subr.mxu0 0.0
        %1872 = vmatpush1.msra.mxu0 0.0
        %1873 = vmatprep.subr.mxu0 0.0
        %1874 = vmatpush1.msra.mxu0 0.0
        %1875 = vmatprep.subr.mxu0 0.0
        %1876 = vmatpush1.msra.mxu0 0.0
        %1877 = vmatprep.subr.mxu0 0.0
        %1878 = vmatpush1.msra.mxu0 0.0
        %1879 = vmatprep.subr.mxu0 0.0
        %1880 = vmatpush1.msra.mxu0 0.0
        %1881 = vmatprep.mubr.f32.mxu0 0.0
        %1882 = vmatmul.mubr.f32.gmra.mrb[0].mxu0 %v1815
        %v1883 = vpop.f32.mrb[0].mxu0
        %v1884 = vadd.f32 %v1812, %v1883
        %v1885 = vpop.f32.mrb[0].mxu0
        %1886 = vdwg.mxu0
        %v1887 = vmax.f32 %v1884, 0.0
        %v1888 = vld [vmem:[%s529] sm:$0x1]
        %vm1889 = vcmp.le.s32.totalorder %v846, %v848
        %v1890 = vsel %vm1889, 1, 0
        %v1891 = vcvt.s32.f32 %v1890
        %v1893 = vsel %vm853, %v1888, 0
        %1895 = vmatprep.subr.mxu0 0.0
        %1896 = vmatpush1.msra.mxu0 %v1891
        %1897 = vmatprep.subr.mxu0 0.0
        %1898 = vmatpush1.msra.mxu0 0.0
        %1899 = vmatprep.subr.mxu0 0.0
        %1900 = vmatpush1.msra.mxu0 0.0
        %1901 = vmatprep.subr.mxu0 0.0
        %1902 = vmatpush1.msra.mxu0 0.0
        %1903 = vmatprep.subr.mxu0 0.0
        %1904 = vmatpush1.msra.mxu0 0.0
        %1905 = vmatprep.subr.mxu0 0.0
        %1906 = vmatpush1.msra.mxu0 0.0
        %1907 = vmatprep.subr.mxu0 0.0
        %1908 = vmatpush1.msra.mxu0 0.0
        %1909 = vmatprep.subr.mxu0 0.0
        %1910 = vmatpush1.msra.mxu0 0.0
        %1911 = vmatprep.subr.mxu0 0.0
        %1912 = vmatpush1.msra.mxu0 0.0
        %1913 = vmatprep.subr.mxu0 0.0
        %1914 = vmatpush1.msra.mxu0 0.0
        %1915 = vmatprep.subr.mxu0 0.0
        %1916 = vmatpush1.msra.mxu0 0.0
        %1917 = vmatprep.subr.mxu0 0.0
        %1918 = vmatpush1.msra.mxu0 0.0
        %1919 = vmatprep.subr.mxu0 0.0
        %1920 = vmatpush1.msra.mxu0 0.0
        %1921 = vmatprep.subr.mxu0 0.0
        %1922 = vmatpush1.msra.mxu0 0.0
        %1923 = vmatprep.subr.mxu0 0.0
        %1924 = vmatpush1.msra.mxu0 0.0
        %1925 = vmatprep.subr.mxu0 0.0
        %1926 = vmatpush1.msra.mxu0 0.0
        %1927 = vmatprep.subr.mxu0 0.0
        %1928 = vmatpush1.msra.mxu0 0.0
        %1929 = vmatprep.subr.mxu0 0.0
        %1930 = vmatpush1.msra.mxu0 0.0
        %1931 = vmatprep.subr.mxu0 0.0
        %1932 = vmatpush1.msra.mxu0 0.0
        %1933 = vmatprep.subr.mxu0 0.0
        %1934 = vmatpush1.msra.mxu0 0.0
        %1935 = vmatprep.subr.mxu0 0.0
        %1936 = vmatpush1.msra.mxu0 0.0
        %1937 = vmatprep.subr.mxu0 0.0
        %1938 = vmatpush1.msra.mxu0 0.0
        %1939 = vmatprep.subr.mxu0 0.0
        %1940 = vmatpush1.msra.mxu0 0.0
        %1941 = vmatprep.subr.mxu0 0.0
        %1942 = vmatpush1.msra.mxu0 0.0
        %1943 = vmatprep.subr.mxu0 0.0
        %1944 = vmatpush1.msra.mxu0 0.0
        %1945 = vmatprep.subr.mxu0 0.0
        %1946 = vmatpush1.msra.mxu0 0.0
        %1947 = vmatprep.subr.mxu0 0.0
        %1948 = vmatpush1.msra.mxu0 0.0
        %1949 = vmatprep.subr.mxu0 0.0
        %1950 = vmatpush1.msra.mxu0 0.0
        %1951 = vmatprep.subr.mxu0 0.0
        %1952 = vmatpush1.msra.mxu0 0.0
        %1953 = vmatprep.subr.mxu0 0.0
        %1954 = vmatpush1.msra.mxu0 0.0
        %1955 = vmatprep.subr.mxu0 0.0
        %1956 = vmatpush1.msra.mxu0 0.0
        %1957 = vmatprep.subr.mxu0 0.0
        %1958 = vmatpush1.msra.mxu0 0.0
        %1959 = vmatprep.mubr.f32.mxu0 0.0
        %1960 = vmatmul.mubr.f32.gmra.mrb[0].mxu0 %v1893
        %v1961 = vpop.f32.mrb[0].mxu0
        %v1962 = vadd.f32 0.0, %v1961
        %v1963 = vpop.f32.mrb[0].mxu0
        %1964 = vdwg.mxu0
        %v1965 = vcvt.s32.f32 %v846
        %v1966 = vlaneseq
        %v1967 = vshrl.u32 %v1966, 7
        %v1968 = vsub.s32 0, %v1967
        %v1969 = vrot.slane %v1888, %v1968
        %vm1971 = vcmp.gt.f32.partialorder %v1969, 0.5
        %v1972 = vlaneseq
        %v1973 = vshrl.u32 %v1972, 7
        %v1974 = vsub.s32 0, %v1973
        %v1975 = vrot.slane %v1962, %v1974
        %v1976 = vadd.f32 %v1965, 1.0
        %v1977 = vsub.f32 %v1975, %v1976
        %v1978 = vand.u32 2147483647, %v1977
        %vm1979 = vcmp.lt.f32.partialorder %v1978, 0.5
        %vm1980 = vmand %vm1971, %vm1979
        %v1981 = vsel %vm1980, 1, 0
        %v1982 = vcvt.s32.f32 %v1981
        %v1984 = vsel %vm853, %v1982, 0
        %1986 = vmatprep.subr.mxu0 0.0
        %1987 = vmatpush1.msra.mxu0 %v1887
        %1988 = vmatprep.subr.mxu0 0.0
        %1989 = vmatpush1.msra.mxu0 0.0
        %1990 = vmatprep.subr.mxu0 0.0
        %1991 = vmatpush1.msra.mxu0 0.0
        %1992 = vmatprep.subr.mxu0 0.0
        %1993 = vmatpush1.msra.mxu0 0.0
        %1994 = vmatprep.subr.mxu0 0.0
        %1995 = vmatpush1.msra.mxu0 0.0
        %1996 = vmatprep.subr.mxu0 0.0
        %1997 = vmatpush1.msra.mxu0 0.0
        %1998 = vmatprep.subr.mxu0 0.0
        %1999 = vmatpush1.msra.mxu0 0.0
        %2000 = vmatprep.subr.mxu0 0.0
        %2001 = vmatpush1.msra.mxu0 0.0
        %2002 = vmatprep.subr.mxu0 0.0
        %2003 = vmatpush1.msra.mxu0 0.0
        %2004 = vmatprep.subr.mxu0 0.0
        %2005 = vmatpush1.msra.mxu0 0.0
        %2006 = vmatprep.subr.mxu0 0.0
        %2007 = vmatpush1.msra.mxu0 0.0
        %2008 = vmatprep.subr.mxu0 0.0
        %2009 = vmatpush1.msra.mxu0 0.0
        %2010 = vmatprep.subr.mxu0 0.0
        %2011 = vmatpush1.msra.mxu0 0.0
        %2012 = vmatprep.subr.mxu0 0.0
        %2013 = vmatpush1.msra.mxu0 0.0
        %2014 = vmatprep.subr.mxu0 0.0
        %2015 = vmatpush1.msra.mxu0 0.0
        %2016 = vmatprep.subr.mxu0 0.0
        %2017 = vmatpush1.msra.mxu0 0.0
        %2018 = vmatprep.subr.mxu0 0.0
        %2019 = vmatpush1.msra.mxu0 0.0
        %2020 = vmatprep.subr.mxu0 0.0
        %2021 = vmatpush1.msra.mxu0 0.0
        %2022 = vmatprep.subr.mxu0 0.0
        %2023 = vmatpush1.msra.mxu0 0.0
        %2024 = vmatprep.subr.mxu0 0.0
        %2025 = vmatpush1.msra.mxu0 0.0
        %2026 = vmatprep.subr.mxu0 0.0
        %2027 = vmatpush1.msra.mxu0 0.0
        %2028 = vmatprep.subr.mxu0 0.0
        %2029 = vmatpush1.msra.mxu0 0.0
        %2030 = vmatprep.subr.mxu0 0.0
        %2031 = vmatpush1.msra.mxu0 0.0
        %2032 = vmatprep.subr.mxu0 0.0
        %2033 = vmatpush1.msra.mxu0 0.0
        %2034 = vmatprep.subr.mxu0 0.0
        %2035 = vmatpush1.msra.mxu0 0.0
        %2036 = vmatprep.subr.mxu0 0.0
        %2037 = vmatpush1.msra.mxu0 0.0
        %2038 = vmatprep.subr.mxu0 0.0
        %2039 = vmatpush1.msra.mxu0 0.0
        %2040 = vmatprep.subr.mxu0 0.0
        %2041 = vmatpush1.msra.mxu0 0.0
        %2042 = vmatprep.subr.mxu0 0.0
        %2043 = vmatpush1.msra.mxu0 0.0
        %2044 = vmatprep.subr.mxu0 0.0
        %2045 = vmatpush1.msra.mxu0 0.0
        %2046 = vmatprep.subr.mxu0 0.0
        %2047 = vmatpush1.msra.mxu0 0.0
        %2048 = vmatprep.subr.mxu0 0.0
        %2049 = vmatpush1.msra.mxu0 0.0
        %2050 = vmatprep.mubr.f32.mxu0 0.0
        %2051 = vmatmul.mubr.f32.gmra.mrb[0].mxu0 %v1984
        %v2052 = vpop.f32.mrb[0].mxu0
        %v2053 = vadd.f32 0.0, %v2052
        %v2054 = vpop.f32.mrb[0].mxu0
        %2055 = vdwg.mxu0
        %v2056 = vld [vmem:[%s10] sm:$0xff]
        %v2057 = vld [vmem:[%s10 + $0x8] sm:$0xff]
        %v2058 = vld [vmem:[%s10 + $0x10] sm:$0xff]
        %v2059 = vld [vmem:[%s10 + $0x18] sm:$0xff]
        %v2061 = vsel %vm694, %v2053, 0
        %2063 = vmatprep.subr.mxu0 0.0
        %2064 = vmatpush1.msra.mxu0 %v2056
        %2065 = vmatprep.subr.mxu0 0.0
        %2066 = vmatpush1.msra.mxu0 %v2057
        %2067 = vmatprep.subr.mxu0 0.0
        %2068 = vmatpush1.msra.mxu0 %v2058
        %2069 = vmatprep.subr.mxu0 0.0
        %2070 = vmatpush1.msra.mxu0 %v2059
        %2071 = vmatprep.subr.mxu0 0.0
        %2072 = vmatpush1.msra.mxu0 0.0
        %2073 = vmatprep.subr.mxu0 0.0
        %2074 = vmatpush1.msra.mxu0 0.0
        %2075 = vmatprep.subr.mxu0 0.0
        %2076 = vmatpush1.msra.mxu0 0.0
        %2077 = vmatprep.subr.mxu0 0.0
        %2078 = vmatpush1.msra.mxu0 0.0
        %2079 = vmatprep.subr.mxu0 0.0
        %2080 = vmatpush1.msra.mxu0 0.0
        %2081 = vmatprep.subr.mxu0 0.0
        %2082 = vmatpush1.msra.mxu0 0.0
        %2083 = vmatprep.subr.mxu0 0.0
        %2084 = vmatpush1.msra.mxu0 0.0
        %2085 = vmatprep.subr.mxu0 0.0
        %2086 = vmatpush1.msra.mxu0 0.0
        %2087 = vmatprep.subr.mxu0 0.0
        %2088 = vmatpush1.msra.mxu0 0.0
        %2089 = vmatprep.subr.mxu0 0.0
        %2090 = vmatpush1.msra.mxu0 0.0
        %2091 = vmatprep.subr.mxu0 0.0
        %2092 = vmatpush1.msra.mxu0 0.0
        %2093 = vmatprep.subr.mxu0 0.0
        %2094 = vmatpush1.msra.mxu0 0.0
        %2095 = vmatprep.subr.mxu0 0.0
        %2096 = vmatpush1.msra.mxu0 0.0
        %2097 = vmatprep.subr.mxu0 0.0
        %2098 = vmatpush1.msra.mxu0 0.0
        %2099 = vmatprep.subr.mxu0 0.0
        %2100 = vmatpush1.msra.mxu0 0.0
        %2101 = vmatprep.subr.mxu0 0.0
        %2102 = vmatpush1.msra.mxu0 0.0
        %2103 = vmatprep.subr.mxu0 0.0
        %2104 = vmatpush1.msra.mxu0 0.0
        %2105 = vmatprep.subr.mxu0 0.0
        %2106 = vmatpush1.msra.mxu0 0.0
        %2107 = vmatprep.subr.mxu0 0.0
        %2108 = vmatpush1.msra.mxu0 0.0
        %2109 = vmatprep.subr.mxu0 0.0
        %2110 = vmatpush1.msra.mxu0 0.0
        %2111 = vmatprep.subr.mxu0 0.0
        %2112 = vmatpush1.msra.mxu0 0.0
        %2113 = vmatprep.subr.mxu0 0.0
        %2114 = vmatpush1.msra.mxu0 0.0
        %2115 = vmatprep.subr.mxu0 0.0
        %2116 = vmatpush1.msra.mxu0 0.0
        %2117 = vmatprep.subr.mxu0 0.0
        %2118 = vmatpush1.msra.mxu0 0.0
        %2119 = vmatprep.subr.mxu0 0.0
        %2120 = vmatpush1.msra.mxu0 0.0
        %2121 = vmatprep.subr.mxu0 0.0
        %2122 = vmatpush1.msra.mxu0 0.0
        %2123 = vmatprep.subr.mxu0 0.0
        %2124 = vmatpush1.msra.mxu0 0.0
        %2125 = vmatprep.subr.mxu0 0.0
        %2126 = vmatpush1.msra.mxu0 0.0
        %2127 = vmatprep.mubr.f32.mxu0 0.0
        %2128 = vmatmul.mubr.f32.gmra.mrb[0].mxu0 %v2061
        %v2129 = vpop.f32.mrb[0].mxu0
        %v2130 = vadd.f32 0.0, %v2129
        %v2131 = vpop.f32.mrb[0].mxu0
        %2132 = vdwg.mxu0
        %v2134 = vsel %vm694, %v2130, 0
        %2136 = vmatprep.subr.mxu0 0.0
        %2137 = vmatpush1.xpose.msra.mxu0 %v2061
        %2138 = vmatprep.subr.mxu0 0.0
        %2139 = vmatpush1.xpose.msra.mxu0 0.0
        %2140 = vmatprep.subr.mxu0 0.0
        %2141 = vmatpush1.xpose.msra.mxu0 0.0
        %2142 = vmatprep.subr.mxu0 0.0
        %2143 = vmatpush1.xpose.msra.mxu0 0.0
        %2144 = vmatprep.subr.mxu0 0.0
        %2145 = vmatpush1.xpose.msra.mxu0 0.0
        %2146 = vmatprep.subr.mxu0 0.0
        %2147 = vmatpush1.xpose.msra.mxu0 0.0
        %2148 = vmatprep.subr.mxu0 0.0
        %2149 = vmatpush1.xpose.msra.mxu0 0.0
        %2150 = vmatprep.subr.mxu0 0.0
        %2151 = vmatpush1.xpose.msra.mxu0 0.0
        %2152 = vmatprep.subr.mxu0 0.0
        %2153 = vmatpush1.xpose.msra.mxu0 0.0
        %2154 = vmatprep.subr.mxu0 0.0
        %2155 = vmatpush1.xpose.msra.mxu0 0.0
        %2156 = vmatprep.subr.mxu0 0.0
        %2157 = vmatpush1.xpose.msra.mxu0 0.0
        %2158 = vmatprep.subr.mxu0 0.0
        %2159 = vmatpush1.xpose.msra.mxu0 0.0
        %2160 = vmatprep.subr.mxu0 0.0
        %2161 = vmatpush1.xpose.msra.mxu0 0.0
        %2162 = vmatprep.subr.mxu0 0.0
        %2163 = vmatpush1.xpose.msra.mxu0 0.0
        %2164 = vmatprep.subr.mxu0 0.0
        %2165 = vmatpush1.xpose.msra.mxu0 0.0
        %2166 = vmatprep.subr.mxu0 0.0
        %2167 = vmatpush1.xpose.msra.mxu0 0.0
        %2168 = vmatprep.subr.mxu0 0.0
        %2169 = vmatpush1.xpose.msra.mxu0 0.0
        %2170 = vmatprep.subr.mxu0 0.0
        %2171 = vmatpush1.xpose.msra.mxu0 0.0
        %2172 = vmatprep.subr.mxu0 0.0
        %2173 = vmatpush1.xpose.msra.mxu0 0.0
        %2174 = vmatprep.subr.mxu0 0.0
        %2175 = vmatpush1.xpose.msra.mxu0 0.0
        %2176 = vmatprep.subr.mxu0 0.0
        %2177 = vmatpush1.xpose.msra.mxu0 0.0
        %2178 = vmatprep.subr.mxu0 0.0
        %2179 = vmatpush1.xpose.msra.mxu0 0.0
        %2180 = vmatprep.subr.mxu0 0.0
        %2181 = vmatpush1.xpose.msra.mxu0 0.0
        %2182 = vmatprep.subr.mxu0 0.0
        %2183 = vmatpush1.xpose.msra.mxu0 0.0
        %2184 = vmatprep.subr.mxu0 0.0
        %2185 = vmatpush1.xpose.msra.mxu0 0.0
        %2186 = vmatprep.subr.mxu0 0.0
        %2187 = vmatpush1.xpose.msra.mxu0 0.0
        %2188 = vmatprep.subr.mxu0 0.0
        %2189 = vmatpush1.xpose.msra.mxu0 0.0
        %2190 = vmatprep.subr.mxu0 0.0
        %2191 = vmatpush1.xpose.msra.mxu0 0.0
        %2192 = vmatprep.subr.mxu0 0.0
        %2193 = vmatpush1.xpose.msra.mxu0 0.0
        %2194 = vmatprep.subr.mxu0 0.0
        %2195 = vmatpush1.xpose.msra.mxu0 0.0
        %2196 = vmatprep.subr.mxu0 0.0
        %2197 = vmatpush1.xpose.msra.mxu0 0.0
        %2198 = vmatprep.subr.mxu0 0.0
        %2199 = vmatpush1.xpose.msra.mxu0 0.0
        %2200 = vmatprep.mubr.f32.mxu0 0.0
        %2201 = vmatmul.mubr.f32.gmra.mrb[0].mxu0 %v2134
        %v2202 = vpop.f32.mrb[0].mxu0
        %v2203 = vadd.f32 0.0, %v2202
        %v2204 = vpop.f32.mrb[0].mxu0
        %2205 = vdwg.mxu0
        %2206 = vrot.lane.b32.xlu0 %v2130, 96
        %v2207 = vpop.permute.xlu0 %2206
        %v2208 = vsel %vm694, %v2207, 0
        %2210 = vmatprep.subr.mxu0 0.0
        %2211 = vmatpush1.xpose.msra.mxu0 %v2061
        %2212 = vmatprep.subr.mxu0 0.0
        %2213 = vmatpush1.xpose.msra.mxu0 0.0
        %2214 = vmatprep.subr.mxu0 0.0
        %2215 = vmatpush1.xpose.msra.mxu0 0.0
        %2216 = vmatprep.subr.mxu0 0.0
        %2217 = vmatpush1.xpose.msra.mxu0 0.0
        %2218 = vmatprep.subr.mxu0 0.0
        %2219 = vmatpush1.xpose.msra.mxu0 0.0
        %2220 = vmatprep.subr.mxu0 0.0
        %2221 = vmatpush1.xpose.msra.mxu0 0.0
        %2222 = vmatprep.subr.mxu0 0.0
        %2223 = vmatpush1.xpose.msra.mxu0 0.0
        %2224 = vmatprep.subr.mxu0 0.0
        %2225 = vmatpush1.xpose.msra.mxu0 0.0
        %2226 = vmatprep.subr.mxu0 0.0
        %2227 = vmatpush1.xpose.msra.mxu0 0.0
        %2228 = vmatprep.subr.mxu0 0.0
        %2229 = vmatpush1.xpose.msra.mxu0 0.0
        %2230 = vmatprep.subr.mxu0 0.0
        %2231 = vmatpush1.xpose.msra.mxu0 0.0
        %2232 = vmatprep.subr.mxu0 0.0
        %2233 = vmatpush1.xpose.msra.mxu0 0.0
        %2234 = vmatprep.subr.mxu0 0.0
        %2235 = vmatpush1.xpose.msra.mxu0 0.0
        %2236 = vmatprep.subr.mxu0 0.0
        %2237 = vmatpush1.xpose.msra.mxu0 0.0
        %2238 = vmatprep.subr.mxu0 0.0
        %2239 = vmatpush1.xpose.msra.mxu0 0.0
        %2240 = vmatprep.subr.mxu0 0.0
        %2241 = vmatpush1.xpose.msra.mxu0 0.0
        %2242 = vmatprep.subr.mxu0 0.0
        %2243 = vmatpush1.xpose.msra.mxu0 0.0
        %2244 = vmatprep.subr.mxu0 0.0
        %2245 = vmatpush1.xpose.msra.mxu0 0.0
        %2246 = vmatprep.subr.mxu0 0.0
        %2247 = vmatpush1.xpose.msra.mxu0 0.0
        %2248 = vmatprep.subr.mxu0 0.0
        %2249 = vmatpush1.xpose.msra.mxu0 0.0
        %2250 = vmatprep.subr.mxu0 0.0
        %2251 = vmatpush1.xpose.msra.mxu0 0.0
        %2252 = vmatprep.subr.mxu0 0.0
        %2253 = vmatpush1.xpose.msra.mxu0 0.0
        %2254 = vmatprep.subr.mxu0 0.0
        %2255 = vmatpush1.xpose.msra.mxu0 0.0
        %2256 = vmatprep.subr.mxu0 0.0
        %2257 = vmatpush1.xpose.msra.mxu0 0.0
        %2258 = vmatprep.subr.mxu0 0.0
        %2259 = vmatpush1.xpose.msra.mxu0 0.0
        %2260 = vmatprep.subr.mxu0 0.0
        %2261 = vmatpush1.xpose.msra.mxu0 0.0
        %2262 = vmatprep.subr.mxu0 0.0
        %2263 = vmatpush1.xpose.msra.mxu0 0.0
        %2264 = vmatprep.subr.mxu0 0.0
        %2265 = vmatpush1.xpose.msra.mxu0 0.0
        %2266 = vmatprep.subr.mxu0 0.0
        %2267 = vmatpush1.xpose.msra.mxu0 0.0
        %2268 = vmatprep.subr.mxu0 0.0
        %2269 = vmatpush1.xpose.msra.mxu0 0.0
        %2270 = vmatprep.subr.mxu0 0.0
        %2271 = vmatpush1.xpose.msra.mxu0 0.0
        %2272 = vmatprep.subr.mxu0 0.0
        %2273 = vmatpush1.xpose.msra.mxu0 0.0
        %2274 = vmatprep.mubr.f32.mxu0 0.0
        %2275 = vmatmul.mubr.f32.gmra.mrb[0].mxu0 %v2208
        %v2276 = vpop.f32.mrb[0].mxu0
        %v2277 = vadd.f32 0.0, %v2276
        %v2278 = vpop.f32.mrb[0].mxu0
        %2279 = vdwg.mxu0
        %2280 = vrot.lane.b32.xlu0 %v2130, 64
        %v2281 = vpop.permute.xlu0 %2280
        %v2282 = vsel %vm694, %v2281, 0
        %2284 = vmatprep.subr.mxu0 0.0
        %2285 = vmatpush1.xpose.msra.mxu0 %v2061
        %2286 = vmatprep.subr.mxu0 0.0
        %2287 = vmatpush1.xpose.msra.mxu0 0.0
        %2288 = vmatprep.subr.mxu0 0.0
        %2289 = vmatpush1.xpose.msra.mxu0 0.0
        %2290 = vmatprep.subr.mxu0 0.0
        %2291 = vmatpush1.xpose.msra.mxu0 0.0
        %2292 = vmatprep.subr.mxu0 0.0
        %2293 = vmatpush1.xpose.msra.mxu0 0.0
        %2294 = vmatprep.subr.mxu0 0.0
        %2295 = vmatpush1.xpose.msra.mxu0 0.0
        %2296 = vmatprep.subr.mxu0 0.0
        %2297 = vmatpush1.xpose.msra.mxu0 0.0
        %2298 = vmatprep.subr.mxu0 0.0
        %2299 = vmatpush1.xpose.msra.mxu0 0.0
        %2300 = vmatprep.subr.mxu0 0.0
        %2301 = vmatpush1.xpose.msra.mxu0 0.0
        %2302 = vmatprep.subr.mxu0 0.0
        %2303 = vmatpush1.xpose.msra.mxu0 0.0
        %2304 = vmatprep.subr.mxu0 0.0
        %2305 = vmatpush1.xpose.msra.mxu0 0.0
        %2306 = vmatprep.subr.mxu0 0.0
        %2307 = vmatpush1.xpose.msra.mxu0 0.0
        %2308 = vmatprep.subr.mxu0 0.0
        %2309 = vmatpush1.xpose.msra.mxu0 0.0
        %2310 = vmatprep.subr.mxu0 0.0
        %2311 = vmatpush1.xpose.msra.mxu0 0.0
        %2312 = vmatprep.subr.mxu0 0.0
        %2313 = vmatpush1.xpose.msra.mxu0 0.0
        %2314 = vmatprep.subr.mxu0 0.0
        %2315 = vmatpush1.xpose.msra.mxu0 0.0
        %2316 = vmatprep.subr.mxu0 0.0
        %2317 = vmatpush1.xpose.msra.mxu0 0.0
        %2318 = vmatprep.subr.mxu0 0.0
        %2319 = vmatpush1.xpose.msra.mxu0 0.0
        %2320 = vmatprep.subr.mxu0 0.0
        %2321 = vmatpush1.xpose.msra.mxu0 0.0
        %2322 = vmatprep.subr.mxu0 0.0
        %2323 = vmatpush1.xpose.msra.mxu0 0.0
        %2324 = vmatprep.subr.mxu0 0.0
        %2325 = vmatpush1.xpose.msra.mxu0 0.0
        %2326 = vmatprep.subr.mxu0 0.0
        %2327 = vmatpush1.xpose.msra.mxu0 0.0
        %2328 = vmatprep.subr.mxu0 0.0
        %2329 = vmatpush1.xpose.msra.mxu0 0.0
        %2330 = vmatprep.subr.mxu0 0.0
        %2331 = vmatpush1.xpose.msra.mxu0 0.0
        %2332 = vmatprep.subr.mxu0 0.0
        %2333 = vmatpush1.xpose.msra.mxu0 0.0
        %2334 = vmatprep.subr.mxu0 0.0
        %2335 = vmatpush1.xpose.msra.mxu0 0.0
        %2336 = vmatprep.subr.mxu0 0.0
        %2337 = vmatpush1.xpose.msra.mxu0 0.0
        %2338 = vmatprep.subr.mxu0 0.0
        %2339 = vmatpush1.xpose.msra.mxu0 0.0
        %2340 = vmatprep.subr.mxu0 0.0
        %2341 = vmatpush1.xpose.msra.mxu0 0.0
        %2342 = vmatprep.subr.mxu0 0.0
        %2343 = vmatpush1.xpose.msra.mxu0 0.0
        %2344 = vmatprep.subr.mxu0 0.0
        %2345 = vmatpush1.xpose.msra.mxu0 0.0
        %2346 = vmatprep.subr.mxu0 0.0
        %2347 = vmatpush1.xpose.msra.mxu0 0.0
        %2348 = vmatprep.mubr.f32.mxu0 0.0
        %2349 = vmatmul.mubr.f32.gmra.mrb[0].mxu0 %v2282
        %v2350 = vpop.f32.mrb[0].mxu0
        %v2351 = vadd.f32 0.0, %v2350
        %v2352 = vpop.f32.mrb[0].mxu0
        %2353 = vdwg.mxu0
        %2354 = vrot.lane.b32.xlu0 %v2130, 32
        %v2355 = vpop.permute.xlu0 %2354
        %v2356 = vsel %vm694, %v2355, 0
        %2358 = vmatprep.subr.mxu0 0.0
        %2359 = vmatpush1.xpose.msra.mxu0 %v2061
        %2360 = vmatprep.subr.mxu0 0.0
        %2361 = vmatpush1.xpose.msra.mxu0 0.0
        %2362 = vmatprep.subr.mxu0 0.0
        %2363 = vmatpush1.xpose.msra.mxu0 0.0
        %2364 = vmatprep.subr.mxu0 0.0
        %2365 = vmatpush1.xpose.msra.mxu0 0.0
        %2366 = vmatprep.subr.mxu0 0.0
        %2367 = vmatpush1.xpose.msra.mxu0 0.0
        %2368 = vmatprep.subr.mxu0 0.0
        %2369 = vmatpush1.xpose.msra.mxu0 0.0
        %2370 = vmatprep.subr.mxu0 0.0
        %2371 = vmatpush1.xpose.msra.mxu0 0.0
        %2372 = vmatprep.subr.mxu0 0.0
        %2373 = vmatpush1.xpose.msra.mxu0 0.0
        %2374 = vmatprep.subr.mxu0 0.0
        %2375 = vmatpush1.xpose.msra.mxu0 0.0
        %2376 = vmatprep.subr.mxu0 0.0
        %2377 = vmatpush1.xpose.msra.mxu0 0.0
        %2378 = vmatprep.subr.mxu0 0.0
        %2379 = vmatpush1.xpose.msra.mxu0 0.0
        %2380 = vmatprep.subr.mxu0 0.0
        %2381 = vmatpush1.xpose.msra.mxu0 0.0
        %2382 = vmatprep.subr.mxu0 0.0
        %2383 = vmatpush1.xpose.msra.mxu0 0.0
        %2384 = vmatprep.subr.mxu0 0.0
        %2385 = vmatpush1.xpose.msra.mxu0 0.0
        %2386 = vmatprep.subr.mxu0 0.0
        %2387 = vmatpush1.xpose.msra.mxu0 0.0
        %2388 = vmatprep.subr.mxu0 0.0
        %2389 = vmatpush1.xpose.msra.mxu0 0.0
        %2390 = vmatprep.subr.mxu0 0.0
        %2391 = vmatpush1.xpose.msra.mxu0 0.0
        %2392 = vmatprep.subr.mxu0 0.0
        %2393 = vmatpush1.xpose.msra.mxu0 0.0
        %2394 = vmatprep.subr.mxu0 0.0
        %2395 = vmatpush1.xpose.msra.mxu0 0.0
        %2396 = vmatprep.subr.mxu0 0.0
        %2397 = vmatpush1.xpose.msra.mxu0 0.0
        %2398 = vmatprep.subr.mxu0 0.0
        %2399 = vmatpush1.xpose.msra.mxu0 0.0
        %2400 = vmatprep.subr.mxu0 0.0
        %2401 = vmatpush1.xpose.msra.mxu0 0.0
        %2402 = vmatprep.subr.mxu0 0.0
        %2403 = vmatpush1.xpose.msra.mxu0 0.0
        %2404 = vmatprep.subr.mxu0 0.0
        %2405 = vmatpush1.xpose.msra.mxu0 0.0
        %2406 = vmatprep.subr.mxu0 0.0
        %2407 = vmatpush1.xpose.msra.mxu0 0.0
        %2408 = vmatprep.subr.mxu0 0.0
        %2409 = vmatpush1.xpose.msra.mxu0 0.0
        %2410 = vmatprep.subr.mxu0 0.0
        %2411 = vmatpush1.xpose.msra.mxu0 0.0
        %2412 = vmatprep.subr.mxu0 0.0
        %2413 = vmatpush1.xpose.msra.mxu0 0.0
        %2414 = vmatprep.subr.mxu0 0.0
        %2415 = vmatpush1.xpose.msra.mxu0 0.0
        %2416 = vmatprep.subr.mxu0 0.0
        %2417 = vmatpush1.xpose.msra.mxu0 0.0
        %2418 = vmatprep.subr.mxu0 0.0
        %2419 = vmatpush1.xpose.msra.mxu0 0.0
        %2420 = vmatprep.subr.mxu0 0.0
        %2421 = vmatpush1.xpose.msra.mxu0 0.0
        %2422 = vmatprep.mubr.f32.mxu0 0.0
        %2423 = vmatmul.mubr.f32.gmra.mrb[0].mxu0 %v2356
        %v2424 = vpop.f32.mrb[0].mxu0
        %v2425 = vadd.f32 0.0, %v2424
        %v2426 = vpop.f32.mrb[0].mxu0
        %2427 = vdwg.mxu0
        %2429 = vrot.lane.b32.xlu0 %v2277, 8
        %v2430 = vpop.permute.xlu0 %2429
        %2433 = vrot.lane.b32.xlu0 %v2351, 16
        %v2434 = vpop.permute.xlu0 %2433
        %2437 = vrot.lane.b32.xlu0 %v2425, 24
        %v2438 = vpop.permute.xlu0 %2437
        %v2440 = vsel %vm853, %v2203, %v2430
        %v2441 = vsel %vm533, %v2440, %v2434
        %vm2442 = vcmask 195584
        %v2443 = vsel %vm2442, %v2441, %v2438
        %v2444 = vld [vmem:[%s11] sm:$0x1]
        %v2446 = vlaneseq
        %v2447 = vshrl.u32 %v2446, 7
        %v2448 = vsub.s32 0, %v2447
        %v2449 = vrot.slane %v2444, %v2448
        %v2451 = vadd.f32 %v2443, %v2449
        %2452 = vst.msk [vmem:[%s521] sm:$0xff] %vm694, %v2451
        %s2453 = sand.u32 %s307, 1
        %s2454 = scalar_lea.sflag [#allocation4], %s2453
        %s2455 = sand.u32 %s307, 1
        %s2456 = smul.addr %s2455, 8
        %s2457 = scalar_lea.vmem [#allocation13], %s2456
        // Predicated region
        $region93: #{tpu_custom_call.1} parent=67 // pred_check
          %p2458 = pneg %p317
        $region94: #{tpu_custom_call.1} parent=67 // pred_check_branch
          %2460 = sbr.rel (%p2458) target = $region96
        $region95: #{tpu_custom_call.1} parent=67 // pred_region
          %s2462 = ssub.s32 128, 128
          %2463 = vsyncadd %s2454, %s2462
          %s2464 = smul.addr %s32, 128
          %s2465 = scalar_lea.hbm %s12, %s2464
          %s2467 = sshll.u32 %s2457, 4
          %s2468 = int_to_ptr.vmem [resolvable:$true] %s2467
          %2470 = dma.vmem_to_hbm [thread:$0]  %s2468, 128, %s2465, %s2454
        $region96: #{tpu_custom_call.1} parent=67 // pred_fallthru
          _
      $region68: #{tpu_custom_call.1} parent=5 // pred_fallthru
        _
      %p2471 = scmp.le.s32.totalorder 2, %s27
      // Predicated region
      $region97: #{tpu_custom_call.1} parent=5 // pred_check
        %p2472 = pneg %p2471
      $region98: #{tpu_custom_call.1} parent=5 // pred_check_branch
        %2474 = sbr.rel (%p2472) target = $region100
      $region99: #{tpu_custom_call.1} parent=5 // pred_region
        %s2475 = ssub.s32 %s27, 2
        // Predicated region
        $region101: #{tpu_custom_call.1} parent=99 // pred_check
          %p2476 = pneg %p323
        $region102: #{tpu_custom_call.1} parent=99 // pred_check_branch
          %2478 = sbr.rel (%p2476) target = $region104
        $region103: #{tpu_custom_call.1} parent=99 // pred_region
          %s2479 = sand.u32 %s308, 1
          %s2480 = scalar_lea.sflag [#allocation4], %s2479
          %s2481 = sand.u32 %s308, 1
          %s2482 = smul.addr %s2481, 8
          %s2483 = scalar_lea.vmem [#allocation13], %s2482
          %2484 = dma.done %s2480, 128
        $region104: #{tpu_custom_call.1} parent=99 // pred_fallthru
          _
      $region100: #{tpu_custom_call.1} parent=5 // pred_fallthru
        _
    $region6: #{tpu_custom_call.1} parent=1 // loop_footer
      %s31 = sadd.s32 1, %s27
    $region7: #{tpu_custom_call.1} parent=1 // loop_footer_branch
      %26 = sbr.rel target = $region3
    $region8: #{tpu_custom_call.1} parent=1 // loop_exit
      _
    %2485 = vsyncpa [#allocation3], 1
    %s2486 = scalar_lea.sflag [#allocation3], 1
    %2487 = vsyncpa %s2486, 1
    %2488 = vsyncpa [#allocation6], 1
    %2489 = vsyncpa [#allocation9], 1
    %2490 = vsyncpa [#allocation12], 1
    %2491 = vsyncpa [#allocation4], 1
    %s2492 = scalar_lea.sflag [#allocation4], 1
    %2493 = vsyncpa %s2492, 1

</llo_original>
